<compile_context>
chip_gen: v7x
topology: tpu7x:2x2x1
jax: 0.10.0
libtpu: 0.0.40
codegen_flags: <defaults>
</compile_context>

<pallas_src>
import functools
import math

import numpy as np
import jax
import jax.numpy as jnp
from jax.experimental import pallas as pl
from jax.experimental.pallas import tpu as pltpu


def _pos_embed_sine_kernel(nm_ref, sel_ref, inv_ref, ph_ref, out_ref, *,
                           num_pos_feats, normalize, scale, eps):
    # nm_ref  : [1, HWp]       bf16  not_mask, flattened f = h*W + w, zero padded
    # sel_ref : [HWp, K*HWp]   bf16  [cumsum_y | cumsum_x (| tot_y | tot_x)]
    # inv_ref : [P, 1]         f32   1 / dim_t per output channel (within a half)
    # ph_ref  : [P, 1]         f32   0 (sin channel) or pi/2 (cos channel)
    # out_ref : [2P, HWp]      f32
    P = num_pos_feats
    HWp = nm_ref.shape[-1]

    # One wide MXU pass computes every cumulative sum (and totals) at once.
    sums = jnp.dot(nm_ref[...], sel_ref[...],
                   preferred_element_type=jnp.float32)        # [1, K*HWp] f32

    y_embed = sums[:, 0:HWp]                                  # [1, HWp]
    x_embed = sums[:, HWp:2 * HWp]                            # [1, HWp]
    if normalize:
        y_tot = sums[:, 2 * HWp:3 * HWp]
        x_tot = sums[:, 3 * HWp:4 * HWp]
        y_embed = y_embed / (y_tot + eps) * scale             # exact f32 divide
        x_embed = x_embed / (x_tot + eps) * scale

    inv_dim_t = inv_ref[...]                                  # [P, 1]
    phase_off = ph_ref[...]                                   # [P, 1]

    # cos(x) = sin(x + pi/2): one transcendental per output element.
    out_ref[0:P, :] = jnp.sin(y_embed * inv_dim_t + phase_off).astype(out_ref.dtype)
    out_ref[P:2 * P, :] = jnp.sin(x_embed * inv_dim_t + phase_off).astype(out_ref.dtype)


def position_embedding_sine(x, mask, num_pos_feats=64, temperature=10000,
                            normalize=False, scale=None):
    """Pallas implementation of PositionEmbeddingSine.forward.

    x    : [B, C, H, W] (only its spatial shape is used, as in PyTorch)
    mask : [B, H, W] bool, True = padded
    returns [B, 2*num_pos_feats, H, W] float32
    """
    if scale is not None and normalize is False:
        raise ValueError("normalize should be True if scale is passed")
    if scale is None:
        scale = 2 * math.pi
    assert num_pos_feats % 2 == 0
    B, H, W = mask.shape
    assert x.shape[0] == B and x.shape[2:] == (H, W)
    P = num_pos_feats
    HW = H * W
    HWp = ((HW + 127) // 128) * 128          # lane-dense (unmasked stores)

    # ---- trace-time constants, hoisted out of the kernel (numpy) -----------
    fi = np.arange(HW)[:, None]              # source flat index f' = h'*W + w'
    fj = np.arange(HW)[None, :]              # dest   flat index f  = h *W + w
    same_col = (fi % W) == (fj % W)          # same w
    same_row = (fi // W) == (fj // W)        # same h
    m_y = (same_col & ((fi // W) <= (fj // W))).astype(np.float32)  # cumsum over h
    m_x = (same_row & ((fi % W) <= (fj % W))).astype(np.float32)    # cumsum over w
    blocks = [m_y, m_x]
    if normalize:
        blocks += [same_col.astype(np.float32), same_row.astype(np.float32)]
    pad2 = ((0, HWp - HW), (0, HWp - HW))
    sel = np.concatenate([np.pad(b, pad2) for b in blocks], axis=1)  # [HWp, K*HWp]
    sel = jnp.asarray(sel, dtype=jnp.bfloat16)   # 0/1 entries: exact in bf16
    K = 4 if normalize else 2

    idx = np.arange(P)
    inv_dim_t = np.exp(-(2.0 * (idx // 2) / float(P)) * math.log(float(temperature)))
    phase_off = np.where(idx % 2 == 0, 0.0, 0.5 * math.pi)
    inv_dim_t = jnp.asarray(inv_dim_t.reshape(P, 1), dtype=jnp.float32)
    phase_off = jnp.asarray(phase_off.reshape(P, 1), dtype=jnp.float32)

    # ---- cheap layout glue only: bool -> bf16, contiguous flatten, zero pad -
    nm = jnp.logical_not(mask).astype(jnp.bfloat16).reshape(B, 1, HW)
    if HWp != HW:
        nm = jnp.pad(nm, ((0, 0), (0, 0), (0, HWp - HW)))

    kernel = functools.partial(
        _pos_embed_sine_kernel, num_pos_feats=P, normalize=bool(normalize),
        scale=float(scale), eps=1e-6)

    cost = pl.CostEstimate(
        flops=int(B * (2 * HWp * K * HWp + 8 * P * HWp)),
        transcendentals=int(B * 2 * P * HWp),
        bytes_accessed=int(B * HWp * 2 + HWp * K * HWp * 2 + 2 * P * 4
                           + B * 2 * P * HWp * 4))

    out = pl.pallas_call(
        kernel,
        out_shape=jax.ShapeDtypeStruct((B, 2 * P, HWp), jnp.float32),
        grid=(B,),
        in_specs=[
            pl.BlockSpec((None, 1, HWp), lambda b: (b, 0, 0)),   # per-batch mask
            pl.BlockSpec((HWp, K * HWp), lambda b: (0, 0)),      # constant block
            pl.BlockSpec((P, 1), lambda b: (0, 0)),              # constant block
            pl.BlockSpec((P, 1), lambda b: (0, 0)),              # constant block
        ],
        out_specs=pl.BlockSpec((None, 2 * P, HWp), lambda b: (b, 0, 0)),
        compiler_params=pltpu.CompilerParams(
            dimension_semantics=("parallel",)),
        cost_estimate=cost,
    )(nm, sel, inv_dim_t, phase_off)

    if HWp != HW:
        out = out[:, :, :HW]
    return out.reshape(B, 2 * P, H, W)       # free reshape, no transpose


def reference(mask, num_pos_feats=64, temperature=10000, normalize=False,
              scale=None):
    """Pure-JAX reference mirroring the PyTorch module line by line."""
    if scale is None:
        scale = 2 * math.pi
    B, H, W = mask.shape
    not_mask = jnp.logical_not(mask).astype(jnp.float32)
    y_embed = jnp.cumsum(not_mask, axis=1)
    x_embed = jnp.cumsum(not_mask, axis=2)
    if normalize:
        eps = 1e-6
        y_embed = y_embed / (y_embed[:, -1:, :] + eps) * scale
        x_embed = x_embed / (x_embed[:, :, -1:] + eps) * scale
    dim_t = jnp.arange(num_pos_feats, dtype=jnp.float32)
    dim_t = jnp.power(jnp.float32(temperature),
                      2.0 * jnp.floor(dim_t / 2.0) / num_pos_feats)
    pos_x = x_embed[:, :, :, None] / dim_t
    pos_y = y_embed[:, :, :, None] / dim_t
    pos_x = jnp.stack([jnp.sin(pos_x[..., 0::2]), jnp.cos(pos_x[..., 1::2])],
                      axis=4).reshape(B, H, W, -1)
    pos_y = jnp.stack([jnp.sin(pos_y[..., 0::2]), jnp.cos(pos_y[..., 1::2])],
                      axis=4).reshape(B, H, W, -1)
    pos = jnp.concatenate([pos_y, pos_x], axis=3).transpose(0, 3, 1, 2)
    return pos


if __name__ == "__main__":
    B, C, H, W = 2, 4, 16, 16
    P = 64                       # num_pos_feats -> 2*P = 128 output channels

    key = jax.random.PRNGKey(0)
    x = jax.random.normal(key, (B, C, H, W), dtype=jnp.float32)

    # Ragged padding masks (True = padded), as produced by NestedTensor batching.
    valid_h = jnp.array([16, 12])
    valid_w = jnp.array([16, 10])
    hh = jnp.arange(H)[None, :, None]
    ww = jnp.arange(W)[None, None, :]
    mask = ~((hh < valid_h[:, None, None]) & (ww < valid_w[:, None, None]))

    for normalize in (True, False):   # DETR uses normalize=True; module default False
        out = position_embedding_sine(x, mask, num_pos_feats=P,
                                      temperature=10000, normalize=normalize)
        out = jax.block_until_ready(out)
        ref = reference(mask, P, 10000, normalize)
        assert out.shape == (B, 2 * P, H, W)
        assert jnp.allclose(out, ref, atol=5e-5, rtol=5e-5), \
            f"mismatch vs reference (normalize={normalize})"

    print("KERNEL_OK")
</pallas_src>

<mosaic_0001>
module attributes {stable_mosaic.version = 11 : i64} {
  func.func @_pos_embed_sine_kernel(%arg0: i32, %arg1: memref<1x1x256xbf16, #tpu.memory_space<vmem>>, %arg2: memref<256x1024xbf16, #tpu.memory_space<vmem>>, %arg3: memref<64x1xf32, #tpu.memory_space<vmem>>, %arg4: memref<64x1xf32, #tpu.memory_space<vmem>>, %arg5: memref<1x128x256xf32, #tpu.memory_space<vmem>>) attributes {dimension_semantics = [#tpu.dimension_semantics<parallel>], iteration_bounds = array<i64: 2>, scalar_prefetch = 0 : i64, scratch_operands = 0 : i64, tpu.core_type = #tpu.core_type<tc>, window_params = [{transform_indices = @transform_0, window_bounds = array<i64: 1, 1, 256>}, {pipeline_mode = #tpu.pipeline_mode<synchronous>, transform_indices = @transform_1, window_bounds = array<i64: 256, 1024>}, {pipeline_mode = #tpu.pipeline_mode<synchronous>, transform_indices = @transform_2, window_bounds = array<i64: 64, 1>}, {pipeline_mode = #tpu.pipeline_mode<synchronous>, transform_indices = @transform_3, window_bounds = array<i64: 64, 1>}, {transform_indices = @transform_4, window_bounds = array<i64: 1, 128, 256>}]} {
    %c0 = arith.constant 0 : index
    %c0_0 = arith.constant 0 : index
    %c0_1 = arith.constant 0 : index
    %0 = vector.load %arg1[%c0, %c0_0, %c0_1] : memref<1x1x256xbf16, #tpu.memory_space<vmem>>, vector<1x1x256xbf16>
    %1 = vector.shape_cast %0 : vector<1x1x256xbf16> to vector<1x256xbf16>
    %c0_2 = arith.constant 0 : index
    %c0_3 = arith.constant 0 : index
    %2 = vector.load %arg2[%c0_2, %c0_3] : memref<256x1024xbf16, #tpu.memory_space<vmem>>, vector<256x1024xbf16>
    %cst = arith.constant dense<0.000000e+00> : vector<1x1024xf32>
    %3 = tpu.matmul %1, %2, %cst {dimension_numbers = #tpu.dot_dimension_numbers<[1], [0], [0], [1], [0, 0, 1, 1], [], []>} : vector<1x256xbf16>, vector<256x1024xbf16>, vector<1x1024xf32> -> vector<1x1024xf32>
    %4 = vector.extract_strided_slice %3 {offsets = [0, 0], sizes = [1, 256], strides = [1, 1]} : vector<1x1024xf32> to vector<1x256xf32>
    %5 = vector.extract_strided_slice %3 {offsets = [0, 256], sizes = [1, 256], strides = [1, 1]} : vector<1x1024xf32> to vector<1x256xf32>
    %6 = vector.extract_strided_slice %3 {offsets = [0, 512], sizes = [1, 256], strides = [1, 1]} : vector<1x1024xf32> to vector<1x256xf32>
    %7 = vector.extract_strided_slice %3 {offsets = [0, 768], sizes = [1, 256], strides = [1, 1]} : vector<1x1024xf32> to vector<1x256xf32>
    %cst_4 = arith.constant 9.99999997E-7 : f32
    %8 = vector.broadcast %cst_4 : f32 to vector<1x256xf32>
    %9 = arith.addf %6, %8 : vector<1x256xf32>
    %10 = arith.divf %4, %9 : vector<1x256xf32>
    %cst_5 = arith.constant 6.28318548 : f32
    %11 = vector.broadcast %cst_5 : f32 to vector<1x256xf32>
    %12 = arith.mulf %10, %11 : vector<1x256xf32>
    %cst_6 = arith.constant 9.99999997E-7 : f32
    %13 = vector.broadcast %cst_6 : f32 to vector<1x256xf32>
    %14 = arith.addf %7, %13 : vector<1x256xf32>
    %15 = arith.divf %5, %14 : vector<1x256xf32>
    %cst_7 = arith.constant 6.28318548 : f32
    %16 = vector.broadcast %cst_7 : f32 to vector<1x256xf32>
    %17 = arith.mulf %15, %16 : vector<1x256xf32>
    %c0_8 = arith.constant 0 : index
    %c0_9 = arith.constant 0 : index
    %18 = vector.load %arg3[%c0_8, %c0_9] : memref<64x1xf32, #tpu.memory_space<vmem>>, vector<64x1xf32>
    %c0_10 = arith.constant 0 : index
    %c0_11 = arith.constant 0 : index
    %19 = vector.load %arg4[%c0_10, %c0_11] : memref<64x1xf32, #tpu.memory_space<vmem>>, vector<64x1xf32>
    %20 = vector.broadcast %12 : vector<1x256xf32> to vector<64x256xf32>
    %21 = vector.broadcast %18 : vector<64x1xf32> to vector<64x256xf32>
    %22 = arith.mulf %20, %21 : vector<64x256xf32>
    %23 = vector.broadcast %19 : vector<64x1xf32> to vector<64x256xf32>
    %24 = arith.addf %22, %23 : vector<64x256xf32>
    %25 = math.sin %24 : vector<64x256xf32>
    %c0_12 = arith.constant 0 : index
    %c0_13 = arith.constant 0 : index
    %c0_14 = arith.constant 0 : index
    %26 = vector.load %arg5[%c0_12, %c0_13, %c0_14] : memref<1x128x256xf32, #tpu.memory_space<vmem>>, vector<1x64x256xf32>
    %27 = vector.shape_cast %26 : vector<1x64x256xf32> to vector<64x256xf32>
    %28 = vector.shape_cast %25 : vector<64x256xf32> to vector<1x64x256xf32>
    tpu.vector_store %arg5[%c0_12, %c0_13, %c0_14], %28 {strides = array<i32>} : memref<1x128x256xf32, #tpu.memory_space<vmem>>, vector<1x64x256xf32>,
    %29 = vector.broadcast %17 : vector<1x256xf32> to vector<64x256xf32>
    %30 = vector.broadcast %18 : vector<64x1xf32> to vector<64x256xf32>
    %31 = arith.mulf %29, %30 : vector<64x256xf32>
    %32 = vector.broadcast %19 : vector<64x1xf32> to vector<64x256xf32>
    %33 = arith.addf %31, %32 : vector<64x256xf32>
    %34 = math.sin %33 : vector<64x256xf32>
    %c0_15 = arith.constant 0 : index
    %c64 = arith.constant 64 : index
    %c0_16 = arith.constant 0 : index
    %35 = vector.load %arg5[%c0_15, %c64, %c0_16] : memref<1x128x256xf32, #tpu.memory_space<vmem>>, vector<1x64x256xf32>
    %36 = vector.shape_cast %35 : vector<1x64x256xf32> to vector<64x256xf32>
    %37 = vector.shape_cast %34 : vector<64x256xf32> to vector<1x64x256xf32>
    tpu.vector_store %arg5[%c0_15, %c64, %c0_16], %37 {strides = array<i32>} : memref<1x128x256xf32, #tpu.memory_space<vmem>>, vector<1x64x256xf32>,
    return
  }
  func.func @transform_0(%arg0: i32) -> (i32, i32, i32) {
    %c0_i32 = arith.constant 0 : i32
    %c0_i32_0 = arith.constant 0 : i32
    %c0_i32_1 = arith.constant 0 : i32
    return %arg0, %c0_i32, %c0_i32_0 : i32, i32, i32
  }
  func.func @transform_1(%arg0: i32) -> (i32, i32) {
    %c0_i32 = arith.constant 0 : i32
    %c0_i32_0 = arith.constant 0 : i32
    %c0_i32_1 = arith.constant 0 : i32
    return %c0_i32, %c0_i32_0 : i32, i32
  }
  func.func @transform_2(%arg0: i32) -> (i32, i32) {
    %c0_i32 = arith.constant 0 : i32
    %c0_i32_0 = arith.constant 0 : i32
    %c0_i32_1 = arith.constant 0 : i32
    return %c0_i32, %c0_i32_0 : i32, i32
  }
  func.func @transform_3(%arg0: i32) -> (i32, i32) {
    %c0_i32 = arith.constant 0 : i32
    %c0_i32_0 = arith.constant 0 : i32
    %c0_i32_1 = arith.constant 0 : i32
    return %c0_i32, %c0_i32_0 : i32, i32
  }
  func.func @transform_4(%arg0: i32) -> (i32, i32, i32) {
    %c0_i32 = arith.constant 0 : i32
    %c0_i32_0 = arith.constant 0 : i32
    %c0_i32_1 = arith.constant 0 : i32
    return %arg0, %c0_i32, %c0_i32_0 : i32, i32, i32
  }
}

</mosaic_0001>

<llo_original>
// kernel: tpu_custom_call.1
$region0: #{tpu_custom_call.1}
  #allocation0 [shape = 'u32[]', space=smem, size = 0x4, offset = 0x4, fixed_abs, tag = 'smem constant byte address 0x4 - core index']
  #allocation1 [shape = 'u32[144,128]{1,0:T(1,128)}', space=vmem, size = 0x12000, scoped, tag = 'internal scratch']
  %s0 = inlined_call_operand.vmem [shape: bf16[2,1,256], index: 0, kind: input, shape index: {}]
  %s1 = inlined_call_operand.hbm [shape: bf16[256,1024], index: 1, kind: input, shape index: {}]
  %s2 = inlined_call_operand.vmem [shape: f32[64,1], index: 2, kind: input, shape index: {}]
  %s3 = inlined_call_operand.vmem [shape: f32[64,1], index: 3, kind: input, shape index: {}]
  %s4 = inlined_call_operand.hbm [shape: f32[2,128,256], index: 4, kind: output, shape index: {}]
  %s5 = sld [smem:[#allocation0]]
  $region53: #{tpu_custom_call.1} parent=0
    _
  %s7 = ssub.s32 1, %s5
  %s8 = scalar_select 0, %s7, %s5
  $region1: #{tpu_custom_call.1} parent=0
    #allocation2 [shape = 'u8[524288]{0}', space=vmem, size = 0x80000, scoped, tag = 'input window, operand 1, single buffered']
    #allocation3 [shape = 's32[2]{0}', space=sflag, size = 0x8, scoped, tag = 'scoped memory for tpu_custom_call.1']
    #allocation4 [shape = 's32[2]{0}', space=sflag, size = 0x8, scoped, tag = 'scoped memory for tpu_custom_call.1']
    #allocation5 [shape = 'u8[262144]{0}', space=vmem, size = 0x40000, scoped, tag = 'output window, operand 0']
    %9 = vsyncpa [#allocation3], 0
    %10 = vsyncpa [#allocation4], 0
    %s11 = scalar_lea.sflag [#allocation4], 1
    %12 = vsyncpa %s11, 0
    loop: start=0, step=1, limit=4
    $region2: #{tpu_custom_call.1} parent=1 // loop_pre_header
      _
    $region3: #{tpu_custom_call.1} parent=1 // loop_header
      %s14 = sphi 0, %s18
      %p15 = scmp.ge.s32.totalorder %s14, 4
      %s24 = sphi 0, %s26
      %s27 = sphi 0, %s24
      %s28 = sphi 0, %s27
      %s44 = sphi 0, %s28
      %s48 = sphi 0, %s48
      %s50 = sphi 0, %s48
      %s51 = sphi 0, %s50
      %s65 = sphi 0, %s51
      %s69 = sphi 0, %s69
      %s71 = sphi 0, %s69
      %s72 = sphi 0, %s71
      %s86 = sphi 0, %s72
      %s90 = sphi 0, %s90
      %s92 = sphi 0, %s90
      %s93 = sphi 0, %s92
      %s107 = sphi 0, %s93
      %s113 = sphi 0, %s115
      %s116 = sphi 0, %s113
      %s117 = sphi 0, %s116
      %s133 = sphi 0, %s117
    $region4: #{tpu_custom_call.1} parent=1 // loop_header_branch
      %17 = sbr.rel (%p15) target = $region8
    $region5: #{tpu_custom_call.1} parent=1 // loop_body
      %s19 = ssub.s32 %s14, 1
      %s20 = ssub.s32 %s14, 2
      %s21 = sadd.s32 %s14, 1
      %s22 = ssub.s32 %s14, %s21
      %p23 = scmp.eq.s32.totalorder %s22, 0
      %s25 = sadd.s32 %s24, 1
      %s26 = scalar_select %p23, %s24, %s25
      %p29 = pneg %p23
      %p30 = scmp.eq.s32.totalorder %s14, 1
      %p31 = por %p29, %p30
      %p32 = scmp.ne.s32.totalorder %s24, %s27
      %p33 = scmp.eq.s32.totalorder %s14, 0
      %p34 = por %p32, %p33
      %p35 = scmp.ne.s32.totalorder %s24, %s27
      %p36 = scmp.eq.s32.totalorder %s19, 1
      %p37 = por %p35, %p36
      %p38 = scmp.ne.s32.totalorder %s27, %s28
      %p39 = scmp.eq.s32.totalorder %s19, 0
      %p40 = por %p38, %p39
      %p41 = scmp.ne.s32.totalorder %s27, %s28
      %p42 = scmp.eq.s32.totalorder %s20, 1
      %p43 = por %p41, %p42
      %p45 = scmp.ne.s32.totalorder %s28, %s44
      %p46 = scmp.eq.s32.totalorder %s20, 0
      %p47 = por %p45, %p46
      %s49 = sadd.s32 %s48, 1
      %p52 = scmp.eq.s32.totalorder %s14, 1
      %p53 = scmp.ne.s32.totalorder %s48, %s50
      %p54 = scmp.eq.s32.totalorder %s14, 0
      %p55 = por %p53, %p54
      %p56 = scmp.ne.s32.totalorder %s48, %s50
      %p57 = scmp.eq.s32.totalorder %s19, 1
      %p58 = por %p56, %p57
      %p59 = scmp.ne.s32.totalorder %s50, %s51
      %p60 = scmp.eq.s32.totalorder %s19, 0
      %p61 = por %p59, %p60
      %p62 = scmp.ne.s32.totalorder %s50, %s51
      %p63 = scmp.eq.s32.totalorder %s20, 1
      %p64 = por %p62, %p63
      %p66 = scmp.ne.s32.totalorder %s51, %s65
      %p67 = scmp.eq.s32.totalorder %s20, 0
      %p68 = por %p66, %p67
      %s70 = sadd.s32 %s69, 1
      %p73 = scmp.eq.s32.totalorder %s14, 1
      %p74 = scmp.ne.s32.totalorder %s69, %s71
      %p75 = scmp.eq.s32.totalorder %s14, 0
      %p76 = por %p74, %p75
      %p77 = scmp.ne.s32.totalorder %s69, %s71
      %p78 = scmp.eq.s32.totalorder %s19, 1
      %p79 = por %p77, %p78
      %p80 = scmp.ne.s32.totalorder %s71, %s72
      %p81 = scmp.eq.s32.totalorder %s19, 0
      %p82 = por %p80, %p81
      %p83 = scmp.ne.s32.totalorder %s71, %s72
      %p84 = scmp.eq.s32.totalorder %s20, 1
      %p85 = por %p83, %p84
      %p87 = scmp.ne.s32.totalorder %s72, %s86
      %p88 = scmp.eq.s32.totalorder %s20, 0
      %p89 = por %p87, %p88
      %s91 = sadd.s32 %s90, 1
      %p94 = scmp.eq.s32.totalorder %s14, 1
      %p95 = scmp.ne.s32.totalorder %s90, %s92
      %p96 = scmp.eq.s32.totalorder %s14, 0
      %p97 = por %p95, %p96
      %p98 = scmp.ne.s32.totalorder %s90, %s92
      %p99 = scmp.eq.s32.totalorder %s19, 1
      %p100 = por %p98, %p99
      %p101 = scmp.ne.s32.totalorder %s92, %s93
      %p102 = scmp.eq.s32.totalorder %s19, 0
      %p103 = por %p101, %p102
      %p104 = scmp.ne.s32.totalorder %s92, %s93
      %p105 = scmp.eq.s32.totalorder %s20, 1
      %p106 = por %p104, %p105
      %p108 = scmp.ne.s32.totalorder %s93, %s107
      %p109 = scmp.eq.s32.totalorder %s20, 0
      %p110 = por %p108, %p109
      %s111 = ssub.s32 %s14, %s21
      %p112 = scmp.eq.s32.totalorder %s111, 0
      %s114 = sadd.s32 %s113, 1
      %s115 = scalar_select %p112, %s113, %s114
      %p118 = pneg %p112
      %p119 = scmp.eq.s32.totalorder %s14, 1
      %p120 = por %p118, %p119
      %p121 = scmp.ne.s32.totalorder %s113, %s116
      %p122 = scmp.eq.s32.totalorder %s14, 0
      %p123 = por %p121, %p122
      %p124 = scmp.ne.s32.totalorder %s113, %s116
      %p125 = scmp.eq.s32.totalorder %s19, 1
      %p126 = por %p124, %p125
      %p127 = scmp.ne.s32.totalorder %s116, %s117
      %p128 = scmp.eq.s32.totalorder %s19, 0
      %p129 = por %p127, %p128
      %p130 = scmp.ne.s32.totalorder %s116, %s117
      %p131 = scmp.eq.s32.totalorder %s20, 1
      %p132 = por %p130, %p131
      %p134 = scmp.ne.s32.totalorder %s117, %s133
      %p135 = scmp.eq.s32.totalorder %s20, 0
      %p136 = por %p134, %p135
      %p137 = scmp.le.s32.totalorder 1, %s14
      %p138 = scmp.lt.s32.totalorder %s14, 3
      %p139 = pnand %p137, %p138
      %p140 = pneg %p139
      // Predicated region
      $region9: #{tpu_custom_call.1} parent=5 // pred_check
        _
      $region10: #{tpu_custom_call.1} parent=5 // pred_check_branch
        %142 = sbr.rel (%p139) target = $region12
      $region11: #{tpu_custom_call.1} parent=5 // pred_region
        %s143 = ssub.s32 %s14, 1
        // Predicated region
        $region13: #{tpu_custom_call.1} parent=11 // pred_check
          %p144 = pneg %p61
        $region14: #{tpu_custom_call.1} parent=11 // pred_check_branch
          %146 = sbr.rel (%p144) target = $region16
        $region15: #{tpu_custom_call.1} parent=11 // pred_region
          %s148 = ssub.s32 16384, 16384
          %149 = vsyncadd [#allocation3], %s148
          %s150 = sshll.u32 [#allocation2], 4
          %s151 = int_to_ptr.vmem [resolvable:$true] %s150
          %156 = dma.hbm_to_vmem [thread:$0]  %s1, 16384, %s151, [#allocation3], 512, 512, 32
        $region16: #{tpu_custom_call.1} parent=11 // pred_fallthru
          _
        // Predicated region
        $region17: #{tpu_custom_call.1} parent=11 // pred_check
          %p157 = pneg %p82
        $region18: #{tpu_custom_call.1} parent=11 // pred_check_branch
          %159 = sbr.rel (%p157) target = $region20
        $region19: #{tpu_custom_call.1} parent=11 // pred_region
          _
        $region20: #{tpu_custom_call.1} parent=11 // pred_fallthru
          _
        // Predicated region
        $region21: #{tpu_custom_call.1} parent=11 // pred_check
          %p160 = pneg %p103
        $region22: #{tpu_custom_call.1} parent=11 // pred_check_branch
          %162 = sbr.rel (%p160) target = $region24
        $region23: #{tpu_custom_call.1} parent=11 // pred_region
          _
        $region24: #{tpu_custom_call.1} parent=11 // pred_fallthru
          _
      $region12: #{tpu_custom_call.1} parent=5 // pred_fallthru
        _
      %p163 = scmp.lt.s32.totalorder %s14, 2
      // Predicated region
      $region25: #{tpu_custom_call.1} parent=5 // pred_check
        %p164 = pneg %p163
      $region26: #{tpu_custom_call.1} parent=5 // pred_check_branch
        %166 = sbr.rel (%p164) target = $region28
      $region27: #{tpu_custom_call.1} parent=5 // pred_region
        // Predicated region
        $region29: #{tpu_custom_call.1} parent=27 // pred_check
          %p167 = pneg %p34
        $region30: #{tpu_custom_call.1} parent=27 // pred_check_branch
          %169 = sbr.rel (%p167) target = $region32
        $region31: #{tpu_custom_call.1} parent=27 // pred_region
          %p170 = scmp.lt.s32.totalorder %s14, 1
          %s171 = scalar_select %p170, %s14, 1
          %s172 = smul.addr %s171, 2
          %s173 = scalar_lea.vmem %s0, %s172
        $region32: #{tpu_custom_call.1} parent=27 // pred_fallthru
          _
      $region28: #{tpu_custom_call.1} parent=5 // pred_fallthru
        _
      %p174 = scmp.le.s32.totalorder 1, %s14
      %p175 = scmp.lt.s32.totalorder %s14, 3
      %p176 = pnand %p174, %p175
      %p177 = pneg %p176
      // Predicated region
      $region33: #{tpu_custom_call.1} parent=5 // pred_check
        _
      $region34: #{tpu_custom_call.1} parent=5 // pred_check_branch
        %179 = sbr.rel (%p176) target = $region36
      $region35: #{tpu_custom_call.1} parent=5 // pred_region
        %s180 = ssub.s32 %s14, 1
        // Predicated region
        $region37: #{tpu_custom_call.1} parent=35 // pred_check
          %p181 = pneg %p61
        $region38: #{tpu_custom_call.1} parent=35 // pred_check_branch
          %183 = sbr.rel (%p181) target = $region40
        $region39: #{tpu_custom_call.1} parent=35 // pred_region
          %184 = dma.done [#allocation3], 16384
        $region40: #{tpu_custom_call.1} parent=35 // pred_fallthru
          _
        %p185 = scmp.lt.s32.totalorder %s19, 1
        %s186 = scalar_select %p185, %s19, 1
        %s187 = smul.addr %s186, 2
        %s188 = scalar_lea.vmem %s0, %s187
        %p189 = pneg %p40
        %p190 = pneg %p37
        %p191 = pneg %p61
        %p192 = pneg %p58
        %p193 = pneg %p82
        %p194 = pneg %p79
        %p195 = pneg %p103
        %p196 = pneg %p100
        %p197 = pneg %p129
        %p198 = pneg %p126
        %s199 = sand.u32 %s116, 1
        %s200 = scalar_lea.sflag [#allocation4], %s199
        %s201 = sand.u32 %s116, 1
        %s202 = smul.addr %s201, 256
        %s203 = scalar_lea.vmem [#allocation5], %s202
        %p204 = scmp.lt.s32.totalorder %s19, 1
        %s205 = scalar_select %p204, %s19, 1
        %s206 = smul.addr %s205, 2
        %s207 = scalar_lea.vmem %s0, %s206
        %v208 = vld [vmem:[%s207] sm:$0x3]
        %v209 = vld [vmem:[#allocation2] sm:$0xff]
        %v210 = vld [vmem:[#allocation2 + $0x8] sm:$0xff]
        %v211 = vld [vmem:[#allocation2 + $0x10] sm:$0xff]
        %v212 = vld [vmem:[#allocation2 + $0x18] sm:$0xff]
        %v213 = vld [vmem:[#allocation2 + $0x20] sm:$0xff]
        %v214 = vld [vmem:[#allocation2 + $0x28] sm:$0xff]
        %v215 = vld [vmem:[#allocation2 + $0x30] sm:$0xff]
        %v216 = vld [vmem:[#allocation2 + $0x38] sm:$0xff]
        %v217 = vld [vmem:[#allocation2 + $0x40] sm:$0xff]
        %v218 = vld [vmem:[#allocation2 + $0x48] sm:$0xff]
        %v219 = vld [vmem:[#allocation2 + $0x50] sm:$0xff]
        %v220 = vld [vmem:[#allocation2 + $0x58] sm:$0xff]
        %v221 = vld [vmem:[#allocation2 + $0x60] sm:$0xff]
        %v222 = vld [vmem:[#allocation2 + $0x68] sm:$0xff]
        %v223 = vld [vmem:[#allocation2 + $0x70] sm:$0xff]
        %v224 = vld [vmem:[#allocation2 + $0x78] sm:$0xff]
        %v225 = vld [vmem:[#allocation2 + $0x80] sm:$0xff]
        %v226 = vld [vmem:[#allocation2 + $0x88] sm:$0xff]
        %v227 = vld [vmem:[#allocation2 + $0x90] sm:$0xff]
        %v228 = vld [vmem:[#allocation2 + $0x98] sm:$0xff]
        %v229 = vld [vmem:[#allocation2 + $0xa0] sm:$0xff]
        %v230 = vld [vmem:[#allocation2 + $0xa8] sm:$0xff]
        %v231 = vld [vmem:[#allocation2 + $0xb0] sm:$0xff]
        %v232 = vld [vmem:[#allocation2 + $0xb8] sm:$0xff]
        %v233 = vld [vmem:[#allocation2 + $0xc0] sm:$0xff]
        %v234 = vld [vmem:[#allocation2 + $0xc8] sm:$0xff]
        %v235 = vld [vmem:[#allocation2 + $0xd0] sm:$0xff]
        %v236 = vld [vmem:[#allocation2 + $0xd8] sm:$0xff]
        %v237 = vld [vmem:[#allocation2 + $0xe0] sm:$0xff]
        %v238 = vld [vmem:[#allocation2 + $0xe8] sm:$0xff]
        %v239 = vld [vmem:[#allocation2 + $0xf0] sm:$0xff]
        %v240 = vld [vmem:[#allocation2 + $0xf8] sm:$0xff]
        %v241 = vld [vmem:[#allocation2 + $0x100] sm:$0xff]
        %v242 = vld [vmem:[#allocation2 + $0x108] sm:$0xff]
        %v243 = vld [vmem:[#allocation2 + $0x110] sm:$0xff]
        %v244 = vld [vmem:[#allocation2 + $0x118] sm:$0xff]
        %v245 = vld [vmem:[#allocation2 + $0x120] sm:$0xff]
        %v246 = vld [vmem:[#allocation2 + $0x128] sm:$0xff]
        %v247 = vld [vmem:[#allocation2 + $0x130] sm:$0xff]
        %v248 = vld [vmem:[#allocation2 + $0x138] sm:$0xff]
        %v249 = vld [vmem:[#allocation2 + $0x140] sm:$0xff]
        %v250 = vld [vmem:[#allocation2 + $0x148] sm:$0xff]
        %v251 = vld [vmem:[#allocation2 + $0x150] sm:$0xff]
        %v252 = vld [vmem:[#allocation2 + $0x158] sm:$0xff]
        %v253 = vld [vmem:[#allocation2 + $0x160] sm:$0xff]
        %v254 = vld [vmem:[#allocation2 + $0x168] sm:$0xff]
        %v255 = vld [vmem:[#allocation2 + $0x170] sm:$0xff]
        %v256 = vld [vmem:[#allocation2 + $0x178] sm:$0xff]
        %v257 = vld [vmem:[#allocation2 + $0x180] sm:$0xff]
        %v258 = vld [vmem:[#allocation2 + $0x188] sm:$0xff]
        %v259 = vld [vmem:[#allocation2 + $0x190] sm:$0xff]
        %v260 = vld [vmem:[#allocation2 + $0x198] sm:$0xff]
        %v261 = vld [vmem:[#allocation2 + $0x1a0] sm:$0xff]
        %v262 = vld [vmem:[#allocation2 + $0x1a8] sm:$0xff]
        %v263 = vld [vmem:[#allocation2 + $0x1b0] sm:$0xff]
        %v264 = vld [vmem:[#allocation2 + $0x1b8] sm:$0xff]
        %v265 = vld [vmem:[#allocation2 + $0x1c0] sm:$0xff]
        %v266 = vld [vmem:[#allocation2 + $0x1c8] sm:$0xff]
        %v267 = vld [vmem:[#allocation2 + $0x1d0] sm:$0xff]
        %v268 = vld [vmem:[#allocation2 + $0x1d8] sm:$0xff]
        %v269 = vld [vmem:[#allocation2 + $0x1e0] sm:$0xff]
        %v270 = vld [vmem:[#allocation2 + $0x1e8] sm:$0xff]
        %v271 = vld [vmem:[#allocation2 + $0x1f0] sm:$0xff]
        %v272 = vld [vmem:[#allocation2 + $0x1f8] sm:$0xff]
        %v273 = vld [vmem:[#allocation2 + $0x200] sm:$0xff]
        %v274 = vld [vmem:[#allocation2 + $0x208] sm:$0xff]
        %v275 = vld [vmem:[#allocation2 + $0x210] sm:$0xff]
        %v276 = vld [vmem:[#allocation2 + $0x218] sm:$0xff]
        %v277 = vld [vmem:[#allocation2 + $0x220] sm:$0xff]
        %v278 = vld [vmem:[#allocation2 + $0x228] sm:$0xff]
        %v279 = vld [vmem:[#allocation2 + $0x230] sm:$0xff]
        %v280 = vld [vmem:[#allocation2 + $0x238] sm:$0xff]
        %v281 = vld [vmem:[#allocation2 + $0x240] sm:$0xff]
        %v282 = vld [vmem:[#allocation2 + $0x248] sm:$0xff]
        %v283 = vld [vmem:[#allocation2 + $0x250] sm:$0xff]
        %v284 = vld [vmem:[#allocation2 + $0x258] sm:$0xff]
        %v285 = vld [vmem:[#allocation2 + $0x260] sm:$0xff]
        %v286 = vld [vmem:[#allocation2 + $0x268] sm:$0xff]
        %v287 = vld [vmem:[#allocation2 + $0x270] sm:$0xff]
        %v288 = vld [vmem:[#allocation2 + $0x278] sm:$0xff]
        %v289 = vld [vmem:[#allocation2 + $0x280] sm:$0xff]
        %v290 = vld [vmem:[#allocation2 + $0x288] sm:$0xff]
        %v291 = vld [vmem:[#allocation2 + $0x290] sm:$0xff]
        %v292 = vld [vmem:[#allocation2 + $0x298] sm:$0xff]
        %v293 = vld [vmem:[#allocation2 + $0x2a0] sm:$0xff]
        %v294 = vld [vmem:[#allocation2 + $0x2a8] sm:$0xff]
        %v295 = vld [vmem:[#allocation2 + $0x2b0] sm:$0xff]
        %v296 = vld [vmem:[#allocation2 + $0x2b8] sm:$0xff]
        %v297 = vld [vmem:[#allocation2 + $0x2c0] sm:$0xff]
        %v298 = vld [vmem:[#allocation2 + $0x2c8] sm:$0xff]
        %v299 = vld [vmem:[#allocation2 + $0x2d0] sm:$0xff]
        %v300 = vld [vmem:[#allocation2 + $0x2d8] sm:$0xff]
        %v301 = vld [vmem:[#allocation2 + $0x2e0] sm:$0xff]
        %v302 = vld [vmem:[#allocation2 + $0x2e8] sm:$0xff]
        %v303 = vld [vmem:[#allocation2 + $0x2f0] sm:$0xff]
        %v304 = vld [vmem:[#allocation2 + $0x2f8] sm:$0xff]
        %v305 = vld [vmem:[#allocation2 + $0x300] sm:$0xff]
        %v306 = vld [vmem:[#allocation2 + $0x308] sm:$0xff]
        %v307 = vld [vmem:[#allocation2 + $0x310] sm:$0xff]
        %v308 = vld [vmem:[#allocation2 + $0x318] sm:$0xff]
        %v309 = vld [vmem:[#allocation2 + $0x320] sm:$0xff]
        %v310 = vld [vmem:[#allocation2 + $0x328] sm:$0xff]
        %v311 = vld [vmem:[#allocation2 + $0x330] sm:$0xff]
        %v312 = vld [vmem:[#allocation2 + $0x338] sm:$0xff]
        %v313 = vld [vmem:[#allocation2 + $0x340] sm:$0xff]
        %v314 = vld [vmem:[#allocation2 + $0x348] sm:$0xff]
        %v315 = vld [vmem:[#allocation2 + $0x350] sm:$0xff]
        %v316 = vld [vmem:[#allocation2 + $0x358] sm:$0xff]
        %v317 = vld [vmem:[#allocation2 + $0x360] sm:$0xff]
        %v318 = vld [vmem:[#allocation2 + $0x368] sm:$0xff]
        %v319 = vld [vmem:[#allocation2 + $0x370] sm:$0xff]
        %v320 = vld [vmem:[#allocation2 + $0x378] sm:$0xff]
        %v321 = vld [vmem:[#allocation2 + $0x380] sm:$0xff]
        %v322 = vld [vmem:[#allocation2 + $0x388] sm:$0xff]
        %v323 = vld [vmem:[#allocation2 + $0x390] sm:$0xff]
        %v324 = vld [vmem:[#allocation2 + $0x398] sm:$0xff]
        %v325 = vld [vmem:[#allocation2 + $0x3a0] sm:$0xff]
        %v326 = vld [vmem:[#allocation2 + $0x3a8] sm:$0xff]
        %v327 = vld [vmem:[#allocation2 + $0x3b0] sm:$0xff]
        %v328 = vld [vmem:[#allocation2 + $0x3b8] sm:$0xff]
        %v329 = vld [vmem:[#allocation2 + $0x3c0] sm:$0xff]
        %v330 = vld [vmem:[#allocation2 + $0x3c8] sm:$0xff]
        %v331 = vld [vmem:[#allocation2 + $0x3d0] sm:$0xff]
        %v332 = vld [vmem:[#allocation2 + $0x3d8] sm:$0xff]
        %v333 = vld [vmem:[#allocation2 + $0x3e0] sm:$0xff]
        %v334 = vld [vmem:[#allocation2 + $0x3e8] sm:$0xff]
        %v335 = vld [vmem:[#allocation2 + $0x3f0] sm:$0xff]
        %v336 = vld [vmem:[#allocation2 + $0x3f8] sm:$0xff]
        %v339 = vunpack.c.l.s4 1966171168
        %v340 = vunpack.c.0.s8 %v339
        %v341 = vlaneseq
        %v342 = vshrl.u32 %v341, 7
        %v343 = vsub.s32 %v340, %v342
        %v344 = vrot.slane %v208, %v343
        %v345 = vcombine.high %v344, %v344
        %v347 = vunpack.c.l.s4 1966171168
        %v348 = vunpack.c.0.s8 %v347
        %v349 = vlaneseq
        %v350 = vshrl.u32 %v349, 7
        %v351 = vsub.s32 %v348, %v350
        %v352 = vrot.slane %v344, %v351
        %v354 = vunpack.c.l.s4 1966171168
        %v355 = vunpack.c.0.s8 %v354
        %v356 = vlaneseq
        %v357 = vshrl.u32 %v356, 7
        %v358 = vsub.s32 %v355, %v357
        %v359 = vrot.slane %v345, %v358
        %v490 = vunpack.c.l.b16 %v209
        %v491 = vunpack.c.h.b16 %v209
        %v492 = vunpack.c.l.b16 %v210
        %v493 = vunpack.c.h.b16 %v210
        %v494 = vunpack.c.l.b16 %v211
        %v495 = vunpack.c.h.b16 %v211
        %v496 = vunpack.c.l.b16 %v212
        %v497 = vunpack.c.h.b16 %v212
        %v498 = vunpack.c.l.b16 %v213
        %v499 = vunpack.c.h.b16 %v213
        %v500 = vunpack.c.l.b16 %v214
        %v501 = vunpack.c.h.b16 %v214
        %v502 = vunpack.c.l.b16 %v215
        %v503 = vunpack.c.h.b16 %v215
        %v504 = vunpack.c.l.b16 %v216
        %v505 = vunpack.c.h.b16 %v216
        %v506 = vunpack.c.l.b16 %v217
        %v507 = vunpack.c.h.b16 %v217
        %v508 = vunpack.c.l.b16 %v218
        %v509 = vunpack.c.h.b16 %v218
        %v510 = vunpack.c.l.b16 %v219
        %v511 = vunpack.c.h.b16 %v219
        %v512 = vunpack.c.l.b16 %v220
        %v513 = vunpack.c.h.b16 %v220
        %v514 = vunpack.c.l.b16 %v221
        %v515 = vunpack.c.h.b16 %v221
        %v516 = vunpack.c.l.b16 %v222
        %v517 = vunpack.c.h.b16 %v222
        %v518 = vunpack.c.l.b16 %v223
        %v519 = vunpack.c.h.b16 %v223
        %v520 = vunpack.c.l.b16 %v224
        %v521 = vunpack.c.h.b16 %v224
        %v522 = vunpack.c.l.b16 %v225
        %v523 = vunpack.c.h.b16 %v225
        %v524 = vunpack.c.l.b16 %v226
        %v525 = vunpack.c.h.b16 %v226
        %v526 = vunpack.c.l.b16 %v227
        %v527 = vunpack.c.h.b16 %v227
        %v528 = vunpack.c.l.b16 %v228
        %v529 = vunpack.c.h.b16 %v228
        %v530 = vunpack.c.l.b16 %v229
        %v531 = vunpack.c.h.b16 %v229
        %v532 = vunpack.c.l.b16 %v230
        %v533 = vunpack.c.h.b16 %v230
        %v534 = vunpack.c.l.b16 %v231
        %v535 = vunpack.c.h.b16 %v231
        %v536 = vunpack.c.l.b16 %v232
        %v537 = vunpack.c.h.b16 %v232
        %v538 = vunpack.c.l.b16 %v233
        %v539 = vunpack.c.h.b16 %v233
        %v540 = vunpack.c.l.b16 %v234
        %v541 = vunpack.c.h.b16 %v234
        %v542 = vunpack.c.l.b16 %v235
        %v543 = vunpack.c.h.b16 %v235
        %v544 = vunpack.c.l.b16 %v236
        %v545 = vunpack.c.h.b16 %v236
        %v546 = vunpack.c.l.b16 %v237
        %v547 = vunpack.c.h.b16 %v237
        %v548 = vunpack.c.l.b16 %v238
        %v549 = vunpack.c.h.b16 %v238
        %v550 = vunpack.c.l.b16 %v239
        %v551 = vunpack.c.h.b16 %v239
        %v552 = vunpack.c.l.b16 %v240
        %v553 = vunpack.c.h.b16 %v240
        %v554 = vunpack.c.l.b16 %v241
        %v555 = vunpack.c.h.b16 %v241
        %v556 = vunpack.c.l.b16 %v242
        %v557 = vunpack.c.h.b16 %v242
        %v558 = vunpack.c.l.b16 %v243
        %v559 = vunpack.c.h.b16 %v243
        %v560 = vunpack.c.l.b16 %v244
        %v561 = vunpack.c.h.b16 %v244
        %v562 = vunpack.c.l.b16 %v245
        %v563 = vunpack.c.h.b16 %v245
        %v564 = vunpack.c.l.b16 %v246
        %v565 = vunpack.c.h.b16 %v246
        %v566 = vunpack.c.l.b16 %v247
        %v567 = vunpack.c.h.b16 %v247
        %v568 = vunpack.c.l.b16 %v248
        %v569 = vunpack.c.h.b16 %v248
        %v570 = vunpack.c.l.b16 %v249
        %v571 = vunpack.c.h.b16 %v249
        %v572 = vunpack.c.l.b16 %v250
        %v573 = vunpack.c.h.b16 %v250
        %v574 = vunpack.c.l.b16 %v251
        %v575 = vunpack.c.h.b16 %v251
        %v576 = vunpack.c.l.b16 %v252
        %v577 = vunpack.c.h.b16 %v252
        %v578 = vunpack.c.l.b16 %v253
        %v579 = vunpack.c.h.b16 %v253
        %v580 = vunpack.c.l.b16 %v254
        %v581 = vunpack.c.h.b16 %v254
        %v582 = vunpack.c.l.b16 %v255
        %v583 = vunpack.c.h.b16 %v255
        %v584 = vunpack.c.l.b16 %v256
        %v585 = vunpack.c.h.b16 %v256
        %v586 = vunpack.c.l.b16 %v257
        %v587 = vunpack.c.h.b16 %v257
        %v588 = vunpack.c.l.b16 %v258
        %v589 = vunpack.c.h.b16 %v258
        %v590 = vunpack.c.l.b16 %v259
        %v591 = vunpack.c.h.b16 %v259
        %v592 = vunpack.c.l.b16 %v260
        %v593 = vunpack.c.h.b16 %v260
        %v594 = vunpack.c.l.b16 %v261
        %v595 = vunpack.c.h.b16 %v261
        %v596 = vunpack.c.l.b16 %v262
        %v597 = vunpack.c.h.b16 %v262
        %v598 = vunpack.c.l.b16 %v263
        %v599 = vunpack.c.h.b16 %v263
        %v600 = vunpack.c.l.b16 %v264
        %v601 = vunpack.c.h.b16 %v264
        %v602 = vunpack.c.l.b16 %v265
        %v603 = vunpack.c.h.b16 %v265
        %v604 = vunpack.c.l.b16 %v266
        %v605 = vunpack.c.h.b16 %v266
        %v606 = vunpack.c.l.b16 %v267
        %v607 = vunpack.c.h.b16 %v267
        %v608 = vunpack.c.l.b16 %v268
        %v609 = vunpack.c.h.b16 %v268
        %v610 = vunpack.c.l.b16 %v269
        %v611 = vunpack.c.h.b16 %v269
        %v612 = vunpack.c.l.b16 %v270
        %v613 = vunpack.c.h.b16 %v270
        %v614 = vunpack.c.l.b16 %v271
        %v615 = vunpack.c.h.b16 %v271
        %v616 = vunpack.c.l.b16 %v272
        %v617 = vunpack.c.h.b16 %v272
        %v618 = vunpack.c.l.b16 %v273
        %v619 = vunpack.c.h.b16 %v273
        %v620 = vunpack.c.l.b16 %v274
        %v621 = vunpack.c.h.b16 %v274
        %v622 = vunpack.c.l.b16 %v275
        %v623 = vunpack.c.h.b16 %v275
        %v624 = vunpack.c.l.b16 %v276
        %v625 = vunpack.c.h.b16 %v276
        %v626 = vunpack.c.l.b16 %v277
        %v627 = vunpack.c.h.b16 %v277
        %v628 = vunpack.c.l.b16 %v278
        %v629 = vunpack.c.h.b16 %v278
        %v630 = vunpack.c.l.b16 %v279
        %v631 = vunpack.c.h.b16 %v279
        %v632 = vunpack.c.l.b16 %v280
        %v633 = vunpack.c.h.b16 %v280
        %v634 = vunpack.c.l.b16 %v281
        %v635 = vunpack.c.h.b16 %v281
        %v636 = vunpack.c.l.b16 %v282
        %v637 = vunpack.c.h.b16 %v282
        %v638 = vunpack.c.l.b16 %v283
        %v639 = vunpack.c.h.b16 %v283
        %v640 = vunpack.c.l.b16 %v284
        %v641 = vunpack.c.h.b16 %v284
        %v642 = vunpack.c.l.b16 %v285
        %v643 = vunpack.c.h.b16 %v285
        %v644 = vunpack.c.l.b16 %v286
        %v645 = vunpack.c.h.b16 %v286
        %v646 = vunpack.c.l.b16 %v287
        %v647 = vunpack.c.h.b16 %v287
        %v648 = vunpack.c.l.b16 %v288
        %v649 = vunpack.c.h.b16 %v288
        %v650 = vunpack.c.l.b16 %v289
        %v651 = vunpack.c.h.b16 %v289
        %v652 = vunpack.c.l.b16 %v290
        %v653 = vunpack.c.h.b16 %v290
        %v654 = vunpack.c.l.b16 %v291
        %v655 = vunpack.c.h.b16 %v291
        %v656 = vunpack.c.l.b16 %v292
        %v657 = vunpack.c.h.b16 %v292
        %v658 = vunpack.c.l.b16 %v293
        %v659 = vunpack.c.h.b16 %v293
        %v660 = vunpack.c.l.b16 %v294
        %v661 = vunpack.c.h.b16 %v294
        %v662 = vunpack.c.l.b16 %v295
        %v663 = vunpack.c.h.b16 %v295
        %v664 = vunpack.c.l.b16 %v296
        %v665 = vunpack.c.h.b16 %v296
        %v666 = vunpack.c.l.b16 %v297
        %v667 = vunpack.c.h.b16 %v297
        %v668 = vunpack.c.l.b16 %v298
        %v669 = vunpack.c.h.b16 %v298
        %v670 = vunpack.c.l.b16 %v299
        %v671 = vunpack.c.h.b16 %v299
        %v672 = vunpack.c.l.b16 %v300
        %v673 = vunpack.c.h.b16 %v300
        %v674 = vunpack.c.l.b16 %v301
        %v675 = vunpack.c.h.b16 %v301
        %v676 = vunpack.c.l.b16 %v302
        %v677 = vunpack.c.h.b16 %v302
        %v678 = vunpack.c.l.b16 %v303
        %v679 = vunpack.c.h.b16 %v303
        %v680 = vunpack.c.l.b16 %v304
        %v681 = vunpack.c.h.b16 %v304
        %v682 = vunpack.c.l.b16 %v305
        %v683 = vunpack.c.h.b16 %v305
        %v684 = vunpack.c.l.b16 %v306
        %v685 = vunpack.c.h.b16 %v306
        %v686 = vunpack.c.l.b16 %v307
        %v687 = vunpack.c.h.b16 %v307
        %v688 = vunpack.c.l.b16 %v308
        %v689 = vunpack.c.h.b16 %v308
        %v690 = vunpack.c.l.b16 %v309
        %v691 = vunpack.c.h.b16 %v309
        %v692 = vunpack.c.l.b16 %v310
        %v693 = vunpack.c.h.b16 %v310
        %v694 = vunpack.c.l.b16 %v311
        %v695 = vunpack.c.h.b16 %v311
        %v696 = vunpack.c.l.b16 %v312
        %v697 = vunpack.c.h.b16 %v312
        %v698 = vunpack.c.l.b16 %v313
        %v699 = vunpack.c.h.b16 %v313
        %v700 = vunpack.c.l.b16 %v314
        %v701 = vunpack.c.h.b16 %v314
        %v702 = vunpack.c.l.b16 %v315
        %v703 = vunpack.c.h.b16 %v315
        %v704 = vunpack.c.l.b16 %v316
        %v705 = vunpack.c.h.b16 %v316
        %v706 = vunpack.c.l.b16 %v317
        %v707 = vunpack.c.h.b16 %v317
        %v708 = vunpack.c.l.b16 %v318
        %v709 = vunpack.c.h.b16 %v318
        %v710 = vunpack.c.l.b16 %v319
        %v711 = vunpack.c.h.b16 %v319
        %v712 = vunpack.c.l.b16 %v320
        %v713 = vunpack.c.h.b16 %v320
        %v714 = vunpack.c.l.b16 %v321
        %v715 = vunpack.c.h.b16 %v321
        %v716 = vunpack.c.l.b16 %v322
        %v717 = vunpack.c.h.b16 %v322
        %v718 = vunpack.c.l.b16 %v323
        %v719 = vunpack.c.h.b16 %v323
        %v720 = vunpack.c.l.b16 %v324
        %v721 = vunpack.c.h.b16 %v324
        %v722 = vunpack.c.l.b16 %v325
        %v723 = vunpack.c.h.b16 %v325
        %v724 = vunpack.c.l.b16 %v326
        %v725 = vunpack.c.h.b16 %v326
        %v726 = vunpack.c.l.b16 %v327
        %v727 = vunpack.c.h.b16 %v327
        %v728 = vunpack.c.l.b16 %v328
        %v729 = vunpack.c.h.b16 %v328
        %v730 = vunpack.c.l.b16 %v329
        %v731 = vunpack.c.h.b16 %v329
        %v732 = vunpack.c.l.b16 %v330
        %v733 = vunpack.c.h.b16 %v330
        %v734 = vunpack.c.l.b16 %v331
        %v735 = vunpack.c.h.b16 %v331
        %v736 = vunpack.c.l.b16 %v332
        %v737 = vunpack.c.h.b16 %v332
        %v738 = vunpack.c.l.b16 %v333
        %v739 = vunpack.c.h.b16 %v333
        %v740 = vunpack.c.l.b16 %v334
        %v741 = vunpack.c.h.b16 %v334
        %v742 = vunpack.c.l.b16 %v335
        %v743 = vunpack.c.h.b16 %v335
        %v744 = vunpack.c.l.b16 %v336
        %v745 = vunpack.c.h.b16 %v336
        %v746 = vpack.c.b16 %v498, %v490
        %v747 = vpack.c.b16 %v499, %v491
        %v748 = vpack.c.b16 %v500, %v492
        %v749 = vpack.c.b16 %v501, %v493
        %v750 = vpack.c.b16 %v502, %v494
        %v751 = vpack.c.b16 %v503, %v495
        %v752 = vpack.c.b16 %v504, %v496
        %v753 = vpack.c.b16 %v505, %v497
        %v754 = vpack.c.b16 %v514, %v506
        %v755 = vpack.c.b16 %v515, %v507
        %v756 = vpack.c.b16 %v516, %v508
        %v757 = vpack.c.b16 %v517, %v509
        %v758 = vpack.c.b16 %v518, %v510
        %v759 = vpack.c.b16 %v519, %v511
        %v760 = vpack.c.b16 %v520, %v512
        %v761 = vpack.c.b16 %v521, %v513
        %v762 = vpack.c.b16 %v530, %v522
        %v763 = vpack.c.b16 %v531, %v523
        %v764 = vpack.c.b16 %v532, %v524
        %v765 = vpack.c.b16 %v533, %v525
        %v766 = vpack.c.b16 %v534, %v526
        %v767 = vpack.c.b16 %v535, %v527
        %v768 = vpack.c.b16 %v536, %v528
        %v769 = vpack.c.b16 %v537, %v529
        %v770 = vpack.c.b16 %v546, %v538
        %v771 = vpack.c.b16 %v547, %v539
        %v772 = vpack.c.b16 %v548, %v540
        %v773 = vpack.c.b16 %v549, %v541
        %v774 = vpack.c.b16 %v550, %v542
        %v775 = vpack.c.b16 %v551, %v543
        %v776 = vpack.c.b16 %v552, %v544
        %v777 = vpack.c.b16 %v553, %v545
        %v778 = vpack.c.b16 %v562, %v554
        %v779 = vpack.c.b16 %v563, %v555
        %v780 = vpack.c.b16 %v564, %v556
        %v781 = vpack.c.b16 %v565, %v557
        %v782 = vpack.c.b16 %v566, %v558
        %v783 = vpack.c.b16 %v567, %v559
        %v784 = vpack.c.b16 %v568, %v560
        %v785 = vpack.c.b16 %v569, %v561
        %v786 = vpack.c.b16 %v578, %v570
        %v787 = vpack.c.b16 %v579, %v571
        %v788 = vpack.c.b16 %v580, %v572
        %v789 = vpack.c.b16 %v581, %v573
        %v790 = vpack.c.b16 %v582, %v574
        %v791 = vpack.c.b16 %v583, %v575
        %v792 = vpack.c.b16 %v584, %v576
        %v793 = vpack.c.b16 %v585, %v577
        %v794 = vpack.c.b16 %v594, %v586
        %v795 = vpack.c.b16 %v595, %v587
        %v796 = vpack.c.b16 %v596, %v588
        %v797 = vpack.c.b16 %v597, %v589
        %v798 = vpack.c.b16 %v598, %v590
        %v799 = vpack.c.b16 %v599, %v591
        %v800 = vpack.c.b16 %v600, %v592
        %v801 = vpack.c.b16 %v601, %v593
        %v802 = vpack.c.b16 %v610, %v602
        %v803 = vpack.c.b16 %v611, %v603
        %v804 = vpack.c.b16 %v612, %v604
        %v805 = vpack.c.b16 %v613, %v605
        %v806 = vpack.c.b16 %v614, %v606
        %v807 = vpack.c.b16 %v615, %v607
        %v808 = vpack.c.b16 %v616, %v608
        %v809 = vpack.c.b16 %v617, %v609
        %v810 = vpack.c.b16 %v626, %v618
        %v811 = vpack.c.b16 %v627, %v619
        %v812 = vpack.c.b16 %v628, %v620
        %v813 = vpack.c.b16 %v629, %v621
        %v814 = vpack.c.b16 %v630, %v622
        %v815 = vpack.c.b16 %v631, %v623
        %v816 = vpack.c.b16 %v632, %v624
        %v817 = vpack.c.b16 %v633, %v625
        %v818 = vpack.c.b16 %v642, %v634
        %v819 = vpack.c.b16 %v643, %v635
        %v820 = vpack.c.b16 %v644, %v636
        %v821 = vpack.c.b16 %v645, %v637
        %v822 = vpack.c.b16 %v646, %v638
        %v823 = vpack.c.b16 %v647, %v639
        %v824 = vpack.c.b16 %v648, %v640
        %v825 = vpack.c.b16 %v649, %v641
        %v826 = vpack.c.b16 %v658, %v650
        %v827 = vpack.c.b16 %v659, %v651
        %v828 = vpack.c.b16 %v660, %v652
        %v829 = vpack.c.b16 %v661, %v653
        %v830 = vpack.c.b16 %v662, %v654
        %v831 = vpack.c.b16 %v663, %v655
        %v832 = vpack.c.b16 %v664, %v656
        %v833 = vpack.c.b16 %v665, %v657
        %v834 = vpack.c.b16 %v674, %v666
        %v835 = vpack.c.b16 %v675, %v667
        %v836 = vpack.c.b16 %v676, %v668
        %v837 = vpack.c.b16 %v677, %v669
        %v838 = vpack.c.b16 %v678, %v670
        %v839 = vpack.c.b16 %v679, %v671
        %v840 = vpack.c.b16 %v680, %v672
        %v841 = vpack.c.b16 %v681, %v673
        %v842 = vpack.c.b16 %v690, %v682
        %v843 = vpack.c.b16 %v691, %v683
        %v844 = vpack.c.b16 %v692, %v684
        %v845 = vpack.c.b16 %v693, %v685
        %v846 = vpack.c.b16 %v694, %v686
        %v847 = vpack.c.b16 %v695, %v687
        %v848 = vpack.c.b16 %v696, %v688
        %v849 = vpack.c.b16 %v697, %v689
        %v850 = vpack.c.b16 %v706, %v698
        %v851 = vpack.c.b16 %v707, %v699
        %v852 = vpack.c.b16 %v708, %v700
        %v853 = vpack.c.b16 %v709, %v701
        %v854 = vpack.c.b16 %v710, %v702
        %v855 = vpack.c.b16 %v711, %v703
        %v856 = vpack.c.b16 %v712, %v704
        %v857 = vpack.c.b16 %v713, %v705
        %v858 = vpack.c.b16 %v722, %v714
        %v859 = vpack.c.b16 %v723, %v715
        %v860 = vpack.c.b16 %v724, %v716
        %v861 = vpack.c.b16 %v725, %v717
        %v862 = vpack.c.b16 %v726, %v718
        %v863 = vpack.c.b16 %v727, %v719
        %v864 = vpack.c.b16 %v728, %v720
        %v865 = vpack.c.b16 %v729, %v721
        %v866 = vpack.c.b16 %v738, %v730
        %v867 = vpack.c.b16 %v739, %v731
        %v868 = vpack.c.b16 %v740, %v732
        %v869 = vpack.c.b16 %v741, %v733
        %v870 = vpack.c.b16 %v742, %v734
        %v871 = vpack.c.b16 %v743, %v735
        %v872 = vpack.c.b16 %v744, %v736
        %v873 = vpack.c.b16 %v745, %v737
        %1002 = vmatprep.subr.bf16.mxu0 %v747
        %1003 = vmatpush1.bf16.msra.mxu0 %v746
        %1004 = vmatprep.subr.bf16.mxu0 %v755
        %1005 = vmatpush1.bf16.msra.mxu0 %v754
        %1006 = vmatprep.subr.bf16.mxu0 %v763
        %1007 = vmatpush1.bf16.msra.mxu0 %v762
        %1008 = vmatprep.subr.bf16.mxu0 %v771
        %1009 = vmatpush1.bf16.msra.mxu0 %v770
        %1010 = vmatprep.subr.bf16.mxu0 %v779
        %1011 = vmatpush1.bf16.msra.mxu0 %v778
        %1012 = vmatprep.subr.bf16.mxu0 %v787
        %1013 = vmatpush1.bf16.msra.mxu0 %v786
        %1014 = vmatprep.subr.bf16.mxu0 %v795
        %1015 = vmatpush1.bf16.msra.mxu0 %v794
        %1016 = vmatprep.subr.bf16.mxu0 %v803
        %1017 = vmatpush1.bf16.msra.mxu0 %v802
        %1018 = vmatprep.subr.bf16.mxu0 %v811
        %1019 = vmatpush1.bf16.msra.mxu0 %v810
        %1020 = vmatprep.subr.bf16.mxu0 %v819
        %1021 = vmatpush1.bf16.msra.mxu0 %v818
        %1022 = vmatprep.subr.bf16.mxu0 %v827
        %1023 = vmatpush1.bf16.msra.mxu0 %v826
        %1024 = vmatprep.subr.bf16.mxu0 %v835
        %1025 = vmatpush1.bf16.msra.mxu0 %v834
        %1026 = vmatprep.subr.bf16.mxu0 %v843
        %1027 = vmatpush1.bf16.msra.mxu0 %v842
        %1028 = vmatprep.subr.bf16.mxu0 %v851
        %1029 = vmatpush1.bf16.msra.mxu0 %v850
        %1030 = vmatprep.subr.bf16.mxu0 %v859
        %1031 = vmatpush1.bf16.msra.mxu0 %v858
        %1032 = vmatprep.subr.bf16.mxu0 %v867
        %1033 = vmatpush1.bf16.msra.mxu0 %v866
        %1034 = vmatprep.mubr.bf16.mxu0 %v359
        %1035 = vmatmul.mubr.bf16.gmra.mrb[0].mxu0 %v352
        %v1036 = vpop.f32.mrb[0].mxu0
        %v1037 = vadd.f32 0.0, %v1036
        %v1038 = vpop.f32.mrb[0].mxu0
        %v1039 = vadd.f32 0.0, %v1038
        %v1040 = vpop.f32.mrb[0].mxu0
        %v1041 = vpop.f32.mrb[0].mxu0
        %1042 = vdwg.mxu0
        %1043 = vmatprep.subr.bf16.mxu0 %v749
        %1044 = vmatpush1.bf16.msra.mxu0 %v748
        %1045 = vmatprep.subr.bf16.mxu0 %v757
        %1046 = vmatpush1.bf16.msra.mxu0 %v756
        %1047 = vmatprep.subr.bf16.mxu0 %v765
        %1048 = vmatpush1.bf16.msra.mxu0 %v764
        %1049 = vmatprep.subr.bf16.mxu0 %v773
        %1050 = vmatpush1.bf16.msra.mxu0 %v772
        %1051 = vmatprep.subr.bf16.mxu0 %v781
        %1052 = vmatpush1.bf16.msra.mxu0 %v780
        %1053 = vmatprep.subr.bf16.mxu0 %v789
        %1054 = vmatpush1.bf16.msra.mxu0 %v788
        %1055 = vmatprep.subr.bf16.mxu0 %v797
        %1056 = vmatpush1.bf16.msra.mxu0 %v796
        %1057 = vmatprep.subr.bf16.mxu0 %v805
        %1058 = vmatpush1.bf16.msra.mxu0 %v804
        %1059 = vmatprep.subr.bf16.mxu0 %v813
        %1060 = vmatpush1.bf16.msra.mxu0 %v812
        %1061 = vmatprep.subr.bf16.mxu0 %v821
        %1062 = vmatpush1.bf16.msra.mxu0 %v820
        %1063 = vmatprep.subr.bf16.mxu0 %v829
        %1064 = vmatpush1.bf16.msra.mxu0 %v828
        %1065 = vmatprep.subr.bf16.mxu0 %v837
        %1066 = vmatpush1.bf16.msra.mxu0 %v836
        %1067 = vmatprep.subr.bf16.mxu0 %v845
        %1068 = vmatpush1.bf16.msra.mxu0 %v844
        %1069 = vmatprep.subr.bf16.mxu0 %v853
        %1070 = vmatpush1.bf16.msra.mxu0 %v852
        %1071 = vmatprep.subr.bf16.mxu0 %v861
        %1072 = vmatpush1.bf16.msra.mxu0 %v860
        %1073 = vmatprep.subr.bf16.mxu0 %v869
        %1074 = vmatpush1.bf16.msra.mxu0 %v868
        %1075 = vmatprep.mubr.bf16.mxu0 %v359
        %1076 = vmatmul.mubr.bf16.gmra.mrb[0].mxu0 %v352
        %v1077 = vpop.f32.mrb[0].mxu0
        %v1078 = vadd.f32 0.0, %v1077
        %v1079 = vpop.f32.mrb[0].mxu0
        %v1080 = vadd.f32 0.0, %v1079
        %v1081 = vpop.f32.mrb[0].mxu0
        %v1082 = vpop.f32.mrb[0].mxu0
        %1083 = vdwg.mxu0
        %1084 = vmatprep.subr.bf16.mxu0 %v751
        %1085 = vmatpush1.bf16.msra.mxu0 %v750
        %1086 = vmatprep.subr.bf16.mxu0 %v759
        %1087 = vmatpush1.bf16.msra.mxu0 %v758
        %1088 = vmatprep.subr.bf16.mxu0 %v767
        %1089 = vmatpush1.bf16.msra.mxu0 %v766
        %1090 = vmatprep.subr.bf16.mxu0 %v775
        %1091 = vmatpush1.bf16.msra.mxu0 %v774
        %1092 = vmatprep.subr.bf16.mxu0 %v783
        %1093 = vmatpush1.bf16.msra.mxu0 %v782
        %1094 = vmatprep.subr.bf16.mxu0 %v791
        %1095 = vmatpush1.bf16.msra.mxu0 %v790
        %1096 = vmatprep.subr.bf16.mxu0 %v799
        %1097 = vmatpush1.bf16.msra.mxu0 %v798
        %1098 = vmatprep.subr.bf16.mxu0 %v807
        %1099 = vmatpush1.bf16.msra.mxu0 %v806
        %1100 = vmatprep.subr.bf16.mxu0 %v815
        %1101 = vmatpush1.bf16.msra.mxu0 %v814
        %1102 = vmatprep.subr.bf16.mxu0 %v823
        %1103 = vmatpush1.bf16.msra.mxu0 %v822
        %1104 = vmatprep.subr.bf16.mxu0 %v831
        %1105 = vmatpush1.bf16.msra.mxu0 %v830
        %1106 = vmatprep.subr.bf16.mxu0 %v839
        %1107 = vmatpush1.bf16.msra.mxu0 %v838
        %1108 = vmatprep.subr.bf16.mxu0 %v847
        %1109 = vmatpush1.bf16.msra.mxu0 %v846
        %1110 = vmatprep.subr.bf16.mxu0 %v855
        %1111 = vmatpush1.bf16.msra.mxu0 %v854
        %1112 = vmatprep.subr.bf16.mxu0 %v863
        %1113 = vmatpush1.bf16.msra.mxu0 %v862
        %1114 = vmatprep.subr.bf16.mxu0 %v871
        %1115 = vmatpush1.bf16.msra.mxu0 %v870
        %1116 = vmatprep.mubr.bf16.mxu0 %v359
        %1117 = vmatmul.mubr.bf16.gmra.mrb[0].mxu0 %v352
        %v1118 = vpop.f32.mrb[0].mxu0
        %v1119 = vadd.f32 0.0, %v1118
        %v1120 = vpop.f32.mrb[0].mxu0
        %v1121 = vadd.f32 0.0, %v1120
        %v1122 = vpop.f32.mrb[0].mxu0
        %v1123 = vpop.f32.mrb[0].mxu0
        %1124 = vdwg.mxu0
        %1125 = vmatprep.subr.bf16.mxu0 %v753
        %1126 = vmatpush1.bf16.msra.mxu0 %v752
        %1127 = vmatprep.subr.bf16.mxu0 %v761
        %1128 = vmatpush1.bf16.msra.mxu0 %v760
        %1129 = vmatprep.subr.bf16.mxu0 %v769
        %1130 = vmatpush1.bf16.msra.mxu0 %v768
        %1131 = vmatprep.subr.bf16.mxu0 %v777
        %1132 = vmatpush1.bf16.msra.mxu0 %v776
        %1133 = vmatprep.subr.bf16.mxu0 %v785
        %1134 = vmatpush1.bf16.msra.mxu0 %v784
        %1135 = vmatprep.subr.bf16.mxu0 %v793
        %1136 = vmatpush1.bf16.msra.mxu0 %v792
        %1137 = vmatprep.subr.bf16.mxu0 %v801
        %1138 = vmatpush1.bf16.msra.mxu0 %v800
        %1139 = vmatprep.subr.bf16.mxu0 %v809
        %1140 = vmatpush1.bf16.msra.mxu0 %v808
        %1141 = vmatprep.subr.bf16.mxu0 %v817
        %1142 = vmatpush1.bf16.msra.mxu0 %v816
        %1143 = vmatprep.subr.bf16.mxu0 %v825
        %1144 = vmatpush1.bf16.msra.mxu0 %v824
        %1145 = vmatprep.subr.bf16.mxu0 %v833
        %1146 = vmatpush1.bf16.msra.mxu0 %v832
        %1147 = vmatprep.subr.bf16.mxu0 %v841
        %1148 = vmatpush1.bf16.msra.mxu0 %v840
        %1149 = vmatprep.subr.bf16.mxu0 %v849
        %1150 = vmatpush1.bf16.msra.mxu0 %v848
        %1151 = vmatprep.subr.bf16.mxu0 %v857
        %1152 = vmatpush1.bf16.msra.mxu0 %v856
        %1153 = vmatprep.subr.bf16.mxu0 %v865
        %1154 = vmatpush1.bf16.msra.mxu0 %v864
        %1155 = vmatprep.subr.bf16.mxu0 %v873
        %1156 = vmatpush1.bf16.msra.mxu0 %v872
        %1157 = vmatprep.mubr.bf16.mxu0 %v359
        %1158 = vmatmul.mubr.bf16.gmra.mrb[0].mxu0 %v352
        %v1159 = vpop.f32.mrb[0].mxu0
        %v1160 = vadd.f32 0.0, %v1159
        %v1161 = vpop.f32.mrb[0].mxu0
        %v1162 = vadd.f32 0.0, %v1161
        %v1163 = vpop.f32.mrb[0].mxu0
        %v1164 = vpop.f32.mrb[0].mxu0
        %1165 = vdwg.mxu0
        %v1166 = vadd.f32 %v1119, 1e-06
        %v1167 = vadd.f32 %v1121, 1e-06
        %v1168 = vrcp.pop %v1166
        %v1169 = vmul.f32 %v1037, %v1168
        %v1170 = vrcp.pop %v1167
        %v1171 = vmul.f32 %v1039, %v1170
        %v1172 = vmul.f32 %v1169, 6.2831855
        %v1173 = vmul.f32 %v1171, 6.2831855
        %v1174 = vadd.f32 %v1160, 1e-06
        %v1175 = vadd.f32 %v1162, 1e-06
        %v1176 = vrcp.pop %v1174
        %v1177 = vmul.f32 %v1078, %v1176
        %v1178 = vrcp.pop %v1175
        %v1179 = vmul.f32 %v1080, %v1178
        %v1180 = vmul.f32 %v1177, 6.2831855
        %v1181 = vmul.f32 %v1179, 6.2831855
        %v1182 = vld [vmem:[%s2] sm:$0xff]
        %v1183 = vld [vmem:[%s2 + $0x8] sm:$0xff]
        %v1184 = vld [vmem:[%s2 + $0x10] sm:$0xff]
        %v1185 = vld [vmem:[%s2 + $0x18] sm:$0xff]
        %v1186 = vld [vmem:[%s2 + $0x20] sm:$0xff]
        %v1187 = vld [vmem:[%s2 + $0x28] sm:$0xff]
        %v1188 = vld [vmem:[%s2 + $0x30] sm:$0xff]
        %v1189 = vld [vmem:[%s2 + $0x38] sm:$0xff]
        %v1190 = vld [vmem:[%s3] sm:$0xff]
        %v1191 = vld [vmem:[%s3 + $0x8] sm:$0xff]
        %v1192 = vld [vmem:[%s3 + $0x10] sm:$0xff]
        %v1193 = vld [vmem:[%s3 + $0x18] sm:$0xff]
        %v1194 = vld [vmem:[%s3 + $0x20] sm:$0xff]
        %v1195 = vld [vmem:[%s3 + $0x28] sm:$0xff]
        %v1196 = vld [vmem:[%s3 + $0x30] sm:$0xff]
        %v1197 = vld [vmem:[%s3 + $0x38] sm:$0xff]
        %v1198 = vlaneseq
        %v1199 = vshrl.u32 %v1198, 7
        %v1200 = vsub.s32 0, %v1199
        %v1201 = vrot.slane %v1172, %v1200
        %v1202 = vlaneseq
        %v1203 = vshrl.u32 %v1202, 7
        %v1204 = vsub.s32 0, %v1203
        %v1205 = vrot.slane %v1173, %v1204
        %1207 = vset.pattern.permute.xlu0 0
        %1208 = vperm.xlu0 %1207, %v1182
        %v1209 = vpop.permute.xlu0 %1208
        %1212 = vset.pattern.permute.xlu0 0
        %1213 = vperm.xlu0 %1212, %v1183
        %v1214 = vpop.permute.xlu0 %1213
        %1217 = vset.pattern.permute.xlu0 0
        %1218 = vperm.xlu0 %1217, %v1184
        %v1219 = vpop.permute.xlu0 %1218
        %1222 = vset.pattern.permute.xlu0 0
        %1223 = vperm.xlu0 %1222, %v1185
        %v1224 = vpop.permute.xlu0 %1223
        %1227 = vset.pattern.permute.xlu0 0
        %1228 = vperm.xlu0 %1227, %v1186
        %v1229 = vpop.permute.xlu0 %1228
        %1232 = vset.pattern.permute.xlu0 0
        %1233 = vperm.xlu0 %1232, %v1187
        %v1234 = vpop.permute.xlu0 %1233
        %1237 = vset.pattern.permute.xlu0 0
        %1238 = vperm.xlu0 %1237, %v1188
        %v1239 = vpop.permute.xlu0 %1238
        %1242 = vset.pattern.permute.xlu0 0
        %1243 = vperm.xlu0 %1242, %v1189
        %v1244 = vpop.permute.xlu0 %1243
        %v1246 = vmul.f32 %v1201, %v1209
        %v1247 = vmul.f32 %v1205, %v1209
        %v1248 = vmul.f32 %v1201, %v1214
        %v1249 = vmul.f32 %v1205, %v1214
        %v1250 = vmul.f32 %v1201, %v1219
        %v1251 = vmul.f32 %v1205, %v1219
        %v1252 = vmul.f32 %v1201, %v1224
        %v1253 = vmul.f32 %v1205, %v1224
        %v1254 = vmul.f32 %v1201, %v1229
        %v1255 = vmul.f32 %v1205, %v1229
        %v1256 = vmul.f32 %v1201, %v1234
        %v1257 = vmul.f32 %v1205, %v1234
        %v1258 = vmul.f32 %v1201, %v1239
        %v1259 = vmul.f32 %v1205, %v1239
        %v1260 = vmul.f32 %v1201, %v1244
        %v1261 = vmul.f32 %v1205, %v1244
        %1263 = vset.pattern.permute.xlu0 0
        %1264 = vperm.xlu0 %1263, %v1190
        %v1265 = vpop.permute.xlu0 %1264
        %1268 = vset.pattern.permute.xlu0 0
        %1269 = vperm.xlu0 %1268, %v1191
        %v1270 = vpop.permute.xlu0 %1269
        %1273 = vset.pattern.permute.xlu0 0
        %1274 = vperm.xlu0 %1273, %v1192
        %v1275 = vpop.permute.xlu0 %1274
        %1278 = vset.pattern.permute.xlu0 0
        %1279 = vperm.xlu0 %1278, %v1193
        %v1280 = vpop.permute.xlu0 %1279
        %1283 = vset.pattern.permute.xlu0 0
        %1284 = vperm.xlu0 %1283, %v1194
        %v1285 = vpop.permute.xlu0 %1284
        %1288 = vset.pattern.permute.xlu0 0
        %1289 = vperm.xlu0 %1288, %v1195
        %v1290 = vpop.permute.xlu0 %1289
        %1293 = vset.pattern.permute.xlu0 0
        %1294 = vperm.xlu0 %1293, %v1196
        %v1295 = vpop.permute.xlu0 %1294
        %1298 = vset.pattern.permute.xlu0 0
        %1299 = vperm.xlu0 %1298, %v1197
        %v1300 = vpop.permute.xlu0 %1299
        %v1302 = vadd.f32 %v1246, %v1265
        %v1303 = vadd.f32 %v1247, %v1265
        %v1304 = vadd.f32 %v1248, %v1270
        %v1305 = vadd.f32 %v1249, %v1270
        %v1306 = vadd.f32 %v1250, %v1275
        %v1307 = vadd.f32 %v1251, %v1275
        %v1308 = vadd.f32 %v1252, %v1280
        %v1309 = vadd.f32 %v1253, %v1280
        %v1310 = vadd.f32 %v1254, %v1285
        %v1311 = vadd.f32 %v1255, %v1285
        %v1312 = vadd.f32 %v1256, %v1290
        %v1313 = vadd.f32 %v1257, %v1290
        %v1314 = vadd.f32 %v1258, %v1295
        %v1315 = vadd.f32 %v1259, %v1295
        %v1316 = vadd.f32 %v1260, %v1300
        %v1317 = vadd.f32 %v1261, %v1300
        %v1318 = vand.u32 2147483647, %v1302
        %vm1319 = vcmp.le.f32.partialorder %v1318, 0.7853982
        %vm1320 = vcmp.lt.s32.totalorder %v1302, 0
        %v1321 = vand.u32 %v1302, 2139095040
        %v1322 = vshrl.u32 %v1321, 23
        %v1323 = vsub.s32 %v1322, 127
        %v1324 = vand.u32 2147483647, %v1302
        %v1325 = vand.u32 %v1324, 8388607
        %v1326 = vor.u32 %v1325, 8388608
        %v1327 = vsub.s32 0, %v1326
        %v1328 = vadd.s32 %v1323, 1
        %vm1329 = vcmp.gt.s32.totalorder %v1328, 0
        %v1330 = vsel %vm1329, %v1328, 0
        %v1331 = vshrl.u32 %v1330, 5
        %v1332 = vand.u32 %v1330, 31
        %v1333 = vsub.s32 32, %v1332
        %v1334 = vshrl.u32 683565275, %v1333
        %v1335 = vshll.u32 683565275, %v1332
        %v1336 = vshrl.u32 2475754826, %v1333
        %v1337 = vor.u32 %v1335, %v1336
        %v1338 = vshll.u32 2475754826, %v1332
        %v1339 = vshrl.u32 2131351028, %v1333
        %v1340 = vor.u32 %v1338, %v1339
        %v1341 = vshll.u32 2131351028, %v1332
        %v1342 = vshrl.u32 2102212464, %v1333
        %v1343 = vor.u32 %v1341, %v1342
        %v1344 = vshll.u32 2102212464, %v1332
        %v1345 = vshrl.u32 920167782, %v1333
        %v1346 = vor.u32 %v1344, %v1345
        %v1347 = vshll.u32 920167782, %v1332
        %v1348 = vshrl.u32 1326507024, %v1333
        %v1349 = vor.u32 %v1347, %v1348
        %vm1350 = vcmp.lt.s32.totalorder %v1331, 1
        %vm1351 = vcmp.lt.s32.totalorder %v1331, 2
        %vm1352 = vcmp.lt.s32.totalorder %v1331, 3
        %vm1353 = vcmp.lt.s32.totalorder %v1331, 4
        %v1354 = vsel %vm1350, %v1334, %v1337
        %v1355 = vsel %vm1353, %v1343, 2102212464
        %v1356 = vsel %vm1352, %v1340, %v1355
        %v1357 = vsel %vm1351, %v1354, %v1356
        %v1358 = vsel %vm1350, %v1337, %v1340
        %v1359 = vsel %vm1353, %v1346, 920167782
        %v1360 = vsel %vm1352, %v1343, %v1359
        %v1361 = vsel %vm1351, %v1358, %v1360
        %v1362 = vsel %vm1350, %v1340, %v1343
        %v1363 = vsel %vm1353, %v1349, 1326507024
        %v1364 = vsel %vm1352, %v1346, %v1363
        %v1365 = vsel %vm1351, %v1362, %v1364
        %v1366 = vshll.u32 %v1326, 8
        %v1367 = vmul.u32.u64.compose %v1366, %v1365
        %v1368 = vextract.low.u32 %v1367
        %v1369 = vextract.high.u32 %v1367
        %v1370 = vmul.u32.u64.compose %v1366, %v1361
        %v1371 = vextract.low.u32 %v1370
        %v1372 = vextract.high.u32 %v1370
        %v1373 = vmul.u32 %v1366, %v1357
        %v1374 = vadd.s32 %v1369, %v1371
        %vm1375 = vc.u32 %v1369, %v1371
        %v1376 = vadd.s32 %v1372, 1
        %v1377 = vsel %vm1375, %v1376, %v1372
        %v1378 = vadd.s32 %v1373, %v1377
        %v1379 = vadd.s32 %v1378, 536870912
        %v1380 = vshrl.u32 %v1379, 30
        %v1381 = vshll.u32 %v1380, 30
        %v1382 = vsub.s32 %v1378, %v1381
        %vm1383 = vcmp.lt.s32.totalorder %v1382, 0
        %v1384 = vsub.s32 0, %v1382
        %v1385 = vsel %vm1383, %v1384, %v1382
        %v1386 = vclz %v1385
        %v1387 = vsub.s32 %v1386, 2
        %vm1388 = vcmp.gt.s32.totalorder 0, %v1387
        %v1389 = vsel %vm1388, 0, %v1387
        %v1390 = vsub.s32 32, %v1389
        %v1391 = vshll.u32 %v1382, %v1389
        %v1392 = vshrl.u32 %v1374, %v1390
        %v1393 = vor.u32 %v1391, %v1392
        %v1394 = vsub.s32 4294967266, %v1389
        %v1395 = vadd.s32 %v1394, 127
        %v1396 = vshll.u32 %v1395, 23
        %v1397 = vor.u32 4788187, %v1396
        %v1398 = vand.u32 2147483647, %v1397
        %v1400 = vcvt.s32.f32 %v1393
        %v1401 = vmul.f32 %v1400, %v1398
        %v1402 = vxor.u32 %v1401, 2147483648
        %v1403 = vsel %vm1320, %v1402, %v1401
        %v1404 = vsub.s32 4, %v1380
        %v1405 = vsel %vm1320, %v1404, %v1380
        %v1406 = vsel %vm1319, %v1302, %v1403
        %v1407 = vsel %vm1319, 0, %v1405
        %v1408 = vcosq.f32.pop %v1406
        %v1409 = vsinq.f32.pop %v1406
        %vm1410 = vweird.f32 %v1302
        %v1411 = vadd.s32 %v1407, 3
        %v1412 = vand.u32 %v1411, 3
        %vm1413 = vcmp.lt.s32.totalorder %v1412, 2
        %vm1414 = vcmp.eq.s32.totalorder %v1412, 0
        %v1415 = vxor.u32 %v1409, 2147483648
        %v1416 = vsel %vm1414, %v1408, %v1415
        %vm1417 = vcmp.eq.s32.totalorder %v1412, 2
        %v1418 = vxor.u32 %v1408, 2147483648
        %v1419 = vsel %vm1417, %v1418, %v1409
        %v1420 = vsel %vm1413, %v1416, %v1419
        %v1421 = vsel %vm1410, nan, %v1420
        %v1422 = vand.u32 2147483647, %v1303
        %vm1423 = vcmp.le.f32.partialorder %v1422, 0.7853982
        %vm1424 = vcmp.lt.s32.totalorder %v1303, 0
        %v1425 = vand.u32 %v1303, 2139095040
        %v1426 = vshrl.u32 %v1425, 23
        %v1427 = vsub.s32 %v1426, 127
        %v1428 = vand.u32 2147483647, %v1303
        %v1429 = vand.u32 %v1428, 8388607
        %v1430 = vor.u32 %v1429, 8388608
        %v1431 = vsub.s32 0, %v1430
        %v1432 = vadd.s32 %v1427, 1
        %vm1433 = vcmp.gt.s32.totalorder %v1432, 0
        %v1434 = vsel %vm1433, %v1432, 0
        %v1435 = vshrl.u32 %v1434, 5
        %v1436 = vand.u32 %v1434, 31
        %v1437 = vsub.s32 32, %v1436
        %v1438 = vshrl.u32 683565275, %v1437
        %v1439 = vshll.u32 683565275, %v1436
        %v1440 = vshrl.u32 2475754826, %v1437
        %v1441 = vor.u32 %v1439, %v1440
        %v1442 = vshll.u32 2475754826, %v1436
        %v1443 = vshrl.u32 2131351028, %v1437
        %v1444 = vor.u32 %v1442, %v1443
        %v1445 = vshll.u32 2131351028, %v1436
        %v1446 = vshrl.u32 2102212464, %v1437
        %v1447 = vor.u32 %v1445, %v1446
        %v1448 = vshll.u32 2102212464, %v1436
        %v1449 = vshrl.u32 920167782, %v1437
        %v1450 = vor.u32 %v1448, %v1449
        %v1451 = vshll.u32 920167782, %v1436
        %v1452 = vshrl.u32 1326507024, %v1437
        %v1453 = vor.u32 %v1451, %v1452
        %vm1454 = vcmp.lt.s32.totalorder %v1435, 1
        %vm1455 = vcmp.lt.s32.totalorder %v1435, 2
        %vm1456 = vcmp.lt.s32.totalorder %v1435, 3
        %vm1457 = vcmp.lt.s32.totalorder %v1435, 4
        %v1458 = vsel %vm1454, %v1438, %v1441
        %v1459 = vsel %vm1457, %v1447, 2102212464
        %v1460 = vsel %vm1456, %v1444, %v1459
        %v1461 = vsel %vm1455, %v1458, %v1460
        %v1462 = vsel %vm1454, %v1441, %v1444
        %v1463 = vsel %vm1457, %v1450, 920167782
        %v1464 = vsel %vm1456, %v1447, %v1463
        %v1465 = vsel %vm1455, %v1462, %v1464
        %v1466 = vsel %vm1454, %v1444, %v1447
        %v1467 = vsel %vm1457, %v1453, 1326507024
        %v1468 = vsel %vm1456, %v1450, %v1467
        %v1469 = vsel %vm1455, %v1466, %v1468
        %v1470 = vshll.u32 %v1430, 8
        %v1471 = vmul.u32.u64.compose %v1470, %v1469
        %v1472 = vextract.low.u32 %v1471
        %v1473 = vextract.high.u32 %v1471
        %v1474 = vmul.u32.u64.compose %v1470, %v1465
        %v1475 = vextract.low.u32 %v1474
        %v1476 = vextract.high.u32 %v1474
        %v1477 = vmul.u32 %v1470, %v1461
        %v1478 = vadd.s32 %v1473, %v1475
        %vm1479 = vc.u32 %v1473, %v1475
        %v1480 = vadd.s32 %v1476, 1
        %v1481 = vsel %vm1479, %v1480, %v1476
        %v1482 = vadd.s32 %v1477, %v1481
        %v1483 = vadd.s32 %v1482, 536870912
        %v1484 = vshrl.u32 %v1483, 30
        %v1485 = vshll.u32 %v1484, 30
        %v1486 = vsub.s32 %v1482, %v1485
        %vm1487 = vcmp.lt.s32.totalorder %v1486, 0
        %v1488 = vsub.s32 0, %v1486
        %v1489 = vsel %vm1487, %v1488, %v1486
        %v1490 = vclz %v1489
        %v1491 = vsub.s32 %v1490, 2
        %vm1492 = vcmp.gt.s32.totalorder 0, %v1491
        %v1493 = vsel %vm1492, 0, %v1491
        %v1494 = vsub.s32 32, %v1493
        %v1495 = vshll.u32 %v1486, %v1493
        %v1496 = vshrl.u32 %v1478, %v1494
        %v1497 = vor.u32 %v1495, %v1496
        %v1498 = vsub.s32 4294967266, %v1493
        %v1499 = vadd.s32 %v1498, 127
        %v1500 = vshll.u32 %v1499, 23
        %v1501 = vor.u32 4788187, %v1500
        %v1502 = vand.u32 2147483647, %v1501
        %v1504 = vcvt.s32.f32 %v1497
        %v1505 = vmul.f32 %v1504, %v1502
        %v1506 = vxor.u32 %v1505, 2147483648
        %v1507 = vsel %vm1424, %v1506, %v1505
        %v1508 = vsub.s32 4, %v1484
        %v1509 = vsel %vm1424, %v1508, %v1484
        %v1510 = vsel %vm1423, %v1303, %v1507
        %v1511 = vsel %vm1423, 0, %v1509
        %v1512 = vcosq.f32.pop %v1510
        %v1513 = vsinq.f32.pop %v1510
        %vm1514 = vweird.f32 %v1303
        %v1515 = vadd.s32 %v1511, 3
        %v1516 = vand.u32 %v1515, 3
        %vm1517 = vcmp.lt.s32.totalorder %v1516, 2
        %vm1518 = vcmp.eq.s32.totalorder %v1516, 0
        %v1519 = vxor.u32 %v1513, 2147483648
        %v1520 = vsel %vm1518, %v1512, %v1519
        %vm1521 = vcmp.eq.s32.totalorder %v1516, 2
        %v1522 = vxor.u32 %v1512, 2147483648
        %v1523 = vsel %vm1521, %v1522, %v1513
        %v1524 = vsel %vm1517, %v1520, %v1523
        %v1525 = vsel %vm1514, nan, %v1524
        %v1526 = vand.u32 2147483647, %v1304
        %vm1527 = vcmp.le.f32.partialorder %v1526, 0.7853982
        %vm1528 = vcmp.lt.s32.totalorder %v1304, 0
        %v1529 = vand.u32 %v1304, 2139095040
        %v1530 = vshrl.u32 %v1529, 23
        %v1531 = vsub.s32 %v1530, 127
        %v1532 = vand.u32 2147483647, %v1304
        %v1533 = vand.u32 %v1532, 8388607
        %v1534 = vor.u32 %v1533, 8388608
        %v1535 = vsub.s32 0, %v1534
        %v1536 = vadd.s32 %v1531, 1
        %vm1537 = vcmp.gt.s32.totalorder %v1536, 0
        %v1538 = vsel %vm1537, %v1536, 0
        %v1539 = vshrl.u32 %v1538, 5
        %v1540 = vand.u32 %v1538, 31
        %v1541 = vsub.s32 32, %v1540
        %v1542 = vshrl.u32 683565275, %v1541
        %v1543 = vshll.u32 683565275, %v1540
        %v1544 = vshrl.u32 2475754826, %v1541
        %v1545 = vor.u32 %v1543, %v1544
        %v1546 = vshll.u32 2475754826, %v1540
        %v1547 = vshrl.u32 2131351028, %v1541
        %v1548 = vor.u32 %v1546, %v1547
        %v1549 = vshll.u32 2131351028, %v1540
        %v1550 = vshrl.u32 2102212464, %v1541
        %v1551 = vor.u32 %v1549, %v1550
        %v1552 = vshll.u32 2102212464, %v1540
        %v1553 = vshrl.u32 920167782, %v1541
        %v1554 = vor.u32 %v1552, %v1553
        %v1555 = vshll.u32 920167782, %v1540
        %v1556 = vshrl.u32 1326507024, %v1541
        %v1557 = vor.u32 %v1555, %v1556
        %vm1558 = vcmp.lt.s32.totalorder %v1539, 1
        %vm1559 = vcmp.lt.s32.totalorder %v1539, 2
        %vm1560 = vcmp.lt.s32.totalorder %v1539, 3
        %vm1561 = vcmp.lt.s32.totalorder %v1539, 4
        %v1562 = vsel %vm1558, %v1542, %v1545
        %v1563 = vsel %vm1561, %v1551, 2102212464
        %v1564 = vsel %vm1560, %v1548, %v1563
        %v1565 = vsel %vm1559, %v1562, %v1564
        %v1566 = vsel %vm1558, %v1545, %v1548
        %v1567 = vsel %vm1561, %v1554, 920167782
        %v1568 = vsel %vm1560, %v1551, %v1567
        %v1569 = vsel %vm1559, %v1566, %v1568
        %v1570 = vsel %vm1558, %v1548, %v1551
        %v1571 = vsel %vm1561, %v1557, 1326507024
        %v1572 = vsel %vm1560, %v1554, %v1571
        %v1573 = vsel %vm1559, %v1570, %v1572
        %v1574 = vshll.u32 %v1534, 8
        %v1575 = vmul.u32.u64.compose %v1574, %v1573
        %v1576 = vextract.low.u32 %v1575
        %v1577 = vextract.high.u32 %v1575
        %v1578 = vmul.u32.u64.compose %v1574, %v1569
        %v1579 = vextract.low.u32 %v1578
        %v1580 = vextract.high.u32 %v1578
        %v1581 = vmul.u32 %v1574, %v1565
        %v1582 = vadd.s32 %v1577, %v1579
        %vm1583 = vc.u32 %v1577, %v1579
        %v1584 = vadd.s32 %v1580, 1
        %v1585 = vsel %vm1583, %v1584, %v1580
        %v1586 = vadd.s32 %v1581, %v1585
        %v1587 = vadd.s32 %v1586, 536870912
        %v1588 = vshrl.u32 %v1587, 30
        %v1589 = vshll.u32 %v1588, 30
        %v1590 = vsub.s32 %v1586, %v1589
        %vm1591 = vcmp.lt.s32.totalorder %v1590, 0
        %v1592 = vsub.s32 0, %v1590
        %v1593 = vsel %vm1591, %v1592, %v1590
        %v1594 = vclz %v1593
        %v1595 = vsub.s32 %v1594, 2
        %vm1596 = vcmp.gt.s32.totalorder 0, %v1595
        %v1597 = vsel %vm1596, 0, %v1595
        %v1598 = vsub.s32 32, %v1597
        %v1599 = vshll.u32 %v1590, %v1597
        %v1600 = vshrl.u32 %v1582, %v1598
        %v1601 = vor.u32 %v1599, %v1600
        %v1602 = vsub.s32 4294967266, %v1597
        %v1603 = vadd.s32 %v1602, 127
        %v1604 = vshll.u32 %v1603, 23
        %v1605 = vor.u32 4788187, %v1604
        %v1606 = vand.u32 2147483647, %v1605
        %v1608 = vcvt.s32.f32 %v1601
        %v1609 = vmul.f32 %v1608, %v1606
        %v1610 = vxor.u32 %v1609, 2147483648
        %v1611 = vsel %vm1528, %v1610, %v1609
        %v1612 = vsub.s32 4, %v1588
        %v1613 = vsel %vm1528, %v1612, %v1588
        %v1614 = vsel %vm1527, %v1304, %v1611
        %v1615 = vsel %vm1527, 0, %v1613
        %v1616 = vcosq.f32.pop %v1614
        %v1617 = vsinq.f32.pop %v1614
        %vm1618 = vweird.f32 %v1304
        %v1619 = vadd.s32 %v1615, 3
        %v1620 = vand.u32 %v1619, 3
        %vm1621 = vcmp.lt.s32.totalorder %v1620, 2
        %vm1622 = vcmp.eq.s32.totalorder %v1620, 0
        %v1623 = vxor.u32 %v1617, 2147483648
        %v1624 = vsel %vm1622, %v1616, %v1623
        %vm1625 = vcmp.eq.s32.totalorder %v1620, 2
        %v1626 = vxor.u32 %v1616, 2147483648
        %v1627 = vsel %vm1625, %v1626, %v1617
        %v1628 = vsel %vm1621, %v1624, %v1627
        %v1629 = vsel %vm1618, nan, %v1628
        %v1630 = vand.u32 2147483647, %v1305
        %vm1631 = vcmp.le.f32.partialorder %v1630, 0.7853982
        %vm1632 = vcmp.lt.s32.totalorder %v1305, 0
        %v1633 = vand.u32 %v1305, 2139095040
        %v1634 = vshrl.u32 %v1633, 23
        %v1635 = vsub.s32 %v1634, 127
        %v1636 = vand.u32 2147483647, %v1305
        %v1637 = vand.u32 %v1636, 8388607
        %v1638 = vor.u32 %v1637, 8388608
        %v1639 = vsub.s32 0, %v1638
        %v1640 = vadd.s32 %v1635, 1
        %vm1641 = vcmp.gt.s32.totalorder %v1640, 0
        %v1642 = vsel %vm1641, %v1640, 0
        %v1643 = vshrl.u32 %v1642, 5
        %v1644 = vand.u32 %v1642, 31
        %v1645 = vsub.s32 32, %v1644
        %v1646 = vshrl.u32 683565275, %v1645
        %v1647 = vshll.u32 683565275, %v1644
        %v1648 = vshrl.u32 2475754826, %v1645
        %v1649 = vor.u32 %v1647, %v1648
        %v1650 = vshll.u32 2475754826, %v1644
        %v1651 = vshrl.u32 2131351028, %v1645
        %v1652 = vor.u32 %v1650, %v1651
        %v1653 = vshll.u32 2131351028, %v1644
        %v1654 = vshrl.u32 2102212464, %v1645
        %v1655 = vor.u32 %v1653, %v1654
        %v1656 = vshll.u32 2102212464, %v1644
        %v1657 = vshrl.u32 920167782, %v1645
        %v1658 = vor.u32 %v1656, %v1657
        %v1659 = vshll.u32 920167782, %v1644
        %v1660 = vshrl.u32 1326507024, %v1645
        %v1661 = vor.u32 %v1659, %v1660
        %vm1662 = vcmp.lt.s32.totalorder %v1643, 1
        %vm1663 = vcmp.lt.s32.totalorder %v1643, 2
        %vm1664 = vcmp.lt.s32.totalorder %v1643, 3
        %vm1665 = vcmp.lt.s32.totalorder %v1643, 4
        %v1666 = vsel %vm1662, %v1646, %v1649
        %v1667 = vsel %vm1665, %v1655, 2102212464
        %v1668 = vsel %vm1664, %v1652, %v1667
        %v1669 = vsel %vm1663, %v1666, %v1668
        %v1670 = vsel %vm1662, %v1649, %v1652
        %v1671 = vsel %vm1665, %v1658, 920167782
        %v1672 = vsel %vm1664, %v1655, %v1671
        %v1673 = vsel %vm1663, %v1670, %v1672
        %v1674 = vsel %vm1662, %v1652, %v1655
        %v1675 = vsel %vm1665, %v1661, 1326507024
        %v1676 = vsel %vm1664, %v1658, %v1675
        %v1677 = vsel %vm1663, %v1674, %v1676
        %v1678 = vshll.u32 %v1638, 8
        %v1679 = vmul.u32.u64.compose %v1678, %v1677
        %v1680 = vextract.low.u32 %v1679
        %v1681 = vextract.high.u32 %v1679
        %v1682 = vmul.u32.u64.compose %v1678, %v1673
        %v1683 = vextract.low.u32 %v1682
        %v1684 = vextract.high.u32 %v1682
        %v1685 = vmul.u32 %v1678, %v1669
        %v1686 = vadd.s32 %v1681, %v1683
        %vm1687 = vc.u32 %v1681, %v1683
        %v1688 = vadd.s32 %v1684, 1
        %v1689 = vsel %vm1687, %v1688, %v1684
        %v1690 = vadd.s32 %v1685, %v1689
        %v1691 = vadd.s32 %v1690, 536870912
        %v1692 = vshrl.u32 %v1691, 30
        %v1693 = vshll.u32 %v1692, 30
        %v1694 = vsub.s32 %v1690, %v1693
        %vm1695 = vcmp.lt.s32.totalorder %v1694, 0
        %v1696 = vsub.s32 0, %v1694
        %v1697 = vsel %vm1695, %v1696, %v1694
        %v1698 = vclz %v1697
        %v1699 = vsub.s32 %v1698, 2
        %vm1700 = vcmp.gt.s32.totalorder 0, %v1699
        %v1701 = vsel %vm1700, 0, %v1699
        %v1702 = vsub.s32 32, %v1701
        %v1703 = vshll.u32 %v1694, %v1701
        %v1704 = vshrl.u32 %v1686, %v1702
        %v1705 = vor.u32 %v1703, %v1704
        %v1706 = vsub.s32 4294967266, %v1701
        %v1707 = vadd.s32 %v1706, 127
        %v1708 = vshll.u32 %v1707, 23
        %v1709 = vor.u32 4788187, %v1708
        %v1710 = vand.u32 2147483647, %v1709
        %v1712 = vcvt.s32.f32 %v1705
        %v1713 = vmul.f32 %v1712, %v1710
        %v1714 = vxor.u32 %v1713, 2147483648
        %v1715 = vsel %vm1632, %v1714, %v1713
        %v1716 = vsub.s32 4, %v1692
        %v1717 = vsel %vm1632, %v1716, %v1692
        %v1718 = vsel %vm1631, %v1305, %v1715
        %v1719 = vsel %vm1631, 0, %v1717
        %v1720 = vcosq.f32.pop %v1718
        %v1721 = vsinq.f32.pop %v1718
        %vm1722 = vweird.f32 %v1305
        %v1723 = vadd.s32 %v1719, 3
        %v1724 = vand.u32 %v1723, 3
        %vm1725 = vcmp.lt.s32.totalorder %v1724, 2
        %vm1726 = vcmp.eq.s32.totalorder %v1724, 0
        %v1727 = vxor.u32 %v1721, 2147483648
        %v1728 = vsel %vm1726, %v1720, %v1727
        %vm1729 = vcmp.eq.s32.totalorder %v1724, 2
        %v1730 = vxor.u32 %v1720, 2147483648
        %v1731 = vsel %vm1729, %v1730, %v1721
        %v1732 = vsel %vm1725, %v1728, %v1731
        %v1733 = vsel %vm1722, nan, %v1732
        %v1734 = vand.u32 2147483647, %v1306
        %vm1735 = vcmp.le.f32.partialorder %v1734, 0.7853982
        %vm1736 = vcmp.lt.s32.totalorder %v1306, 0
        %v1737 = vand.u32 %v1306, 2139095040
        %v1738 = vshrl.u32 %v1737, 23
        %v1739 = vsub.s32 %v1738, 127
        %v1740 = vand.u32 2147483647, %v1306
        %v1741 = vand.u32 %v1740, 8388607
        %v1742 = vor.u32 %v1741, 8388608
        %v1743 = vsub.s32 0, %v1742
        %v1744 = vadd.s32 %v1739, 1
        %vm1745 = vcmp.gt.s32.totalorder %v1744, 0
        %v1746 = vsel %vm1745, %v1744, 0
        %v1747 = vshrl.u32 %v1746, 5
        %v1748 = vand.u32 %v1746, 31
        %v1749 = vsub.s32 32, %v1748
        %v1750 = vshrl.u32 683565275, %v1749
        %v1751 = vshll.u32 683565275, %v1748
        %v1752 = vshrl.u32 2475754826, %v1749
        %v1753 = vor.u32 %v1751, %v1752
        %v1754 = vshll.u32 2475754826, %v1748
        %v1755 = vshrl.u32 2131351028, %v1749
        %v1756 = vor.u32 %v1754, %v1755
        %v1757 = vshll.u32 2131351028, %v1748
        %v1758 = vshrl.u32 2102212464, %v1749
        %v1759 = vor.u32 %v1757, %v1758
        %v1760 = vshll.u32 2102212464, %v1748
        %v1761 = vshrl.u32 920167782, %v1749
        %v1762 = vor.u32 %v1760, %v1761
        %v1763 = vshll.u32 920167782, %v1748
        %v1764 = vshrl.u32 1326507024, %v1749
        %v1765 = vor.u32 %v1763, %v1764
        %vm1766 = vcmp.lt.s32.totalorder %v1747, 1
        %vm1767 = vcmp.lt.s32.totalorder %v1747, 2
        %vm1768 = vcmp.lt.s32.totalorder %v1747, 3
        %vm1769 = vcmp.lt.s32.totalorder %v1747, 4
        %v1770 = vsel %vm1766, %v1750, %v1753
        %v1771 = vsel %vm1769, %v1759, 2102212464
        %v1772 = vsel %vm1768, %v1756, %v1771
        %v1773 = vsel %vm1767, %v1770, %v1772
        %v1774 = vsel %vm1766, %v1753, %v1756
        %v1775 = vsel %vm1769, %v1762, 920167782
        %v1776 = vsel %vm1768, %v1759, %v1775
        %v1777 = vsel %vm1767, %v1774, %v1776
        %v1778 = vsel %vm1766, %v1756, %v1759
        %v1779 = vsel %vm1769, %v1765, 1326507024
        %v1780 = vsel %vm1768, %v1762, %v1779
        %v1781 = vsel %vm1767, %v1778, %v1780
        %v1782 = vshll.u32 %v1742, 8
        %v1783 = vmul.u32.u64.compose %v1782, %v1781
        %v1784 = vextract.low.u32 %v1783
        %v1785 = vextract.high.u32 %v1783
        %v1786 = vmul.u32.u64.compose %v1782, %v1777
        %v1787 = vextract.low.u32 %v1786
        %v1788 = vextract.high.u32 %v1786
        %v1789 = vmul.u32 %v1782, %v1773
        %v1790 = vadd.s32 %v1785, %v1787
        %vm1791 = vc.u32 %v1785, %v1787
        %v1792 = vadd.s32 %v1788, 1
        %v1793 = vsel %vm1791, %v1792, %v1788
        %v1794 = vadd.s32 %v1789, %v1793
        %v1795 = vadd.s32 %v1794, 536870912
        %v1796 = vshrl.u32 %v1795, 30
        %v1797 = vshll.u32 %v1796, 30
        %v1798 = vsub.s32 %v1794, %v1797
        %vm1799 = vcmp.lt.s32.totalorder %v1798, 0
        %v1800 = vsub.s32 0, %v1798
        %v1801 = vsel %vm1799, %v1800, %v1798
        %v1802 = vclz %v1801
        %v1803 = vsub.s32 %v1802, 2
        %vm1804 = vcmp.gt.s32.totalorder 0, %v1803
        %v1805 = vsel %vm1804, 0, %v1803
        %v1806 = vsub.s32 32, %v1805
        %v1807 = vshll.u32 %v1798, %v1805
        %v1808 = vshrl.u32 %v1790, %v1806
        %v1809 = vor.u32 %v1807, %v1808
        %v1810 = vsub.s32 4294967266, %v1805
        %v1811 = vadd.s32 %v1810, 127
        %v1812 = vshll.u32 %v1811, 23
        %v1813 = vor.u32 4788187, %v1812
        %v1814 = vand.u32 2147483647, %v1813
        %v1816 = vcvt.s32.f32 %v1809
        %v1817 = vmul.f32 %v1816, %v1814
        %v1818 = vxor.u32 %v1817, 2147483648
        %v1819 = vsel %vm1736, %v1818, %v1817
        %v1820 = vsub.s32 4, %v1796
        %v1821 = vsel %vm1736, %v1820, %v1796
        %v1822 = vsel %vm1735, %v1306, %v1819
        %v1823 = vsel %vm1735, 0, %v1821
        %v1824 = vcosq.f32.pop %v1822
        %v1825 = vsinq.f32.pop %v1822
        %vm1826 = vweird.f32 %v1306
        %v1827 = vadd.s32 %v1823, 3
        %v1828 = vand.u32 %v1827, 3
        %vm1829 = vcmp.lt.s32.totalorder %v1828, 2
        %vm1830 = vcmp.eq.s32.totalorder %v1828, 0
        %v1831 = vxor.u32 %v1825, 2147483648
        %v1832 = vsel %vm1830, %v1824, %v1831
        %vm1833 = vcmp.eq.s32.totalorder %v1828, 2
        %v1834 = vxor.u32 %v1824, 2147483648
        %v1835 = vsel %vm1833, %v1834, %v1825
        %v1836 = vsel %vm1829, %v1832, %v1835
        %v1837 = vsel %vm1826, nan, %v1836
        %v1838 = vand.u32 2147483647, %v1307
        %vm1839 = vcmp.le.f32.partialorder %v1838, 0.7853982
        %vm1840 = vcmp.lt.s32.totalorder %v1307, 0
        %v1841 = vand.u32 %v1307, 2139095040
        %v1842 = vshrl.u32 %v1841, 23
        %v1843 = vsub.s32 %v1842, 127
        %v1844 = vand.u32 2147483647, %v1307
        %v1845 = vand.u32 %v1844, 8388607
        %v1846 = vor.u32 %v1845, 8388608
        %v1847 = vsub.s32 0, %v1846
        %v1848 = vadd.s32 %v1843, 1
        %vm1849 = vcmp.gt.s32.totalorder %v1848, 0
        %v1850 = vsel %vm1849, %v1848, 0
        %v1851 = vshrl.u32 %v1850, 5
        %v1852 = vand.u32 %v1850, 31
        %v1853 = vsub.s32 32, %v1852
        %v1854 = vshrl.u32 683565275, %v1853
        %v1855 = vshll.u32 683565275, %v1852
        %v1856 = vshrl.u32 2475754826, %v1853
        %v1857 = vor.u32 %v1855, %v1856
        %v1858 = vshll.u32 2475754826, %v1852
        %v1859 = vshrl.u32 2131351028, %v1853
        %v1860 = vor.u32 %v1858, %v1859
        %v1861 = vshll.u32 2131351028, %v1852
        %v1862 = vshrl.u32 2102212464, %v1853
        %v1863 = vor.u32 %v1861, %v1862
        %v1864 = vshll.u32 2102212464, %v1852
        %v1865 = vshrl.u32 920167782, %v1853
        %v1866 = vor.u32 %v1864, %v1865
        %v1867 = vshll.u32 920167782, %v1852
        %v1868 = vshrl.u32 1326507024, %v1853
        %v1869 = vor.u32 %v1867, %v1868
        %vm1870 = vcmp.lt.s32.totalorder %v1851, 1
        %vm1871 = vcmp.lt.s32.totalorder %v1851, 2
        %vm1872 = vcmp.lt.s32.totalorder %v1851, 3
        %vm1873 = vcmp.lt.s32.totalorder %v1851, 4
        %v1874 = vsel %vm1870, %v1854, %v1857
        %v1875 = vsel %vm1873, %v1863, 2102212464
        %v1876 = vsel %vm1872, %v1860, %v1875
        %v1877 = vsel %vm1871, %v1874, %v1876
        %v1878 = vsel %vm1870, %v1857, %v1860
        %v1879 = vsel %vm1873, %v1866, 920167782
        %v1880 = vsel %vm1872, %v1863, %v1879
        %v1881 = vsel %vm1871, %v1878, %v1880
        %v1882 = vsel %vm1870, %v1860, %v1863
        %v1883 = vsel %vm1873, %v1869, 1326507024
        %v1884 = vsel %vm1872, %v1866, %v1883
        %v1885 = vsel %vm1871, %v1882, %v1884
        %v1886 = vshll.u32 %v1846, 8
        %v1887 = vmul.u32.u64.compose %v1886, %v1885
        %v1888 = vextract.low.u32 %v1887
        %v1889 = vextract.high.u32 %v1887
        %v1890 = vmul.u32.u64.compose %v1886, %v1881
        %v1891 = vextract.low.u32 %v1890
        %v1892 = vextract.high.u32 %v1890
        %v1893 = vmul.u32 %v1886, %v1877
        %v1894 = vadd.s32 %v1889, %v1891
        %vm1895 = vc.u32 %v1889, %v1891
        %v1896 = vadd.s32 %v1892, 1
        %v1897 = vsel %vm1895, %v1896, %v1892
        %v1898 = vadd.s32 %v1893, %v1897
        %v1899 = vadd.s32 %v1898, 536870912
        %v1900 = vshrl.u32 %v1899, 30
        %v1901 = vshll.u32 %v1900, 30
        %v1902 = vsub.s32 %v1898, %v1901
        %vm1903 = vcmp.lt.s32.totalorder %v1902, 0
        %v1904 = vsub.s32 0, %v1902
        %v1905 = vsel %vm1903, %v1904, %v1902
        %v1906 = vclz %v1905
        %v1907 = vsub.s32 %v1906, 2
        %vm1908 = vcmp.gt.s32.totalorder 0, %v1907
        %v1909 = vsel %vm1908, 0, %v1907
        %v1910 = vsub.s32 32, %v1909
        %v1911 = vshll.u32 %v1902, %v1909
        %v1912 = vshrl.u32 %v1894, %v1910
        %v1913 = vor.u32 %v1911, %v1912
        %v1914 = vsub.s32 4294967266, %v1909
        %v1915 = vadd.s32 %v1914, 127
        %v1916 = vshll.u32 %v1915, 23
        %v1917 = vor.u32 4788187, %v1916
        %v1918 = vand.u32 2147483647, %v1917
        %v1920 = vcvt.s32.f32 %v1913
        %v1921 = vmul.f32 %v1920, %v1918
        %v1922 = vxor.u32 %v1921, 2147483648
        %v1923 = vsel %vm1840, %v1922, %v1921
        %v1924 = vsub.s32 4, %v1900
        %v1925 = vsel %vm1840, %v1924, %v1900
        %v1926 = vsel %vm1839, %v1307, %v1923
        %v1927 = vsel %vm1839, 0, %v1925
        %v1928 = vcosq.f32.pop %v1926
        %v1929 = vsinq.f32.pop %v1926
        %vm1930 = vweird.f32 %v1307
        %v1931 = vadd.s32 %v1927, 3
        %v1932 = vand.u32 %v1931, 3
        %vm1933 = vcmp.lt.s32.totalorder %v1932, 2
        %vm1934 = vcmp.eq.s32.totalorder %v1932, 0
        %v1935 = vxor.u32 %v1929, 2147483648
        %v1936 = vsel %vm1934, %v1928, %v1935
        %vm1937 = vcmp.eq.s32.totalorder %v1932, 2
        %v1938 = vxor.u32 %v1928, 2147483648
        %v1939 = vsel %vm1937, %v1938, %v1929
        %v1940 = vsel %vm1933, %v1936, %v1939
        %v1941 = vsel %vm1930, nan, %v1940
        %v1942 = vand.u32 2147483647, %v1308
        %vm1943 = vcmp.le.f32.partialorder %v1942, 0.7853982
        %vm1944 = vcmp.lt.s32.totalorder %v1308, 0
        %v1945 = vand.u32 %v1308, 2139095040
        %v1946 = vshrl.u32 %v1945, 23
        %v1947 = vsub.s32 %v1946, 127
        %v1948 = vand.u32 2147483647, %v1308
        %v1949 = vand.u32 %v1948, 8388607
        %v1950 = vor.u32 %v1949, 8388608
        %v1951 = vsub.s32 0, %v1950
        %v1952 = vadd.s32 %v1947, 1
        %vm1953 = vcmp.gt.s32.totalorder %v1952, 0
        %v1954 = vsel %vm1953, %v1952, 0
        %v1955 = vshrl.u32 %v1954, 5
        %v1956 = vand.u32 %v1954, 31
        %v1957 = vsub.s32 32, %v1956
        %v1958 = vshrl.u32 683565275, %v1957
        %v1959 = vshll.u32 683565275, %v1956
        %v1960 = vshrl.u32 2475754826, %v1957
        %v1961 = vor.u32 %v1959, %v1960
        %v1962 = vshll.u32 2475754826, %v1956
        %v1963 = vshrl.u32 2131351028, %v1957
        %v1964 = vor.u32 %v1962, %v1963
        %v1965 = vshll.u32 2131351028, %v1956
        %v1966 = vshrl.u32 2102212464, %v1957
        %v1967 = vor.u32 %v1965, %v1966
        %v1968 = vshll.u32 2102212464, %v1956
        %v1969 = vshrl.u32 920167782, %v1957
        %v1970 = vor.u32 %v1968, %v1969
        %v1971 = vshll.u32 920167782, %v1956
        %v1972 = vshrl.u32 1326507024, %v1957
        %v1973 = vor.u32 %v1971, %v1972
        %vm1974 = vcmp.lt.s32.totalorder %v1955, 1
        %vm1975 = vcmp.lt.s32.totalorder %v1955, 2
        %vm1976 = vcmp.lt.s32.totalorder %v1955, 3
        %vm1977 = vcmp.lt.s32.totalorder %v1955, 4
        %v1978 = vsel %vm1974, %v1958, %v1961
        %v1979 = vsel %vm1977, %v1967, 2102212464
        %v1980 = vsel %vm1976, %v1964, %v1979
        %v1981 = vsel %vm1975, %v1978, %v1980
        %v1982 = vsel %vm1974, %v1961, %v1964
        %v1983 = vsel %vm1977, %v1970, 920167782
        %v1984 = vsel %vm1976, %v1967, %v1983
        %v1985 = vsel %vm1975, %v1982, %v1984
        %v1986 = vsel %vm1974, %v1964, %v1967
        %v1987 = vsel %vm1977, %v1973, 1326507024
        %v1988 = vsel %vm1976, %v1970, %v1987
        %v1989 = vsel %vm1975, %v1986, %v1988
        %v1990 = vshll.u32 %v1950, 8
        %v1991 = vmul.u32.u64.compose %v1990, %v1989
        %v1992 = vextract.low.u32 %v1991
        %v1993 = vextract.high.u32 %v1991
        %v1994 = vmul.u32.u64.compose %v1990, %v1985
        %v1995 = vextract.low.u32 %v1994
        %v1996 = vextract.high.u32 %v1994
        %v1997 = vmul.u32 %v1990, %v1981
        %v1998 = vadd.s32 %v1993, %v1995
        %vm1999 = vc.u32 %v1993, %v1995
        %v2000 = vadd.s32 %v1996, 1
        %v2001 = vsel %vm1999, %v2000, %v1996
        %v2002 = vadd.s32 %v1997, %v2001
        %v2003 = vadd.s32 %v2002, 536870912
        %v2004 = vshrl.u32 %v2003, 30
        %v2005 = vshll.u32 %v2004, 30
        %v2006 = vsub.s32 %v2002, %v2005
        %vm2007 = vcmp.lt.s32.totalorder %v2006, 0
        %v2008 = vsub.s32 0, %v2006
        %v2009 = vsel %vm2007, %v2008, %v2006
        %v2010 = vclz %v2009
        %v2011 = vsub.s32 %v2010, 2
        %vm2012 = vcmp.gt.s32.totalorder 0, %v2011
        %v2013 = vsel %vm2012, 0, %v2011
        %v2014 = vsub.s32 32, %v2013
        %v2015 = vshll.u32 %v2006, %v2013
        %v2016 = vshrl.u32 %v1998, %v2014
        %v2017 = vor.u32 %v2015, %v2016
        %v2018 = vsub.s32 4294967266, %v2013
        %v2019 = vadd.s32 %v2018, 127
        %v2020 = vshll.u32 %v2019, 23
        %v2021 = vor.u32 4788187, %v2020
        %v2022 = vand.u32 2147483647, %v2021
        %v2024 = vcvt.s32.f32 %v2017
        %v2025 = vmul.f32 %v2024, %v2022
        %v2026 = vxor.u32 %v2025, 2147483648
        %v2027 = vsel %vm1944, %v2026, %v2025
        %v2028 = vsub.s32 4, %v2004
        %v2029 = vsel %vm1944, %v2028, %v2004
        %v2030 = vsel %vm1943, %v1308, %v2027
        %v2031 = vsel %vm1943, 0, %v2029
        %v2032 = vcosq.f32.pop %v2030
        %v2033 = vsinq.f32.pop %v2030
        %vm2034 = vweird.f32 %v1308
        %v2035 = vadd.s32 %v2031, 3
        %v2036 = vand.u32 %v2035, 3
        %vm2037 = vcmp.lt.s32.totalorder %v2036, 2
        %vm2038 = vcmp.eq.s32.totalorder %v2036, 0
        %v2039 = vxor.u32 %v2033, 2147483648
        %v2040 = vsel %vm2038, %v2032, %v2039
        %vm2041 = vcmp.eq.s32.totalorder %v2036, 2
        %v2042 = vxor.u32 %v2032, 2147483648
        %v2043 = vsel %vm2041, %v2042, %v2033
        %v2044 = vsel %vm2037, %v2040, %v2043
        %v2045 = vsel %vm2034, nan, %v2044
        %v2046 = vand.u32 2147483647, %v1309
        %vm2047 = vcmp.le.f32.partialorder %v2046, 0.7853982
        %vm2048 = vcmp.lt.s32.totalorder %v1309, 0
        %v2049 = vand.u32 %v1309, 2139095040
        %v2050 = vshrl.u32 %v2049, 23
        %v2051 = vsub.s32 %v2050, 127
        %v2052 = vand.u32 2147483647, %v1309
        %v2053 = vand.u32 %v2052, 8388607
        %v2054 = vor.u32 %v2053, 8388608
        %v2055 = vsub.s32 0, %v2054
        %v2056 = vadd.s32 %v2051, 1
        %vm2057 = vcmp.gt.s32.totalorder %v2056, 0
        %v2058 = vsel %vm2057, %v2056, 0
        %v2059 = vshrl.u32 %v2058, 5
        %v2060 = vand.u32 %v2058, 31
        %v2061 = vsub.s32 32, %v2060
        %v2062 = vshrl.u32 683565275, %v2061
        %v2063 = vshll.u32 683565275, %v2060
        %v2064 = vshrl.u32 2475754826, %v2061
        %v2065 = vor.u32 %v2063, %v2064
        %v2066 = vshll.u32 2475754826, %v2060
        %v2067 = vshrl.u32 2131351028, %v2061
        %v2068 = vor.u32 %v2066, %v2067
        %v2069 = vshll.u32 2131351028, %v2060
        %v2070 = vshrl.u32 2102212464, %v2061
        %v2071 = vor.u32 %v2069, %v2070
        %v2072 = vshll.u32 2102212464, %v2060
        %v2073 = vshrl.u32 920167782, %v2061
        %v2074 = vor.u32 %v2072, %v2073
        %v2075 = vshll.u32 920167782, %v2060
        %v2076 = vshrl.u32 1326507024, %v2061
        %v2077 = vor.u32 %v2075, %v2076
        %vm2078 = vcmp.lt.s32.totalorder %v2059, 1
        %vm2079 = vcmp.lt.s32.totalorder %v2059, 2
        %vm2080 = vcmp.lt.s32.totalorder %v2059, 3
        %vm2081 = vcmp.lt.s32.totalorder %v2059, 4
        %v2082 = vsel %vm2078, %v2062, %v2065
        %v2083 = vsel %vm2081, %v2071, 2102212464
        %v2084 = vsel %vm2080, %v2068, %v2083
        %v2085 = vsel %vm2079, %v2082, %v2084
        %v2086 = vsel %vm2078, %v2065, %v2068
        %v2087 = vsel %vm2081, %v2074, 920167782
        %v2088 = vsel %vm2080, %v2071, %v2087
        %v2089 = vsel %vm2079, %v2086, %v2088
        %v2090 = vsel %vm2078, %v2068, %v2071
        %v2091 = vsel %vm2081, %v2077, 1326507024
        %v2092 = vsel %vm2080, %v2074, %v2091
        %v2093 = vsel %vm2079, %v2090, %v2092
        %v2094 = vshll.u32 %v2054, 8
        %v2095 = vmul.u32.u64.compose %v2094, %v2093
        %v2096 = vextract.low.u32 %v2095
        %v2097 = vextract.high.u32 %v2095
        %v2098 = vmul.u32.u64.compose %v2094, %v2089
        %v2099 = vextract.low.u32 %v2098
        %v2100 = vextract.high.u32 %v2098
        %v2101 = vmul.u32 %v2094, %v2085
        %v2102 = vadd.s32 %v2097, %v2099
        %vm2103 = vc.u32 %v2097, %v2099
        %v2104 = vadd.s32 %v2100, 1
        %v2105 = vsel %vm2103, %v2104, %v2100
        %v2106 = vadd.s32 %v2101, %v2105
        %v2107 = vadd.s32 %v2106, 536870912
        %v2108 = vshrl.u32 %v2107, 30
        %v2109 = vshll.u32 %v2108, 30
        %v2110 = vsub.s32 %v2106, %v2109
        %vm2111 = vcmp.lt.s32.totalorder %v2110, 0
        %v2112 = vsub.s32 0, %v2110
        %v2113 = vsel %vm2111, %v2112, %v2110
        %v2114 = vclz %v2113
        %v2115 = vsub.s32 %v2114, 2
        %vm2116 = vcmp.gt.s32.totalorder 0, %v2115
        %v2117 = vsel %vm2116, 0, %v2115
        %v2118 = vsub.s32 32, %v2117
        %v2119 = vshll.u32 %v2110, %v2117
        %v2120 = vshrl.u32 %v2102, %v2118
        %v2121 = vor.u32 %v2119, %v2120
        %v2122 = vsub.s32 4294967266, %v2117
        %v2123 = vadd.s32 %v2122, 127
        %v2124 = vshll.u32 %v2123, 23
        %v2125 = vor.u32 4788187, %v2124
        %v2126 = vand.u32 2147483647, %v2125
        %v2128 = vcvt.s32.f32 %v2121
        %v2129 = vmul.f32 %v2128, %v2126
        %v2130 = vxor.u32 %v2129, 2147483648
        %v2131 = vsel %vm2048, %v2130, %v2129
        %v2132 = vsub.s32 4, %v2108
        %v2133 = vsel %vm2048, %v2132, %v2108
        %v2134 = vsel %vm2047, %v1309, %v2131
        %v2135 = vsel %vm2047, 0, %v2133
        %v2136 = vcosq.f32.pop %v2134
        %v2137 = vsinq.f32.pop %v2134
        %vm2138 = vweird.f32 %v1309
        %v2139 = vadd.s32 %v2135, 3
        %v2140 = vand.u32 %v2139, 3
        %vm2141 = vcmp.lt.s32.totalorder %v2140, 2
        %vm2142 = vcmp.eq.s32.totalorder %v2140, 0
        %v2143 = vxor.u32 %v2137, 2147483648
        %v2144 = vsel %vm2142, %v2136, %v2143
        %vm2145 = vcmp.eq.s32.totalorder %v2140, 2
        %v2146 = vxor.u32 %v2136, 2147483648
        %v2147 = vsel %vm2145, %v2146, %v2137
        %v2148 = vsel %vm2141, %v2144, %v2147
        %v2149 = vsel %vm2138, nan, %v2148
        %v2150 = vand.u32 2147483647, %v1310
        %vm2151 = vcmp.le.f32.partialorder %v2150, 0.7853982
        %vm2152 = vcmp.lt.s32.totalorder %v1310, 0
        %v2153 = vand.u32 %v1310, 2139095040
        %v2154 = vshrl.u32 %v2153, 23
        %v2155 = vsub.s32 %v2154, 127
        %v2156 = vand.u32 2147483647, %v1310
        %v2157 = vand.u32 %v2156, 8388607
        %v2158 = vor.u32 %v2157, 8388608
        %v2159 = vsub.s32 0, %v2158
        %v2160 = vadd.s32 %v2155, 1
        %vm2161 = vcmp.gt.s32.totalorder %v2160, 0
        %v2162 = vsel %vm2161, %v2160, 0
        %v2163 = vshrl.u32 %v2162, 5
        %v2164 = vand.u32 %v2162, 31
        %v2165 = vsub.s32 32, %v2164
        %v2166 = vshrl.u32 683565275, %v2165
        %v2167 = vshll.u32 683565275, %v2164
        %v2168 = vshrl.u32 2475754826, %v2165
        %v2169 = vor.u32 %v2167, %v2168
        %v2170 = vshll.u32 2475754826, %v2164
        %v2171 = vshrl.u32 2131351028, %v2165
        %v2172 = vor.u32 %v2170, %v2171
        %v2173 = vshll.u32 2131351028, %v2164
        %v2174 = vshrl.u32 2102212464, %v2165
        %v2175 = vor.u32 %v2173, %v2174
        %v2176 = vshll.u32 2102212464, %v2164
        %v2177 = vshrl.u32 920167782, %v2165
        %v2178 = vor.u32 %v2176, %v2177
        %v2179 = vshll.u32 920167782, %v2164
        %v2180 = vshrl.u32 1326507024, %v2165
        %v2181 = vor.u32 %v2179, %v2180
        %vm2182 = vcmp.lt.s32.totalorder %v2163, 1
        %vm2183 = vcmp.lt.s32.totalorder %v2163, 2
        %vm2184 = vcmp.lt.s32.totalorder %v2163, 3
        %vm2185 = vcmp.lt.s32.totalorder %v2163, 4
        %v2186 = vsel %vm2182, %v2166, %v2169
        %v2187 = vsel %vm2185, %v2175, 2102212464
        %v2188 = vsel %vm2184, %v2172, %v2187
        %v2189 = vsel %vm2183, %v2186, %v2188
        %v2190 = vsel %vm2182, %v2169, %v2172
        %v2191 = vsel %vm2185, %v2178, 920167782
        %v2192 = vsel %vm2184, %v2175, %v2191
        %v2193 = vsel %vm2183, %v2190, %v2192
        %v2194 = vsel %vm2182, %v2172, %v2175
        %v2195 = vsel %vm2185, %v2181, 1326507024
        %v2196 = vsel %vm2184, %v2178, %v2195
        %v2197 = vsel %vm2183, %v2194, %v2196
        %v2198 = vshll.u32 %v2158, 8
        %v2199 = vmul.u32.u64.compose %v2198, %v2197
        %v2200 = vextract.low.u32 %v2199
        %v2201 = vextract.high.u32 %v2199
        %v2202 = vmul.u32.u64.compose %v2198, %v2193
        %v2203 = vextract.low.u32 %v2202
        %v2204 = vextract.high.u32 %v2202
        %v2205 = vmul.u32 %v2198, %v2189
        %v2206 = vadd.s32 %v2201, %v2203
        %vm2207 = vc.u32 %v2201, %v2203
        %v2208 = vadd.s32 %v2204, 1
        %v2209 = vsel %vm2207, %v2208, %v2204
        %v2210 = vadd.s32 %v2205, %v2209
        %v2211 = vadd.s32 %v2210, 536870912
        %v2212 = vshrl.u32 %v2211, 30
        %v2213 = vshll.u32 %v2212, 30
        %v2214 = vsub.s32 %v2210, %v2213
        %vm2215 = vcmp.lt.s32.totalorder %v2214, 0
        %v2216 = vsub.s32 0, %v2214
        %v2217 = vsel %vm2215, %v2216, %v2214
        %v2218 = vclz %v2217
        %v2219 = vsub.s32 %v2218, 2
        %vm2220 = vcmp.gt.s32.totalorder 0, %v2219
        %v2221 = vsel %vm2220, 0, %v2219
        %v2222 = vsub.s32 32, %v2221
        %v2223 = vshll.u32 %v2214, %v2221
        %v2224 = vshrl.u32 %v2206, %v2222
        %v2225 = vor.u32 %v2223, %v2224
        %v2226 = vsub.s32 4294967266, %v2221
        %v2227 = vadd.s32 %v2226, 127
        %v2228 = vshll.u32 %v2227, 23
        %v2229 = vor.u32 4788187, %v2228
        %v2230 = vand.u32 2147483647, %v2229
        %v2232 = vcvt.s32.f32 %v2225
        %v2233 = vmul.f32 %v2232, %v2230
        %v2234 = vxor.u32 %v2233, 2147483648
        %v2235 = vsel %vm2152, %v2234, %v2233
        %v2236 = vsub.s32 4, %v2212
        %v2237 = vsel %vm2152, %v2236, %v2212
        %v2238 = vsel %vm2151, %v1310, %v2235
        %v2239 = vsel %vm2151, 0, %v2237
        %v2240 = vcosq.f32.pop %v2238
        %v2241 = vsinq.f32.pop %v2238
        %vm2242 = vweird.f32 %v1310
        %v2243 = vadd.s32 %v2239, 3
        %v2244 = vand.u32 %v2243, 3
        %vm2245 = vcmp.lt.s32.totalorder %v2244, 2
        %vm2246 = vcmp.eq.s32.totalorder %v2244, 0
        %v2247 = vxor.u32 %v2241, 2147483648
        %v2248 = vsel %vm2246, %v2240, %v2247
        %vm2249 = vcmp.eq.s32.totalorder %v2244, 2
        %v2250 = vxor.u32 %v2240, 2147483648
        %v2251 = vsel %vm2249, %v2250, %v2241
        %v2252 = vsel %vm2245, %v2248, %v2251
        %v2253 = vsel %vm2242, nan, %v2252
        %v2254 = vand.u32 2147483647, %v1311
        %vm2255 = vcmp.le.f32.partialorder %v2254, 0.7853982
        %vm2256 = vcmp.lt.s32.totalorder %v1311, 0
        %v2257 = vand.u32 %v1311, 2139095040
        %v2258 = vshrl.u32 %v2257, 23
        %v2259 = vsub.s32 %v2258, 127
        %v2260 = vand.u32 2147483647, %v1311
        %v2261 = vand.u32 %v2260, 8388607
        %v2262 = vor.u32 %v2261, 8388608
        %v2263 = vsub.s32 0, %v2262
        %v2264 = vadd.s32 %v2259, 1
        %vm2265 = vcmp.gt.s32.totalorder %v2264, 0
        %v2266 = vsel %vm2265, %v2264, 0
        %v2267 = vshrl.u32 %v2266, 5
        %v2268 = vand.u32 %v2266, 31
        %v2269 = vsub.s32 32, %v2268
        %v2270 = vshrl.u32 683565275, %v2269
        %v2271 = vshll.u32 683565275, %v2268
        %v2272 = vshrl.u32 2475754826, %v2269
        %v2273 = vor.u32 %v2271, %v2272
        %v2274 = vshll.u32 2475754826, %v2268
        %v2275 = vshrl.u32 2131351028, %v2269
        %v2276 = vor.u32 %v2274, %v2275
        %v2277 = vshll.u32 2131351028, %v2268
        %v2278 = vshrl.u32 2102212464, %v2269
        %v2279 = vor.u32 %v2277, %v2278
        %v2280 = vshll.u32 2102212464, %v2268
        %v2281 = vshrl.u32 920167782, %v2269
        %v2282 = vor.u32 %v2280, %v2281
        %v2283 = vshll.u32 920167782, %v2268
        %v2284 = vshrl.u32 1326507024, %v2269
        %v2285 = vor.u32 %v2283, %v2284
        %vm2286 = vcmp.lt.s32.totalorder %v2267, 1
        %vm2287 = vcmp.lt.s32.totalorder %v2267, 2
        %vm2288 = vcmp.lt.s32.totalorder %v2267, 3
        %vm2289 = vcmp.lt.s32.totalorder %v2267, 4
        %v2290 = vsel %vm2286, %v2270, %v2273
        %v2291 = vsel %vm2289, %v2279, 2102212464
        %v2292 = vsel %vm2288, %v2276, %v2291
        %v2293 = vsel %vm2287, %v2290, %v2292
        %v2294 = vsel %vm2286, %v2273, %v2276
        %v2295 = vsel %vm2289, %v2282, 920167782
        %v2296 = vsel %vm2288, %v2279, %v2295
        %v2297 = vsel %vm2287, %v2294, %v2296
        %v2298 = vsel %vm2286, %v2276, %v2279
        %v2299 = vsel %vm2289, %v2285, 1326507024
        %v2300 = vsel %vm2288, %v2282, %v2299
        %v2301 = vsel %vm2287, %v2298, %v2300
        %v2302 = vshll.u32 %v2262, 8
        %v2303 = vmul.u32.u64.compose %v2302, %v2301
        %v2304 = vextract.low.u32 %v2303
        %v2305 = vextract.high.u32 %v2303
        %v2306 = vmul.u32.u64.compose %v2302, %v2297
        %v2307 = vextract.low.u32 %v2306
        %v2308 = vextract.high.u32 %v2306
        %v2309 = vmul.u32 %v2302, %v2293
        %v2310 = vadd.s32 %v2305, %v2307
        %vm2311 = vc.u32 %v2305, %v2307
        %v2312 = vadd.s32 %v2308, 1
        %v2313 = vsel %vm2311, %v2312, %v2308
        %v2314 = vadd.s32 %v2309, %v2313
        %v2315 = vadd.s32 %v2314, 536870912
        %v2316 = vshrl.u32 %v2315, 30
        %v2317 = vshll.u32 %v2316, 30
        %v2318 = vsub.s32 %v2314, %v2317
        %vm2319 = vcmp.lt.s32.totalorder %v2318, 0
        %v2320 = vsub.s32 0, %v2318
        %v2321 = vsel %vm2319, %v2320, %v2318
        %v2322 = vclz %v2321
        %v2323 = vsub.s32 %v2322, 2
        %vm2324 = vcmp.gt.s32.totalorder 0, %v2323
        %v2325 = vsel %vm2324, 0, %v2323
        %v2326 = vsub.s32 32, %v2325
        %v2327 = vshll.u32 %v2318, %v2325
        %v2328 = vshrl.u32 %v2310, %v2326
        %v2329 = vor.u32 %v2327, %v2328
        %v2330 = vsub.s32 4294967266, %v2325
        %v2331 = vadd.s32 %v2330, 127
        %v2332 = vshll.u32 %v2331, 23
        %v2333 = vor.u32 4788187, %v2332
        %v2334 = vand.u32 2147483647, %v2333
        %v2336 = vcvt.s32.f32 %v2329
        %v2337 = vmul.f32 %v2336, %v2334
        %v2338 = vxor.u32 %v2337, 2147483648
        %v2339 = vsel %vm2256, %v2338, %v2337
        %v2340 = vsub.s32 4, %v2316
        %v2341 = vsel %vm2256, %v2340, %v2316
        %v2342 = vsel %vm2255, %v1311, %v2339
        %v2343 = vsel %vm2255, 0, %v2341
        %v2344 = vcosq.f32.pop %v2342
        %v2345 = vsinq.f32.pop %v2342
        %vm2346 = vweird.f32 %v1311
        %v2347 = vadd.s32 %v2343, 3
        %v2348 = vand.u32 %v2347, 3
        %vm2349 = vcmp.lt.s32.totalorder %v2348, 2
        %vm2350 = vcmp.eq.s32.totalorder %v2348, 0
        %v2351 = vxor.u32 %v2345, 2147483648
        %v2352 = vsel %vm2350, %v2344, %v2351
        %vm2353 = vcmp.eq.s32.totalorder %v2348, 2
        %v2354 = vxor.u32 %v2344, 2147483648
        %v2355 = vsel %vm2353, %v2354, %v2345
        %v2356 = vsel %vm2349, %v2352, %v2355
        %v2357 = vsel %vm2346, nan, %v2356
        %v2358 = vand.u32 2147483647, %v1312
        %vm2359 = vcmp.le.f32.partialorder %v2358, 0.7853982
        %vm2360 = vcmp.lt.s32.totalorder %v1312, 0
        %v2361 = vand.u32 %v1312, 2139095040
        %v2362 = vshrl.u32 %v2361, 23
        %v2363 = vsub.s32 %v2362, 127
        %v2364 = vand.u32 2147483647, %v1312
        %v2365 = vand.u32 %v2364, 8388607
        %v2366 = vor.u32 %v2365, 8388608
        %v2367 = vsub.s32 0, %v2366
        %v2368 = vadd.s32 %v2363, 1
        %vm2369 = vcmp.gt.s32.totalorder %v2368, 0
        %v2370 = vsel %vm2369, %v2368, 0
        %v2371 = vshrl.u32 %v2370, 5
        %v2372 = vand.u32 %v2370, 31
        %v2373 = vsub.s32 32, %v2372
        %v2374 = vshrl.u32 683565275, %v2373
        %v2375 = vshll.u32 683565275, %v2372
        %v2376 = vshrl.u32 2475754826, %v2373
        %v2377 = vor.u32 %v2375, %v2376
        %v2378 = vshll.u32 2475754826, %v2372
        %v2379 = vshrl.u32 2131351028, %v2373
        %v2380 = vor.u32 %v2378, %v2379
        %v2381 = vshll.u32 2131351028, %v2372
        %v2382 = vshrl.u32 2102212464, %v2373
        %v2383 = vor.u32 %v2381, %v2382
        %v2384 = vshll.u32 2102212464, %v2372
        %v2385 = vshrl.u32 920167782, %v2373
        %v2386 = vor.u32 %v2384, %v2385
        %v2387 = vshll.u32 920167782, %v2372
        %v2388 = vshrl.u32 1326507024, %v2373
        %v2389 = vor.u32 %v2387, %v2388
        %vm2390 = vcmp.lt.s32.totalorder %v2371, 1
        %vm2391 = vcmp.lt.s32.totalorder %v2371, 2
        %vm2392 = vcmp.lt.s32.totalorder %v2371, 3
        %vm2393 = vcmp.lt.s32.totalorder %v2371, 4
        %v2394 = vsel %vm2390, %v2374, %v2377
        %v2395 = vsel %vm2393, %v2383, 2102212464
        %v2396 = vsel %vm2392, %v2380, %v2395
        %v2397 = vsel %vm2391, %v2394, %v2396
        %v2398 = vsel %vm2390, %v2377, %v2380
        %v2399 = vsel %vm2393, %v2386, 920167782
        %v2400 = vsel %vm2392, %v2383, %v2399
        %v2401 = vsel %vm2391, %v2398, %v2400
        %v2402 = vsel %vm2390, %v2380, %v2383
        %v2403 = vsel %vm2393, %v2389, 1326507024
        %v2404 = vsel %vm2392, %v2386, %v2403
        %v2405 = vsel %vm2391, %v2402, %v2404
        %v2406 = vshll.u32 %v2366, 8
        %v2407 = vmul.u32.u64.compose %v2406, %v2405
        %v2408 = vextract.low.u32 %v2407
        %v2409 = vextract.high.u32 %v2407
        %v2410 = vmul.u32.u64.compose %v2406, %v2401
        %v2411 = vextract.low.u32 %v2410
        %v2412 = vextract.high.u32 %v2410
        %v2413 = vmul.u32 %v2406, %v2397
        %v2414 = vadd.s32 %v2409, %v2411
        %vm2415 = vc.u32 %v2409, %v2411
        %v2416 = vadd.s32 %v2412, 1
        %v2417 = vsel %vm2415, %v2416, %v2412
        %v2418 = vadd.s32 %v2413, %v2417
        %v2419 = vadd.s32 %v2418, 536870912
        %v2420 = vshrl.u32 %v2419, 30
        %v2421 = vshll.u32 %v2420, 30
        %v2422 = vsub.s32 %v2418, %v2421
        %vm2423 = vcmp.lt.s32.totalorder %v2422, 0
        %v2424 = vsub.s32 0, %v2422
        %v2425 = vsel %vm2423, %v2424, %v2422
        %v2426 = vclz %v2425
        %v2427 = vsub.s32 %v2426, 2
        %vm2428 = vcmp.gt.s32.totalorder 0, %v2427
        %v2429 = vsel %vm2428, 0, %v2427
        %v2430 = vsub.s32 32, %v2429
        %v2431 = vshll.u32 %v2422, %v2429
        %v2432 = vshrl.u32 %v2414, %v2430
        %v2433 = vor.u32 %v2431, %v2432
        %v2434 = vsub.s32 4294967266, %v2429
        %v2435 = vadd.s32 %v2434, 127
        %v2436 = vshll.u32 %v2435, 23
        %v2437 = vor.u32 4788187, %v2436
        %v2438 = vand.u32 2147483647, %v2437
        %v2440 = vcvt.s32.f32 %v2433
        %v2441 = vmul.f32 %v2440, %v2438
        %v2442 = vxor.u32 %v2441, 2147483648
        %v2443 = vsel %vm2360, %v2442, %v2441
        %v2444 = vsub.s32 4, %v2420
        %v2445 = vsel %vm2360, %v2444, %v2420
        %v2446 = vsel %vm2359, %v1312, %v2443
        %v2447 = vsel %vm2359, 0, %v2445
        %v2448 = vcosq.f32.pop %v2446
        %v2449 = vsinq.f32.pop %v2446
        %vm2450 = vweird.f32 %v1312
        %v2451 = vadd.s32 %v2447, 3
        %v2452 = vand.u32 %v2451, 3
        %vm2453 = vcmp.lt.s32.totalorder %v2452, 2
        %vm2454 = vcmp.eq.s32.totalorder %v2452, 0
        %v2455 = vxor.u32 %v2449, 2147483648
        %v2456 = vsel %vm2454, %v2448, %v2455
        %vm2457 = vcmp.eq.s32.totalorder %v2452, 2
        %v2458 = vxor.u32 %v2448, 2147483648
        %v2459 = vsel %vm2457, %v2458, %v2449
        %v2460 = vsel %vm2453, %v2456, %v2459
        %v2461 = vsel %vm2450, nan, %v2460
        %v2462 = vand.u32 2147483647, %v1313
        %vm2463 = vcmp.le.f32.partialorder %v2462, 0.7853982
        %vm2464 = vcmp.lt.s32.totalorder %v1313, 0
        %v2465 = vand.u32 %v1313, 2139095040
        %v2466 = vshrl.u32 %v2465, 23
        %v2467 = vsub.s32 %v2466, 127
        %v2468 = vand.u32 2147483647, %v1313
        %v2469 = vand.u32 %v2468, 8388607
        %v2470 = vor.u32 %v2469, 8388608
        %v2471 = vsub.s32 0, %v2470
        %v2472 = vadd.s32 %v2467, 1
        %vm2473 = vcmp.gt.s32.totalorder %v2472, 0
        %v2474 = vsel %vm2473, %v2472, 0
        %v2475 = vshrl.u32 %v2474, 5
        %v2476 = vand.u32 %v2474, 31
        %v2477 = vsub.s32 32, %v2476
        %v2478 = vshrl.u32 683565275, %v2477
        %v2479 = vshll.u32 683565275, %v2476
        %v2480 = vshrl.u32 2475754826, %v2477
        %v2481 = vor.u32 %v2479, %v2480
        %v2482 = vshll.u32 2475754826, %v2476
        %v2483 = vshrl.u32 2131351028, %v2477
        %v2484 = vor.u32 %v2482, %v2483
        %v2485 = vshll.u32 2131351028, %v2476
        %v2486 = vshrl.u32 2102212464, %v2477
        %v2487 = vor.u32 %v2485, %v2486
        %v2488 = vshll.u32 2102212464, %v2476
        %v2489 = vshrl.u32 920167782, %v2477
        %v2490 = vor.u32 %v2488, %v2489
        %v2491 = vshll.u32 920167782, %v2476
        %v2492 = vshrl.u32 1326507024, %v2477
        %v2493 = vor.u32 %v2491, %v2492
        %vm2494 = vcmp.lt.s32.totalorder %v2475, 1
        %vm2495 = vcmp.lt.s32.totalorder %v2475, 2
        %vm2496 = vcmp.lt.s32.totalorder %v2475, 3
        %vm2497 = vcmp.lt.s32.totalorder %v2475, 4
        %v2498 = vsel %vm2494, %v2478, %v2481
        %v2499 = vsel %vm2497, %v2487, 2102212464
        %v2500 = vsel %vm2496, %v2484, %v2499
        %v2501 = vsel %vm2495, %v2498, %v2500
        %v2502 = vsel %vm2494, %v2481, %v2484
        %v2503 = vsel %vm2497, %v2490, 920167782
        %v2504 = vsel %vm2496, %v2487, %v2503
        %v2505 = vsel %vm2495, %v2502, %v2504
        %v2506 = vsel %vm2494, %v2484, %v2487
        %v2507 = vsel %vm2497, %v2493, 1326507024
        %v2508 = vsel %vm2496, %v2490, %v2507
        %v2509 = vsel %vm2495, %v2506, %v2508
        %v2510 = vshll.u32 %v2470, 8
        %v2511 = vmul.u32.u64.compose %v2510, %v2509
        %v2512 = vextract.low.u32 %v2511
        %v2513 = vextract.high.u32 %v2511
        %v2514 = vmul.u32.u64.compose %v2510, %v2505
        %v2515 = vextract.low.u32 %v2514
        %v2516 = vextract.high.u32 %v2514
        %v2517 = vmul.u32 %v2510, %v2501
        %v2518 = vadd.s32 %v2513, %v2515
        %vm2519 = vc.u32 %v2513, %v2515
        %v2520 = vadd.s32 %v2516, 1
        %v2521 = vsel %vm2519, %v2520, %v2516
        %v2522 = vadd.s32 %v2517, %v2521
        %v2523 = vadd.s32 %v2522, 536870912
        %v2524 = vshrl.u32 %v2523, 30
        %v2525 = vshll.u32 %v2524, 30
        %v2526 = vsub.s32 %v2522, %v2525
        %vm2527 = vcmp.lt.s32.totalorder %v2526, 0
        %v2528 = vsub.s32 0, %v2526
        %v2529 = vsel %vm2527, %v2528, %v2526
        %v2530 = vclz %v2529
        %v2531 = vsub.s32 %v2530, 2
        %vm2532 = vcmp.gt.s32.totalorder 0, %v2531
        %v2533 = vsel %vm2532, 0, %v2531
        %v2534 = vsub.s32 32, %v2533
        %v2535 = vshll.u32 %v2526, %v2533
        %v2536 = vshrl.u32 %v2518, %v2534
        %v2537 = vor.u32 %v2535, %v2536
        %v2538 = vsub.s32 4294967266, %v2533
        %v2539 = vadd.s32 %v2538, 127
        %v2540 = vshll.u32 %v2539, 23
        %v2541 = vor.u32 4788187, %v2540
        %v2542 = vand.u32 2147483647, %v2541
        %v2544 = vcvt.s32.f32 %v2537
        %v2545 = vmul.f32 %v2544, %v2542
        %v2546 = vxor.u32 %v2545, 2147483648
        %v2547 = vsel %vm2464, %v2546, %v2545
        %v2548 = vsub.s32 4, %v2524
        %v2549 = vsel %vm2464, %v2548, %v2524
        %v2550 = vsel %vm2463, %v1313, %v2547
        %v2551 = vsel %vm2463, 0, %v2549
        %v2552 = vcosq.f32.pop %v2550
        %v2553 = vsinq.f32.pop %v2550
        %vm2554 = vweird.f32 %v1313
        %v2555 = vadd.s32 %v2551, 3
        %v2556 = vand.u32 %v2555, 3
        %vm2557 = vcmp.lt.s32.totalorder %v2556, 2
        %vm2558 = vcmp.eq.s32.totalorder %v2556, 0
        %v2559 = vxor.u32 %v2553, 2147483648
        %v2560 = vsel %vm2558, %v2552, %v2559
        %vm2561 = vcmp.eq.s32.totalorder %v2556, 2
        %v2562 = vxor.u32 %v2552, 2147483648
        %v2563 = vsel %vm2561, %v2562, %v2553
        %v2564 = vsel %vm2557, %v2560, %v2563
        %v2565 = vsel %vm2554, nan, %v2564
        %v2566 = vand.u32 2147483647, %v1314
        %vm2567 = vcmp.le.f32.partialorder %v2566, 0.7853982
        %vm2568 = vcmp.lt.s32.totalorder %v1314, 0
        %v2569 = vand.u32 %v1314, 2139095040
        %v2570 = vshrl.u32 %v2569, 23
        %v2571 = vsub.s32 %v2570, 127
        %v2572 = vand.u32 2147483647, %v1314
        %v2573 = vand.u32 %v2572, 8388607
        %v2574 = vor.u32 %v2573, 8388608
        %v2575 = vsub.s32 0, %v2574
        %v2576 = vadd.s32 %v2571, 1
        %vm2577 = vcmp.gt.s32.totalorder %v2576, 0
        %v2578 = vsel %vm2577, %v2576, 0
        %v2579 = vshrl.u32 %v2578, 5
        %v2580 = vand.u32 %v2578, 31
        %v2581 = vsub.s32 32, %v2580
        %v2582 = vshrl.u32 683565275, %v2581
        %v2583 = vshll.u32 683565275, %v2580
        %v2584 = vshrl.u32 2475754826, %v2581
        %v2585 = vor.u32 %v2583, %v2584
        %v2586 = vshll.u32 2475754826, %v2580
        %v2587 = vshrl.u32 2131351028, %v2581
        %v2588 = vor.u32 %v2586, %v2587
        %v2589 = vshll.u32 2131351028, %v2580
        %v2590 = vshrl.u32 2102212464, %v2581
        %v2591 = vor.u32 %v2589, %v2590
        %v2592 = vshll.u32 2102212464, %v2580
        %v2593 = vshrl.u32 920167782, %v2581
        %v2594 = vor.u32 %v2592, %v2593
        %v2595 = vshll.u32 920167782, %v2580
        %v2596 = vshrl.u32 1326507024, %v2581
        %v2597 = vor.u32 %v2595, %v2596
        %vm2598 = vcmp.lt.s32.totalorder %v2579, 1
        %vm2599 = vcmp.lt.s32.totalorder %v2579, 2
        %vm2600 = vcmp.lt.s32.totalorder %v2579, 3
        %vm2601 = vcmp.lt.s32.totalorder %v2579, 4
        %v2602 = vsel %vm2598, %v2582, %v2585
        %v2603 = vsel %vm2601, %v2591, 2102212464
        %v2604 = vsel %vm2600, %v2588, %v2603
        %v2605 = vsel %vm2599, %v2602, %v2604
        %v2606 = vsel %vm2598, %v2585, %v2588
        %v2607 = vsel %vm2601, %v2594, 920167782
        %v2608 = vsel %vm2600, %v2591, %v2607
        %v2609 = vsel %vm2599, %v2606, %v2608
        %v2610 = vsel %vm2598, %v2588, %v2591
        %v2611 = vsel %vm2601, %v2597, 1326507024
        %v2612 = vsel %vm2600, %v2594, %v2611
        %v2613 = vsel %vm2599, %v2610, %v2612
        %v2614 = vshll.u32 %v2574, 8
        %v2615 = vmul.u32.u64.compose %v2614, %v2613
        %v2616 = vextract.low.u32 %v2615
        %v2617 = vextract.high.u32 %v2615
        %v2618 = vmul.u32.u64.compose %v2614, %v2609
        %v2619 = vextract.low.u32 %v2618
        %v2620 = vextract.high.u32 %v2618
        %v2621 = vmul.u32 %v2614, %v2605
        %v2622 = vadd.s32 %v2617, %v2619
        %vm2623 = vc.u32 %v2617, %v2619
        %v2624 = vadd.s32 %v2620, 1
        %v2625 = vsel %vm2623, %v2624, %v2620
        %v2626 = vadd.s32 %v2621, %v2625
        %v2627 = vadd.s32 %v2626, 536870912
        %v2628 = vshrl.u32 %v2627, 30
        %v2629 = vshll.u32 %v2628, 30
        %v2630 = vsub.s32 %v2626, %v2629
        %vm2631 = vcmp.lt.s32.totalorder %v2630, 0
        %v2632 = vsub.s32 0, %v2630
        %v2633 = vsel %vm2631, %v2632, %v2630
        %v2634 = vclz %v2633
        %v2635 = vsub.s32 %v2634, 2
        %vm2636 = vcmp.gt.s32.totalorder 0, %v2635
        %v2637 = vsel %vm2636, 0, %v2635
        %v2638 = vsub.s32 32, %v2637
        %v2639 = vshll.u32 %v2630, %v2637
        %v2640 = vshrl.u32 %v2622, %v2638
        %v2641 = vor.u32 %v2639, %v2640
        %v2642 = vsub.s32 4294967266, %v2637
        %v2643 = vadd.s32 %v2642, 127
        %v2644 = vshll.u32 %v2643, 23
        %v2645 = vor.u32 4788187, %v2644
        %v2646 = vand.u32 2147483647, %v2645
        %v2648 = vcvt.s32.f32 %v2641
        %v2649 = vmul.f32 %v2648, %v2646
        %v2650 = vxor.u32 %v2649, 2147483648
        %v2651 = vsel %vm2568, %v2650, %v2649
        %v2652 = vsub.s32 4, %v2628
        %v2653 = vsel %vm2568, %v2652, %v2628
        %v2654 = vsel %vm2567, %v1314, %v2651
        %v2655 = vsel %vm2567, 0, %v2653
        %v2656 = vcosq.f32.pop %v2654
        %v2657 = vsinq.f32.pop %v2654
        %vm2658 = vweird.f32 %v1314
        %v2659 = vadd.s32 %v2655, 3
        %v2660 = vand.u32 %v2659, 3
        %vm2661 = vcmp.lt.s32.totalorder %v2660, 2
        %vm2662 = vcmp.eq.s32.totalorder %v2660, 0
        %v2663 = vxor.u32 %v2657, 2147483648
        %v2664 = vsel %vm2662, %v2656, %v2663
        %vm2665 = vcmp.eq.s32.totalorder %v2660, 2
        %v2666 = vxor.u32 %v2656, 2147483648
        %v2667 = vsel %vm2665, %v2666, %v2657
        %v2668 = vsel %vm2661, %v2664, %v2667
        %v2669 = vsel %vm2658, nan, %v2668
        %v2670 = vand.u32 2147483647, %v1315
        %vm2671 = vcmp.le.f32.partialorder %v2670, 0.7853982
        %vm2672 = vcmp.lt.s32.totalorder %v1315, 0
        %v2673 = vand.u32 %v1315, 2139095040
        %v2674 = vshrl.u32 %v2673, 23
        %v2675 = vsub.s32 %v2674, 127
        %v2676 = vand.u32 2147483647, %v1315
        %v2677 = vand.u32 %v2676, 8388607
        %v2678 = vor.u32 %v2677, 8388608
        %v2679 = vsub.s32 0, %v2678
        %v2680 = vadd.s32 %v2675, 1
        %vm2681 = vcmp.gt.s32.totalorder %v2680, 0
        %v2682 = vsel %vm2681, %v2680, 0
        %v2683 = vshrl.u32 %v2682, 5
        %v2684 = vand.u32 %v2682, 31
        %v2685 = vsub.s32 32, %v2684
        %v2686 = vshrl.u32 683565275, %v2685
        %v2687 = vshll.u32 683565275, %v2684
        %v2688 = vshrl.u32 2475754826, %v2685
        %v2689 = vor.u32 %v2687, %v2688
        %v2690 = vshll.u32 2475754826, %v2684
        %v2691 = vshrl.u32 2131351028, %v2685
        %v2692 = vor.u32 %v2690, %v2691
        %v2693 = vshll.u32 2131351028, %v2684
        %v2694 = vshrl.u32 2102212464, %v2685
        %v2695 = vor.u32 %v2693, %v2694
        %v2696 = vshll.u32 2102212464, %v2684
        %v2697 = vshrl.u32 920167782, %v2685
        %v2698 = vor.u32 %v2696, %v2697
        %v2699 = vshll.u32 920167782, %v2684
        %v2700 = vshrl.u32 1326507024, %v2685
        %v2701 = vor.u32 %v2699, %v2700
        %vm2702 = vcmp.lt.s32.totalorder %v2683, 1
        %vm2703 = vcmp.lt.s32.totalorder %v2683, 2
        %vm2704 = vcmp.lt.s32.totalorder %v2683, 3
        %vm2705 = vcmp.lt.s32.totalorder %v2683, 4
        %v2706 = vsel %vm2702, %v2686, %v2689
        %v2707 = vsel %vm2705, %v2695, 2102212464
        %v2708 = vsel %vm2704, %v2692, %v2707
        %v2709 = vsel %vm2703, %v2706, %v2708
        %v2710 = vsel %vm2702, %v2689, %v2692
        %v2711 = vsel %vm2705, %v2698, 920167782
        %v2712 = vsel %vm2704, %v2695, %v2711
        %v2713 = vsel %vm2703, %v2710, %v2712
        %v2714 = vsel %vm2702, %v2692, %v2695
        %v2715 = vsel %vm2705, %v2701, 1326507024
        %v2716 = vsel %vm2704, %v2698, %v2715
        %v2717 = vsel %vm2703, %v2714, %v2716
        %v2718 = vshll.u32 %v2678, 8
        %v2719 = vmul.u32.u64.compose %v2718, %v2717
        %v2720 = vextract.low.u32 %v2719
        %v2721 = vextract.high.u32 %v2719
        %v2722 = vmul.u32.u64.compose %v2718, %v2713
        %v2723 = vextract.low.u32 %v2722
        %v2724 = vextract.high.u32 %v2722
        %v2725 = vmul.u32 %v2718, %v2709
        %v2726 = vadd.s32 %v2721, %v2723
        %vm2727 = vc.u32 %v2721, %v2723
        %v2728 = vadd.s32 %v2724, 1
        %v2729 = vsel %vm2727, %v2728, %v2724
        %v2730 = vadd.s32 %v2725, %v2729
        %v2731 = vadd.s32 %v2730, 536870912
        %v2732 = vshrl.u32 %v2731, 30
        %v2733 = vshll.u32 %v2732, 30
        %v2734 = vsub.s32 %v2730, %v2733
        %vm2735 = vcmp.lt.s32.totalorder %v2734, 0
        %v2736 = vsub.s32 0, %v2734
        %v2737 = vsel %vm2735, %v2736, %v2734
        %v2738 = vclz %v2737
        %v2739 = vsub.s32 %v2738, 2
        %vm2740 = vcmp.gt.s32.totalorder 0, %v2739
        %v2741 = vsel %vm2740, 0, %v2739
        %v2742 = vsub.s32 32, %v2741
        %v2743 = vshll.u32 %v2734, %v2741
        %v2744 = vshrl.u32 %v2726, %v2742
        %v2745 = vor.u32 %v2743, %v2744
        %v2746 = vsub.s32 4294967266, %v2741
        %v2747 = vadd.s32 %v2746, 127
        %v2748 = vshll.u32 %v2747, 23
        %v2749 = vor.u32 4788187, %v2748
        %v2750 = vand.u32 2147483647, %v2749
        %v2752 = vcvt.s32.f32 %v2745
        %v2753 = vmul.f32 %v2752, %v2750
        %v2754 = vxor.u32 %v2753, 2147483648
        %v2755 = vsel %vm2672, %v2754, %v2753
        %v2756 = vsub.s32 4, %v2732
        %v2757 = vsel %vm2672, %v2756, %v2732
        %v2758 = vsel %vm2671, %v1315, %v2755
        %v2759 = vsel %vm2671, 0, %v2757
        %v2760 = vcosq.f32.pop %v2758
        %v2761 = vsinq.f32.pop %v2758
        %vm2762 = vweird.f32 %v1315
        %v2763 = vadd.s32 %v2759, 3
        %v2764 = vand.u32 %v2763, 3
        %vm2765 = vcmp.lt.s32.totalorder %v2764, 2
        %vm2766 = vcmp.eq.s32.totalorder %v2764, 0
        %v2767 = vxor.u32 %v2761, 2147483648
        %v2768 = vsel %vm2766, %v2760, %v2767
        %vm2769 = vcmp.eq.s32.totalorder %v2764, 2
        %v2770 = vxor.u32 %v2760, 2147483648
        %v2771 = vsel %vm2769, %v2770, %v2761
        %v2772 = vsel %vm2765, %v2768, %v2771
        %v2773 = vsel %vm2762, nan, %v2772
        %v2774 = vand.u32 2147483647, %v1316
        %vm2775 = vcmp.le.f32.partialorder %v2774, 0.7853982
        %vm2776 = vcmp.lt.s32.totalorder %v1316, 0
        %v2777 = vand.u32 %v1316, 2139095040
        %v2778 = vshrl.u32 %v2777, 23
        %v2779 = vsub.s32 %v2778, 127
        %v2780 = vand.u32 2147483647, %v1316
        %v2781 = vand.u32 %v2780, 8388607
        %v2782 = vor.u32 %v2781, 8388608
        %v2783 = vsub.s32 0, %v2782
        %v2784 = vadd.s32 %v2779, 1
        %vm2785 = vcmp.gt.s32.totalorder %v2784, 0
        %v2786 = vsel %vm2785, %v2784, 0
        %v2787 = vshrl.u32 %v2786, 5
        %v2788 = vand.u32 %v2786, 31
        %v2789 = vsub.s32 32, %v2788
        %v2790 = vshrl.u32 683565275, %v2789
        %v2791 = vshll.u32 683565275, %v2788
        %v2792 = vshrl.u32 2475754826, %v2789
        %v2793 = vor.u32 %v2791, %v2792
        %v2794 = vshll.u32 2475754826, %v2788
        %v2795 = vshrl.u32 2131351028, %v2789
        %v2796 = vor.u32 %v2794, %v2795
        %v2797 = vshll.u32 2131351028, %v2788
        %v2798 = vshrl.u32 2102212464, %v2789
        %v2799 = vor.u32 %v2797, %v2798
        %v2800 = vshll.u32 2102212464, %v2788
        %v2801 = vshrl.u32 920167782, %v2789
        %v2802 = vor.u32 %v2800, %v2801
        %v2803 = vshll.u32 920167782, %v2788
        %v2804 = vshrl.u32 1326507024, %v2789
        %v2805 = vor.u32 %v2803, %v2804
        %vm2806 = vcmp.lt.s32.totalorder %v2787, 1
        %vm2807 = vcmp.lt.s32.totalorder %v2787, 2
        %vm2808 = vcmp.lt.s32.totalorder %v2787, 3
        %vm2809 = vcmp.lt.s32.totalorder %v2787, 4
        %v2810 = vsel %vm2806, %v2790, %v2793
        %v2811 = vsel %vm2809, %v2799, 2102212464
        %v2812 = vsel %vm2808, %v2796, %v2811
        %v2813 = vsel %vm2807, %v2810, %v2812
        %v2814 = vsel %vm2806, %v2793, %v2796
        %v2815 = vsel %vm2809, %v2802, 920167782
        %v2816 = vsel %vm2808, %v2799, %v2815
        %v2817 = vsel %vm2807, %v2814, %v2816
        %v2818 = vsel %vm2806, %v2796, %v2799
        %v2819 = vsel %vm2809, %v2805, 1326507024
        %v2820 = vsel %vm2808, %v2802, %v2819
        %v2821 = vsel %vm2807, %v2818, %v2820
        %v2822 = vshll.u32 %v2782, 8
        %v2823 = vmul.u32.u64.compose %v2822, %v2821
        %v2824 = vextract.low.u32 %v2823
        %v2825 = vextract.high.u32 %v2823
        %v2826 = vmul.u32.u64.compose %v2822, %v2817
        %v2827 = vextract.low.u32 %v2826
        %v2828 = vextract.high.u32 %v2826
        %v2829 = vmul.u32 %v2822, %v2813
        %v2830 = vadd.s32 %v2825, %v2827
        %vm2831 = vc.u32 %v2825, %v2827
        %v2832 = vadd.s32 %v2828, 1
        %v2833 = vsel %vm2831, %v2832, %v2828
        %v2834 = vadd.s32 %v2829, %v2833
        %v2835 = vadd.s32 %v2834, 536870912
        %v2836 = vshrl.u32 %v2835, 30
        %v2837 = vshll.u32 %v2836, 30
        %v2838 = vsub.s32 %v2834, %v2837
        %vm2839 = vcmp.lt.s32.totalorder %v2838, 0
        %v2840 = vsub.s32 0, %v2838
        %v2841 = vsel %vm2839, %v2840, %v2838
        %v2842 = vclz %v2841
        %v2843 = vsub.s32 %v2842, 2
        %vm2844 = vcmp.gt.s32.totalorder 0, %v2843
        %v2845 = vsel %vm2844, 0, %v2843
        %v2846 = vsub.s32 32, %v2845
        %v2847 = vshll.u32 %v2838, %v2845
        %v2848 = vshrl.u32 %v2830, %v2846
        %v2849 = vor.u32 %v2847, %v2848
        %v2850 = vsub.s32 4294967266, %v2845
        %v2851 = vadd.s32 %v2850, 127
        %v2852 = vshll.u32 %v2851, 23
        %v2853 = vor.u32 4788187, %v2852
        %v2854 = vand.u32 2147483647, %v2853
        %v2856 = vcvt.s32.f32 %v2849
        %v2857 = vmul.f32 %v2856, %v2854
        %v2858 = vxor.u32 %v2857, 2147483648
        %v2859 = vsel %vm2776, %v2858, %v2857
        %v2860 = vsub.s32 4, %v2836
        %v2861 = vsel %vm2776, %v2860, %v2836
        %v2862 = vsel %vm2775, %v1316, %v2859
        %v2863 = vsel %vm2775, 0, %v2861
        %v2864 = vcosq.f32.pop %v2862
        %v2865 = vsinq.f32.pop %v2862
        %vm2866 = vweird.f32 %v1316
        %v2867 = vadd.s32 %v2863, 3
        %v2868 = vand.u32 %v2867, 3
        %vm2869 = vcmp.lt.s32.totalorder %v2868, 2
        %vm2870 = vcmp.eq.s32.totalorder %v2868, 0
        %v2871 = vxor.u32 %v2865, 2147483648
        %v2872 = vsel %vm2870, %v2864, %v2871
        %vm2873 = vcmp.eq.s32.totalorder %v2868, 2
        %v2874 = vxor.u32 %v2864, 2147483648
        %v2875 = vsel %vm2873, %v2874, %v2865
        %v2876 = vsel %vm2869, %v2872, %v2875
        %v2877 = vsel %vm2866, nan, %v2876
        %v2878 = vand.u32 2147483647, %v1317
        %vm2879 = vcmp.le.f32.partialorder %v2878, 0.7853982
        %vm2880 = vcmp.lt.s32.totalorder %v1317, 0
        %v2881 = vand.u32 %v1317, 2139095040
        %v2882 = vshrl.u32 %v2881, 23
        %v2883 = vsub.s32 %v2882, 127
        %v2884 = vand.u32 2147483647, %v1317
        %v2885 = vand.u32 %v2884, 8388607
        %v2886 = vor.u32 %v2885, 8388608
        %v2887 = vsub.s32 0, %v2886
        %v2888 = vadd.s32 %v2883, 1
        %vm2889 = vcmp.gt.s32.totalorder %v2888, 0
        %v2890 = vsel %vm2889, %v2888, 0
        %v2891 = vshrl.u32 %v2890, 5
        %v2892 = vand.u32 %v2890, 31
        %v2893 = vsub.s32 32, %v2892
        %v2894 = vshrl.u32 683565275, %v2893
        %v2895 = vshll.u32 683565275, %v2892
        %v2896 = vshrl.u32 2475754826, %v2893
        %v2897 = vor.u32 %v2895, %v2896
        %v2898 = vshll.u32 2475754826, %v2892
        %v2899 = vshrl.u32 2131351028, %v2893
        %v2900 = vor.u32 %v2898, %v2899
        %v2901 = vshll.u32 2131351028, %v2892
        %v2902 = vshrl.u32 2102212464, %v2893
        %v2903 = vor.u32 %v2901, %v2902
        %v2904 = vshll.u32 2102212464, %v2892
        %v2905 = vshrl.u32 920167782, %v2893
        %v2906 = vor.u32 %v2904, %v2905
        %v2907 = vshll.u32 920167782, %v2892
        %v2908 = vshrl.u32 1326507024, %v2893
        %v2909 = vor.u32 %v2907, %v2908
        %vm2910 = vcmp.lt.s32.totalorder %v2891, 1
        %vm2911 = vcmp.lt.s32.totalorder %v2891, 2
        %vm2912 = vcmp.lt.s32.totalorder %v2891, 3
        %vm2913 = vcmp.lt.s32.totalorder %v2891, 4
        %v2914 = vsel %vm2910, %v2894, %v2897
        %v2915 = vsel %vm2913, %v2903, 2102212464
        %v2916 = vsel %vm2912, %v2900, %v2915
        %v2917 = vsel %vm2911, %v2914, %v2916
        %v2918 = vsel %vm2910, %v2897, %v2900
        %v2919 = vsel %vm2913, %v2906, 920167782
        %v2920 = vsel %vm2912, %v2903, %v2919
        %v2921 = vsel %vm2911, %v2918, %v2920
        %v2922 = vsel %vm2910, %v2900, %v2903
        %v2923 = vsel %vm2913, %v2909, 1326507024
        %v2924 = vsel %vm2912, %v2906, %v2923
        %v2925 = vsel %vm2911, %v2922, %v2924
        %v2926 = vshll.u32 %v2886, 8
        %v2927 = vmul.u32.u64.compose %v2926, %v2925
        %v2928 = vextract.low.u32 %v2927
        %v2929 = vextract.high.u32 %v2927
        %v2930 = vmul.u32.u64.compose %v2926, %v2921
        %v2931 = vextract.low.u32 %v2930
        %v2932 = vextract.high.u32 %v2930
        %v2933 = vmul.u32 %v2926, %v2917
        %v2934 = vadd.s32 %v2929, %v2931
        %vm2935 = vc.u32 %v2929, %v2931
        %v2936 = vadd.s32 %v2932, 1
        %v2937 = vsel %vm2935, %v2936, %v2932
        %v2938 = vadd.s32 %v2933, %v2937
        %v2939 = vadd.s32 %v2938, 536870912
        %v2940 = vshrl.u32 %v2939, 30
        %v2941 = vshll.u32 %v2940, 30
        %v2942 = vsub.s32 %v2938, %v2941
        %vm2943 = vcmp.lt.s32.totalorder %v2942, 0
        %v2944 = vsub.s32 0, %v2942
        %v2945 = vsel %vm2943, %v2944, %v2942
        %v2946 = vclz %v2945
        %v2947 = vsub.s32 %v2946, 2
        %vm2948 = vcmp.gt.s32.totalorder 0, %v2947
        %v2949 = vsel %vm2948, 0, %v2947
        %v2950 = vsub.s32 32, %v2949
        %v2951 = vshll.u32 %v2942, %v2949
        %v2952 = vshrl.u32 %v2934, %v2950
        %v2953 = vor.u32 %v2951, %v2952
        %v2954 = vsub.s32 4294967266, %v2949
        %v2955 = vadd.s32 %v2954, 127
        %v2956 = vshll.u32 %v2955, 23
        %v2957 = vor.u32 4788187, %v2956
        %v2958 = vand.u32 2147483647, %v2957
        %v2960 = vcvt.s32.f32 %v2953
        %v2961 = vmul.f32 %v2960, %v2958
        %v2962 = vxor.u32 %v2961, 2147483648
        %v2963 = vsel %vm2880, %v2962, %v2961
        %v2964 = vsub.s32 4, %v2940
        %v2965 = vsel %vm2880, %v2964, %v2940
        %v2966 = vsel %vm2879, %v1317, %v2963
        %v2967 = vsel %vm2879, 0, %v2965
        %v2968 = vcosq.f32.pop %v2966
        %v2969 = vsinq.f32.pop %v2966
        %vm2970 = vweird.f32 %v1317
        %v2971 = vadd.s32 %v2967, 3
        %v2972 = vand.u32 %v2971, 3
        %vm2973 = vcmp.lt.s32.totalorder %v2972, 2
        %vm2974 = vcmp.eq.s32.totalorder %v2972, 0
        %v2975 = vxor.u32 %v2969, 2147483648
        %v2976 = vsel %vm2974, %v2968, %v2975
        %vm2977 = vcmp.eq.s32.totalorder %v2972, 2
        %v2978 = vxor.u32 %v2968, 2147483648
        %v2979 = vsel %vm2977, %v2978, %v2969
        %v2980 = vsel %vm2973, %v2976, %v2979
        %v2981 = vsel %vm2970, nan, %v2980
        %2982 = vst [vmem:[%s203] sm:$0xff] %v1421
        %2983 = vst [vmem:[%s203 + $0x8] sm:$0xff] %v1525
        %2984 = vst [vmem:[%s203 + $0x10] sm:$0xff] %v1629
        %2985 = vst [vmem:[%s203 + $0x18] sm:$0xff] %v1733
        %2986 = vst [vmem:[%s203 + $0x20] sm:$0xff] %v1837
        %2987 = vst [vmem:[%s203 + $0x28] sm:$0xff] %v1941
        %2988 = vst [vmem:[%s203 + $0x30] sm:$0xff] %v2045
        %2989 = vst [vmem:[%s203 + $0x38] sm:$0xff] %v2149
        %2990 = vst [vmem:[%s203 + $0x40] sm:$0xff] %v2253
        %2991 = vst [vmem:[%s203 + $0x48] sm:$0xff] %v2357
        %2992 = vst [vmem:[%s203 + $0x50] sm:$0xff] %v2461
        %2993 = vst [vmem:[%s203 + $0x58] sm:$0xff] %v2565
        %2994 = vst [vmem:[%s203 + $0x60] sm:$0xff] %v2669
        %2995 = vst [vmem:[%s203 + $0x68] sm:$0xff] %v2773
        %2996 = vst [vmem:[%s203 + $0x70] sm:$0xff] %v2877
        %2997 = vst [vmem:[%s203 + $0x78] sm:$0xff] %v2981
        %v2998 = vlaneseq
        %v2999 = vshrl.u32 %v2998, 7
        %v3000 = vsub.s32 0, %v2999
        %v3001 = vrot.slane %v1180, %v3000
        %v3002 = vlaneseq
        %v3003 = vshrl.u32 %v3002, 7
        %v3004 = vsub.s32 0, %v3003
        %v3005 = vrot.slane %v1181, %v3004
        %v3006 = vmul.f32 %v3001, %v1209
        %v3007 = vmul.f32 %v3005, %v1209
        %v3008 = vmul.f32 %v3001, %v1214
        %v3009 = vmul.f32 %v3005, %v1214
        %v3010 = vmul.f32 %v3001, %v1219
        %v3011 = vmul.f32 %v3005, %v1219
        %v3012 = vmul.f32 %v3001, %v1224
        %v3013 = vmul.f32 %v3005, %v1224
        %v3014 = vmul.f32 %v3001, %v1229
        %v3015 = vmul.f32 %v3005, %v1229
        %v3016 = vmul.f32 %v3001, %v1234
        %v3017 = vmul.f32 %v3005, %v1234
        %v3018 = vmul.f32 %v3001, %v1239
        %v3019 = vmul.f32 %v3005, %v1239
        %v3020 = vmul.f32 %v3001, %v1244
        %v3021 = vmul.f32 %v3005, %v1244
        %v3022 = vadd.f32 %v3006, %v1265
        %v3023 = vadd.f32 %v3007, %v1265
        %v3024 = vadd.f32 %v3008, %v1270
        %v3025 = vadd.f32 %v3009, %v1270
        %v3026 = vadd.f32 %v3010, %v1275
        %v3027 = vadd.f32 %v3011, %v1275
        %v3028 = vadd.f32 %v3012, %v1280
        %v3029 = vadd.f32 %v3013, %v1280
        %v3030 = vadd.f32 %v3014, %v1285
        %v3031 = vadd.f32 %v3015, %v1285
        %v3032 = vadd.f32 %v3016, %v1290
        %v3033 = vadd.f32 %v3017, %v1290
        %v3034 = vadd.f32 %v3018, %v1295
        %v3035 = vadd.f32 %v3019, %v1295
        %v3036 = vadd.f32 %v3020, %v1300
        %v3037 = vadd.f32 %v3021, %v1300
        %v3038 = vand.u32 2147483647, %v3022
        %vm3039 = vcmp.le.f32.partialorder %v3038, 0.7853982
        %vm3040 = vcmp.lt.s32.totalorder %v3022, 0
        %v3041 = vand.u32 %v3022, 2139095040
        %v3042 = vshrl.u32 %v3041, 23
        %v3043 = vsub.s32 %v3042, 127
        %v3044 = vand.u32 2147483647, %v3022
        %v3045 = vand.u32 %v3044, 8388607
        %v3046 = vor.u32 %v3045, 8388608
        %v3047 = vsub.s32 0, %v3046
        %v3048 = vadd.s32 %v3043, 1
        %vm3049 = vcmp.gt.s32.totalorder %v3048, 0
        %v3050 = vsel %vm3049, %v3048, 0
        %v3051 = vshrl.u32 %v3050, 5
        %v3052 = vand.u32 %v3050, 31
        %v3053 = vsub.s32 32, %v3052
        %v3054 = vshrl.u32 683565275, %v3053
        %v3055 = vshll.u32 683565275, %v3052
        %v3056 = vshrl.u32 2475754826, %v3053
        %v3057 = vor.u32 %v3055, %v3056
        %v3058 = vshll.u32 2475754826, %v3052
        %v3059 = vshrl.u32 2131351028, %v3053
        %v3060 = vor.u32 %v3058, %v3059
        %v3061 = vshll.u32 2131351028, %v3052
        %v3062 = vshrl.u32 2102212464, %v3053
        %v3063 = vor.u32 %v3061, %v3062
        %v3064 = vshll.u32 2102212464, %v3052
        %v3065 = vshrl.u32 920167782, %v3053
        %v3066 = vor.u32 %v3064, %v3065
        %v3067 = vshll.u32 920167782, %v3052
        %v3068 = vshrl.u32 1326507024, %v3053
        %v3069 = vor.u32 %v3067, %v3068
        %vm3070 = vcmp.lt.s32.totalorder %v3051, 1
        %vm3071 = vcmp.lt.s32.totalorder %v3051, 2
        %vm3072 = vcmp.lt.s32.totalorder %v3051, 3
        %vm3073 = vcmp.lt.s32.totalorder %v3051, 4
        %v3074 = vsel %vm3070, %v3054, %v3057
        %v3075 = vsel %vm3073, %v3063, 2102212464
        %v3076 = vsel %vm3072, %v3060, %v3075
        %v3077 = vsel %vm3071, %v3074, %v3076
        %v3078 = vsel %vm3070, %v3057, %v3060
        %v3079 = vsel %vm3073, %v3066, 920167782
        %v3080 = vsel %vm3072, %v3063, %v3079
        %v3081 = vsel %vm3071, %v3078, %v3080
        %v3082 = vsel %vm3070, %v3060, %v3063
        %v3083 = vsel %vm3073, %v3069, 1326507024
        %v3084 = vsel %vm3072, %v3066, %v3083
        %v3085 = vsel %vm3071, %v3082, %v3084
        %v3086 = vshll.u32 %v3046, 8
        %v3087 = vmul.u32.u64.compose %v3086, %v3085
        %v3088 = vextract.low.u32 %v3087
        %v3089 = vextract.high.u32 %v3087
        %v3090 = vmul.u32.u64.compose %v3086, %v3081
        %v3091 = vextract.low.u32 %v3090
        %v3092 = vextract.high.u32 %v3090
        %v3093 = vmul.u32 %v3086, %v3077
        %v3094 = vadd.s32 %v3089, %v3091
        %vm3095 = vc.u32 %v3089, %v3091
        %v3096 = vadd.s32 %v3092, 1
        %v3097 = vsel %vm3095, %v3096, %v3092
        %v3098 = vadd.s32 %v3093, %v3097
        %v3099 = vadd.s32 %v3098, 536870912
        %v3100 = vshrl.u32 %v3099, 30
        %v3101 = vshll.u32 %v3100, 30
        %v3102 = vsub.s32 %v3098, %v3101
        %vm3103 = vcmp.lt.s32.totalorder %v3102, 0
        %v3104 = vsub.s32 0, %v3102
        %v3105 = vsel %vm3103, %v3104, %v3102
        %v3106 = vclz %v3105
        %v3107 = vsub.s32 %v3106, 2
        %vm3108 = vcmp.gt.s32.totalorder 0, %v3107
        %v3109 = vsel %vm3108, 0, %v3107
        %v3110 = vsub.s32 32, %v3109
        %v3111 = vshll.u32 %v3102, %v3109
        %v3112 = vshrl.u32 %v3094, %v3110
        %v3113 = vor.u32 %v3111, %v3112
        %v3114 = vsub.s32 4294967266, %v3109
        %v3115 = vadd.s32 %v3114, 127
        %v3116 = vshll.u32 %v3115, 23
        %v3117 = vor.u32 4788187, %v3116
        %v3118 = vand.u32 2147483647, %v3117
        %v3120 = vcvt.s32.f32 %v3113
        %v3121 = vmul.f32 %v3120, %v3118
        %v3122 = vxor.u32 %v3121, 2147483648
        %v3123 = vsel %vm3040, %v3122, %v3121
        %v3124 = vsub.s32 4, %v3100
        %v3125 = vsel %vm3040, %v3124, %v3100
        %v3126 = vsel %vm3039, %v3022, %v3123
        %v3127 = vsel %vm3039, 0, %v3125
        %v3128 = vcosq.f32.pop %v3126
        %v3129 = vsinq.f32.pop %v3126
        %vm3130 = vweird.f32 %v3022
        %v3131 = vadd.s32 %v3127, 3
        %v3132 = vand.u32 %v3131, 3
        %vm3133 = vcmp.lt.s32.totalorder %v3132, 2
        %vm3134 = vcmp.eq.s32.totalorder %v3132, 0
        %v3135 = vxor.u32 %v3129, 2147483648
        %v3136 = vsel %vm3134, %v3128, %v3135
        %vm3137 = vcmp.eq.s32.totalorder %v3132, 2
        %v3138 = vxor.u32 %v3128, 2147483648
        %v3139 = vsel %vm3137, %v3138, %v3129
        %v3140 = vsel %vm3133, %v3136, %v3139
        %v3141 = vsel %vm3130, nan, %v3140
        %v3142 = vand.u32 2147483647, %v3023
        %vm3143 = vcmp.le.f32.partialorder %v3142, 0.7853982
        %vm3144 = vcmp.lt.s32.totalorder %v3023, 0
        %v3145 = vand.u32 %v3023, 2139095040
        %v3146 = vshrl.u32 %v3145, 23
        %v3147 = vsub.s32 %v3146, 127
        %v3148 = vand.u32 2147483647, %v3023
        %v3149 = vand.u32 %v3148, 8388607
        %v3150 = vor.u32 %v3149, 8388608
        %v3151 = vsub.s32 0, %v3150
        %v3152 = vadd.s32 %v3147, 1
        %vm3153 = vcmp.gt.s32.totalorder %v3152, 0
        %v3154 = vsel %vm3153, %v3152, 0
        %v3155 = vshrl.u32 %v3154, 5
        %v3156 = vand.u32 %v3154, 31
        %v3157 = vsub.s32 32, %v3156
        %v3158 = vshrl.u32 683565275, %v3157
        %v3159 = vshll.u32 683565275, %v3156
        %v3160 = vshrl.u32 2475754826, %v3157
        %v3161 = vor.u32 %v3159, %v3160
        %v3162 = vshll.u32 2475754826, %v3156
        %v3163 = vshrl.u32 2131351028, %v3157
        %v3164 = vor.u32 %v3162, %v3163
        %v3165 = vshll.u32 2131351028, %v3156
        %v3166 = vshrl.u32 2102212464, %v3157
        %v3167 = vor.u32 %v3165, %v3166
        %v3168 = vshll.u32 2102212464, %v3156
        %v3169 = vshrl.u32 920167782, %v3157
        %v3170 = vor.u32 %v3168, %v3169
        %v3171 = vshll.u32 920167782, %v3156
        %v3172 = vshrl.u32 1326507024, %v3157
        %v3173 = vor.u32 %v3171, %v3172
        %vm3174 = vcmp.lt.s32.totalorder %v3155, 1
        %vm3175 = vcmp.lt.s32.totalorder %v3155, 2
        %vm3176 = vcmp.lt.s32.totalorder %v3155, 3
        %vm3177 = vcmp.lt.s32.totalorder %v3155, 4
        %v3178 = vsel %vm3174, %v3158, %v3161
        %v3179 = vsel %vm3177, %v3167, 2102212464
        %v3180 = vsel %vm3176, %v3164, %v3179
        %v3181 = vsel %vm3175, %v3178, %v3180
        %v3182 = vsel %vm3174, %v3161, %v3164
        %v3183 = vsel %vm3177, %v3170, 920167782
        %v3184 = vsel %vm3176, %v3167, %v3183
        %v3185 = vsel %vm3175, %v3182, %v3184
        %v3186 = vsel %vm3174, %v3164, %v3167
        %v3187 = vsel %vm3177, %v3173, 1326507024
        %v3188 = vsel %vm3176, %v3170, %v3187
        %v3189 = vsel %vm3175, %v3186, %v3188
        %v3190 = vshll.u32 %v3150, 8
        %v3191 = vmul.u32.u64.compose %v3190, %v3189
        %v3192 = vextract.low.u32 %v3191
        %v3193 = vextract.high.u32 %v3191
        %v3194 = vmul.u32.u64.compose %v3190, %v3185
        %v3195 = vextract.low.u32 %v3194
        %v3196 = vextract.high.u32 %v3194
        %v3197 = vmul.u32 %v3190, %v3181
        %v3198 = vadd.s32 %v3193, %v3195
        %vm3199 = vc.u32 %v3193, %v3195
        %v3200 = vadd.s32 %v3196, 1
        %v3201 = vsel %vm3199, %v3200, %v3196
        %v3202 = vadd.s32 %v3197, %v3201
        %v3203 = vadd.s32 %v3202, 536870912
        %v3204 = vshrl.u32 %v3203, 30
        %v3205 = vshll.u32 %v3204, 30
        %v3206 = vsub.s32 %v3202, %v3205
        %vm3207 = vcmp.lt.s32.totalorder %v3206, 0
        %v3208 = vsub.s32 0, %v3206
        %v3209 = vsel %vm3207, %v3208, %v3206
        %v3210 = vclz %v3209
        %v3211 = vsub.s32 %v3210, 2
        %vm3212 = vcmp.gt.s32.totalorder 0, %v3211
        %v3213 = vsel %vm3212, 0, %v3211
        %v3214 = vsub.s32 32, %v3213
        %v3215 = vshll.u32 %v3206, %v3213
        %v3216 = vshrl.u32 %v3198, %v3214
        %v3217 = vor.u32 %v3215, %v3216
        %v3218 = vsub.s32 4294967266, %v3213
        %v3219 = vadd.s32 %v3218, 127
        %v3220 = vshll.u32 %v3219, 23
        %v3221 = vor.u32 4788187, %v3220
        %v3222 = vand.u32 2147483647, %v3221
        %v3224 = vcvt.s32.f32 %v3217
        %v3225 = vmul.f32 %v3224, %v3222
        %v3226 = vxor.u32 %v3225, 2147483648
        %v3227 = vsel %vm3144, %v3226, %v3225
        %v3228 = vsub.s32 4, %v3204
        %v3229 = vsel %vm3144, %v3228, %v3204
        %v3230 = vsel %vm3143, %v3023, %v3227
        %v3231 = vsel %vm3143, 0, %v3229
        %v3232 = vcosq.f32.pop %v3230
        %v3233 = vsinq.f32.pop %v3230
        %vm3234 = vweird.f32 %v3023
        %v3235 = vadd.s32 %v3231, 3
        %v3236 = vand.u32 %v3235, 3
        %vm3237 = vcmp.lt.s32.totalorder %v3236, 2
        %vm3238 = vcmp.eq.s32.totalorder %v3236, 0
        %v3239 = vxor.u32 %v3233, 2147483648
        %v3240 = vsel %vm3238, %v3232, %v3239
        %vm3241 = vcmp.eq.s32.totalorder %v3236, 2
        %v3242 = vxor.u32 %v3232, 2147483648
        %v3243 = vsel %vm3241, %v3242, %v3233
        %v3244 = vsel %vm3237, %v3240, %v3243
        %v3245 = vsel %vm3234, nan, %v3244
        %v3246 = vand.u32 2147483647, %v3024
        %vm3247 = vcmp.le.f32.partialorder %v3246, 0.7853982
        %vm3248 = vcmp.lt.s32.totalorder %v3024, 0
        %v3249 = vand.u32 %v3024, 2139095040
        %v3250 = vshrl.u32 %v3249, 23
        %v3251 = vsub.s32 %v3250, 127
        %v3252 = vand.u32 2147483647, %v3024
        %v3253 = vand.u32 %v3252, 8388607
        %v3254 = vor.u32 %v3253, 8388608
        %v3255 = vsub.s32 0, %v3254
        %v3256 = vadd.s32 %v3251, 1
        %vm3257 = vcmp.gt.s32.totalorder %v3256, 0
        %v3258 = vsel %vm3257, %v3256, 0
        %v3259 = vshrl.u32 %v3258, 5
        %v3260 = vand.u32 %v3258, 31
        %v3261 = vsub.s32 32, %v3260
        %v3262 = vshrl.u32 683565275, %v3261
        %v3263 = vshll.u32 683565275, %v3260
        %v3264 = vshrl.u32 2475754826, %v3261
        %v3265 = vor.u32 %v3263, %v3264
        %v3266 = vshll.u32 2475754826, %v3260
        %v3267 = vshrl.u32 2131351028, %v3261
        %v3268 = vor.u32 %v3266, %v3267
        %v3269 = vshll.u32 2131351028, %v3260
        %v3270 = vshrl.u32 2102212464, %v3261
        %v3271 = vor.u32 %v3269, %v3270
        %v3272 = vshll.u32 2102212464, %v3260
        %v3273 = vshrl.u32 920167782, %v3261
        %v3274 = vor.u32 %v3272, %v3273
        %v3275 = vshll.u32 920167782, %v3260
        %v3276 = vshrl.u32 1326507024, %v3261
        %v3277 = vor.u32 %v3275, %v3276
        %vm3278 = vcmp.lt.s32.totalorder %v3259, 1
        %vm3279 = vcmp.lt.s32.totalorder %v3259, 2
        %vm3280 = vcmp.lt.s32.totalorder %v3259, 3
        %vm3281 = vcmp.lt.s32.totalorder %v3259, 4
        %v3282 = vsel %vm3278, %v3262, %v3265
        %v3283 = vsel %vm3281, %v3271, 2102212464
        %v3284 = vsel %vm3280, %v3268, %v3283
        %v3285 = vsel %vm3279, %v3282, %v3284
        %v3286 = vsel %vm3278, %v3265, %v3268
        %v3287 = vsel %vm3281, %v3274, 920167782
        %v3288 = vsel %vm3280, %v3271, %v3287
        %v3289 = vsel %vm3279, %v3286, %v3288
        %v3290 = vsel %vm3278, %v3268, %v3271
        %v3291 = vsel %vm3281, %v3277, 1326507024
        %v3292 = vsel %vm3280, %v3274, %v3291
        %v3293 = vsel %vm3279, %v3290, %v3292
        %v3294 = vshll.u32 %v3254, 8
        %v3295 = vmul.u32.u64.compose %v3294, %v3293
        %v3296 = vextract.low.u32 %v3295
        %v3297 = vextract.high.u32 %v3295
        %v3298 = vmul.u32.u64.compose %v3294, %v3289
        %v3299 = vextract.low.u32 %v3298
        %v3300 = vextract.high.u32 %v3298
        %v3301 = vmul.u32 %v3294, %v3285
        %v3302 = vadd.s32 %v3297, %v3299
        %vm3303 = vc.u32 %v3297, %v3299
        %v3304 = vadd.s32 %v3300, 1
        %v3305 = vsel %vm3303, %v3304, %v3300
        %v3306 = vadd.s32 %v3301, %v3305
        %v3307 = vadd.s32 %v3306, 536870912
        %v3308 = vshrl.u32 %v3307, 30
        %v3309 = vshll.u32 %v3308, 30
        %v3310 = vsub.s32 %v3306, %v3309
        %vm3311 = vcmp.lt.s32.totalorder %v3310, 0
        %v3312 = vsub.s32 0, %v3310
        %v3313 = vsel %vm3311, %v3312, %v3310
        %v3314 = vclz %v3313
        %v3315 = vsub.s32 %v3314, 2
        %vm3316 = vcmp.gt.s32.totalorder 0, %v3315
        %v3317 = vsel %vm3316, 0, %v3315
        %v3318 = vsub.s32 32, %v3317
        %v3319 = vshll.u32 %v3310, %v3317
        %v3320 = vshrl.u32 %v3302, %v3318
        %v3321 = vor.u32 %v3319, %v3320
        %v3322 = vsub.s32 4294967266, %v3317
        %v3323 = vadd.s32 %v3322, 127
        %v3324 = vshll.u32 %v3323, 23
        %v3325 = vor.u32 4788187, %v3324
        %v3326 = vand.u32 2147483647, %v3325
        %v3328 = vcvt.s32.f32 %v3321
        %v3329 = vmul.f32 %v3328, %v3326
        %v3330 = vxor.u32 %v3329, 2147483648
        %v3331 = vsel %vm3248, %v3330, %v3329
        %v3332 = vsub.s32 4, %v3308
        %v3333 = vsel %vm3248, %v3332, %v3308
        %v3334 = vsel %vm3247, %v3024, %v3331
        %v3335 = vsel %vm3247, 0, %v3333
        %v3336 = vcosq.f32.pop %v3334
        %v3337 = vsinq.f32.pop %v3334
        %vm3338 = vweird.f32 %v3024
        %v3339 = vadd.s32 %v3335, 3
        %v3340 = vand.u32 %v3339, 3
        %vm3341 = vcmp.lt.s32.totalorder %v3340, 2
        %vm3342 = vcmp.eq.s32.totalorder %v3340, 0
        %v3343 = vxor.u32 %v3337, 2147483648
        %v3344 = vsel %vm3342, %v3336, %v3343
        %vm3345 = vcmp.eq.s32.totalorder %v3340, 2
        %v3346 = vxor.u32 %v3336, 2147483648
        %v3347 = vsel %vm3345, %v3346, %v3337
        %v3348 = vsel %vm3341, %v3344, %v3347
        %v3349 = vsel %vm3338, nan, %v3348
        %v3350 = vand.u32 2147483647, %v3025
        %vm3351 = vcmp.le.f32.partialorder %v3350, 0.7853982
        %vm3352 = vcmp.lt.s32.totalorder %v3025, 0
        %v3353 = vand.u32 %v3025, 2139095040
        %v3354 = vshrl.u32 %v3353, 23
        %v3355 = vsub.s32 %v3354, 127
        %v3356 = vand.u32 2147483647, %v3025
        %v3357 = vand.u32 %v3356, 8388607
        %v3358 = vor.u32 %v3357, 8388608
        %v3359 = vsub.s32 0, %v3358
        %v3360 = vadd.s32 %v3355, 1
        %vm3361 = vcmp.gt.s32.totalorder %v3360, 0
        %v3362 = vsel %vm3361, %v3360, 0
        %v3363 = vshrl.u32 %v3362, 5
        %v3364 = vand.u32 %v3362, 31
        %v3365 = vsub.s32 32, %v3364
        %v3366 = vshrl.u32 683565275, %v3365
        %v3367 = vshll.u32 683565275, %v3364
        %v3368 = vshrl.u32 2475754826, %v3365
        %v3369 = vor.u32 %v3367, %v3368
        %v3370 = vshll.u32 2475754826, %v3364
        %v3371 = vshrl.u32 2131351028, %v3365
        %v3372 = vor.u32 %v3370, %v3371
        %v3373 = vshll.u32 2131351028, %v3364
        %v3374 = vshrl.u32 2102212464, %v3365
        %v3375 = vor.u32 %v3373, %v3374
        %v3376 = vshll.u32 2102212464, %v3364
        %v3377 = vshrl.u32 920167782, %v3365
        %v3378 = vor.u32 %v3376, %v3377
        %v3379 = vshll.u32 920167782, %v3364
        %v3380 = vshrl.u32 1326507024, %v3365
        %v3381 = vor.u32 %v3379, %v3380
        %vm3382 = vcmp.lt.s32.totalorder %v3363, 1
        %vm3383 = vcmp.lt.s32.totalorder %v3363, 2
        %vm3384 = vcmp.lt.s32.totalorder %v3363, 3
        %vm3385 = vcmp.lt.s32.totalorder %v3363, 4
        %v3386 = vsel %vm3382, %v3366, %v3369
        %v3387 = vsel %vm3385, %v3375, 2102212464
        %v3388 = vsel %vm3384, %v3372, %v3387
        %v3389 = vsel %vm3383, %v3386, %v3388
        %v3390 = vsel %vm3382, %v3369, %v3372
        %v3391 = vsel %vm3385, %v3378, 920167782
        %v3392 = vsel %vm3384, %v3375, %v3391
        %v3393 = vsel %vm3383, %v3390, %v3392
        %v3394 = vsel %vm3382, %v3372, %v3375
        %v3395 = vsel %vm3385, %v3381, 1326507024
        %v3396 = vsel %vm3384, %v3378, %v3395
        %v3397 = vsel %vm3383, %v3394, %v3396
        %v3398 = vshll.u32 %v3358, 8
        %v3399 = vmul.u32.u64.compose %v3398, %v3397
        %v3400 = vextract.low.u32 %v3399
        %v3401 = vextract.high.u32 %v3399
        %v3402 = vmul.u32.u64.compose %v3398, %v3393
        %v3403 = vextract.low.u32 %v3402
        %v3404 = vextract.high.u32 %v3402
        %v3405 = vmul.u32 %v3398, %v3389
        %v3406 = vadd.s32 %v3401, %v3403
        %vm3407 = vc.u32 %v3401, %v3403
        %v3408 = vadd.s32 %v3404, 1
        %v3409 = vsel %vm3407, %v3408, %v3404
        %v3410 = vadd.s32 %v3405, %v3409
        %v3411 = vadd.s32 %v3410, 536870912
        %v3412 = vshrl.u32 %v3411, 30
        %v3413 = vshll.u32 %v3412, 30
        %v3414 = vsub.s32 %v3410, %v3413
        %vm3415 = vcmp.lt.s32.totalorder %v3414, 0
        %v3416 = vsub.s32 0, %v3414
        %v3417 = vsel %vm3415, %v3416, %v3414
        %v3418 = vclz %v3417
        %v3419 = vsub.s32 %v3418, 2
        %vm3420 = vcmp.gt.s32.totalorder 0, %v3419
        %v3421 = vsel %vm3420, 0, %v3419
        %v3422 = vsub.s32 32, %v3421
        %v3423 = vshll.u32 %v3414, %v3421
        %v3424 = vshrl.u32 %v3406, %v3422
        %v3425 = vor.u32 %v3423, %v3424
        %v3426 = vsub.s32 4294967266, %v3421
        %v3427 = vadd.s32 %v3426, 127
        %v3428 = vshll.u32 %v3427, 23
        %v3429 = vor.u32 4788187, %v3428
        %v3430 = vand.u32 2147483647, %v3429
        %v3432 = vcvt.s32.f32 %v3425
        %v3433 = vmul.f32 %v3432, %v3430
        %v3434 = vxor.u32 %v3433, 2147483648
        %v3435 = vsel %vm3352, %v3434, %v3433
        %v3436 = vsub.s32 4, %v3412
        %v3437 = vsel %vm3352, %v3436, %v3412
        %v3438 = vsel %vm3351, %v3025, %v3435
        %v3439 = vsel %vm3351, 0, %v3437
        %v3440 = vcosq.f32.pop %v3438
        %v3441 = vsinq.f32.pop %v3438
        %vm3442 = vweird.f32 %v3025
        %v3443 = vadd.s32 %v3439, 3
        %v3444 = vand.u32 %v3443, 3
        %vm3445 = vcmp.lt.s32.totalorder %v3444, 2
        %vm3446 = vcmp.eq.s32.totalorder %v3444, 0
        %v3447 = vxor.u32 %v3441, 2147483648
        %v3448 = vsel %vm3446, %v3440, %v3447
        %vm3449 = vcmp.eq.s32.totalorder %v3444, 2
        %v3450 = vxor.u32 %v3440, 2147483648
        %v3451 = vsel %vm3449, %v3450, %v3441
        %v3452 = vsel %vm3445, %v3448, %v3451
        %v3453 = vsel %vm3442, nan, %v3452
        %v3454 = vand.u32 2147483647, %v3026
        %vm3455 = vcmp.le.f32.partialorder %v3454, 0.7853982
        %vm3456 = vcmp.lt.s32.totalorder %v3026, 0
        %v3457 = vand.u32 %v3026, 2139095040
        %v3458 = vshrl.u32 %v3457, 23
        %v3459 = vsub.s32 %v3458, 127
        %v3460 = vand.u32 2147483647, %v3026
        %v3461 = vand.u32 %v3460, 8388607
        %v3462 = vor.u32 %v3461, 8388608
        %v3463 = vsub.s32 0, %v3462
        %v3464 = vadd.s32 %v3459, 1
        %vm3465 = vcmp.gt.s32.totalorder %v3464, 0
        %v3466 = vsel %vm3465, %v3464, 0
        %v3467 = vshrl.u32 %v3466, 5
        %v3468 = vand.u32 %v3466, 31
        %v3469 = vsub.s32 32, %v3468
        %v3470 = vshrl.u32 683565275, %v3469
        %v3471 = vshll.u32 683565275, %v3468
        %v3472 = vshrl.u32 2475754826, %v3469
        %v3473 = vor.u32 %v3471, %v3472
        %v3474 = vshll.u32 2475754826, %v3468
        %v3475 = vshrl.u32 2131351028, %v3469
        %v3476 = vor.u32 %v3474, %v3475
        %v3477 = vshll.u32 2131351028, %v3468
        %v3478 = vshrl.u32 2102212464, %v3469
        %v3479 = vor.u32 %v3477, %v3478
        %v3480 = vshll.u32 2102212464, %v3468
        %v3481 = vshrl.u32 920167782, %v3469
        %v3482 = vor.u32 %v3480, %v3481
        %v3483 = vshll.u32 920167782, %v3468
        %v3484 = vshrl.u32 1326507024, %v3469
        %v3485 = vor.u32 %v3483, %v3484
        %vm3486 = vcmp.lt.s32.totalorder %v3467, 1
        %vm3487 = vcmp.lt.s32.totalorder %v3467, 2
        %vm3488 = vcmp.lt.s32.totalorder %v3467, 3
        %vm3489 = vcmp.lt.s32.totalorder %v3467, 4
        %v3490 = vsel %vm3486, %v3470, %v3473
        %v3491 = vsel %vm3489, %v3479, 2102212464
        %v3492 = vsel %vm3488, %v3476, %v3491
        %v3493 = vsel %vm3487, %v3490, %v3492
        %v3494 = vsel %vm3486, %v3473, %v3476
        %v3495 = vsel %vm3489, %v3482, 920167782
        %v3496 = vsel %vm3488, %v3479, %v3495
        %v3497 = vsel %vm3487, %v3494, %v3496
        %v3498 = vsel %vm3486, %v3476, %v3479
        %v3499 = vsel %vm3489, %v3485, 1326507024
        %v3500 = vsel %vm3488, %v3482, %v3499
        %v3501 = vsel %vm3487, %v3498, %v3500
        %v3502 = vshll.u32 %v3462, 8
        %v3503 = vmul.u32.u64.compose %v3502, %v3501
        %v3504 = vextract.low.u32 %v3503
        %v3505 = vextract.high.u32 %v3503
        %v3506 = vmul.u32.u64.compose %v3502, %v3497
        %v3507 = vextract.low.u32 %v3506
        %v3508 = vextract.high.u32 %v3506
        %v3509 = vmul.u32 %v3502, %v3493
        %v3510 = vadd.s32 %v3505, %v3507
        %vm3511 = vc.u32 %v3505, %v3507
        %v3512 = vadd.s32 %v3508, 1
        %v3513 = vsel %vm3511, %v3512, %v3508
        %v3514 = vadd.s32 %v3509, %v3513
        %v3515 = vadd.s32 %v3514, 536870912
        %v3516 = vshrl.u32 %v3515, 30
        %v3517 = vshll.u32 %v3516, 30
        %v3518 = vsub.s32 %v3514, %v3517
        %vm3519 = vcmp.lt.s32.totalorder %v3518, 0
        %v3520 = vsub.s32 0, %v3518
        %v3521 = vsel %vm3519, %v3520, %v3518
        %v3522 = vclz %v3521
        %v3523 = vsub.s32 %v3522, 2
        %vm3524 = vcmp.gt.s32.totalorder 0, %v3523
        %v3525 = vsel %vm3524, 0, %v3523
        %v3526 = vsub.s32 32, %v3525
        %v3527 = vshll.u32 %v3518, %v3525
        %v3528 = vshrl.u32 %v3510, %v3526
        %v3529 = vor.u32 %v3527, %v3528
        %v3530 = vsub.s32 4294967266, %v3525
        %v3531 = vadd.s32 %v3530, 127
        %v3532 = vshll.u32 %v3531, 23
        %v3533 = vor.u32 4788187, %v3532
        %v3534 = vand.u32 2147483647, %v3533
        %v3536 = vcvt.s32.f32 %v3529
        %v3537 = vmul.f32 %v3536, %v3534
        %v3538 = vxor.u32 %v3537, 2147483648
        %v3539 = vsel %vm3456, %v3538, %v3537
        %v3540 = vsub.s32 4, %v3516
        %v3541 = vsel %vm3456, %v3540, %v3516
        %v3542 = vsel %vm3455, %v3026, %v3539
        %v3543 = vsel %vm3455, 0, %v3541
        %v3544 = vcosq.f32.pop %v3542
        %v3545 = vsinq.f32.pop %v3542
        %vm3546 = vweird.f32 %v3026
        %v3547 = vadd.s32 %v3543, 3
        %v3548 = vand.u32 %v3547, 3
        %vm3549 = vcmp.lt.s32.totalorder %v3548, 2
        %vm3550 = vcmp.eq.s32.totalorder %v3548, 0
        %v3551 = vxor.u32 %v3545, 2147483648
        %v3552 = vsel %vm3550, %v3544, %v3551
        %vm3553 = vcmp.eq.s32.totalorder %v3548, 2
        %v3554 = vxor.u32 %v3544, 2147483648
        %v3555 = vsel %vm3553, %v3554, %v3545
        %v3556 = vsel %vm3549, %v3552, %v3555
        %v3557 = vsel %vm3546, nan, %v3556
        %v3558 = vand.u32 2147483647, %v3027
        %vm3559 = vcmp.le.f32.partialorder %v3558, 0.7853982
        %vm3560 = vcmp.lt.s32.totalorder %v3027, 0
        %v3561 = vand.u32 %v3027, 2139095040
        %v3562 = vshrl.u32 %v3561, 23
        %v3563 = vsub.s32 %v3562, 127
        %v3564 = vand.u32 2147483647, %v3027
        %v3565 = vand.u32 %v3564, 8388607
        %v3566 = vor.u32 %v3565, 8388608
        %v3567 = vsub.s32 0, %v3566
        %v3568 = vadd.s32 %v3563, 1
        %vm3569 = vcmp.gt.s32.totalorder %v3568, 0
        %v3570 = vsel %vm3569, %v3568, 0
        %v3571 = vshrl.u32 %v3570, 5
        %v3572 = vand.u32 %v3570, 31
        %v3573 = vsub.s32 32, %v3572
        %v3574 = vshrl.u32 683565275, %v3573
        %v3575 = vshll.u32 683565275, %v3572
        %v3576 = vshrl.u32 2475754826, %v3573
        %v3577 = vor.u32 %v3575, %v3576
        %v3578 = vshll.u32 2475754826, %v3572
        %v3579 = vshrl.u32 2131351028, %v3573
        %v3580 = vor.u32 %v3578, %v3579
        %v3581 = vshll.u32 2131351028, %v3572
        %v3582 = vshrl.u32 2102212464, %v3573
        %v3583 = vor.u32 %v3581, %v3582
        %v3584 = vshll.u32 2102212464, %v3572
        %v3585 = vshrl.u32 920167782, %v3573
        %v3586 = vor.u32 %v3584, %v3585
        %v3587 = vshll.u32 920167782, %v3572
        %v3588 = vshrl.u32 1326507024, %v3573
        %v3589 = vor.u32 %v3587, %v3588
        %vm3590 = vcmp.lt.s32.totalorder %v3571, 1
        %vm3591 = vcmp.lt.s32.totalorder %v3571, 2
        %vm3592 = vcmp.lt.s32.totalorder %v3571, 3
        %vm3593 = vcmp.lt.s32.totalorder %v3571, 4
        %v3594 = vsel %vm3590, %v3574, %v3577
        %v3595 = vsel %vm3593, %v3583, 2102212464
        %v3596 = vsel %vm3592, %v3580, %v3595
        %v3597 = vsel %vm3591, %v3594, %v3596
        %v3598 = vsel %vm3590, %v3577, %v3580
        %v3599 = vsel %vm3593, %v3586, 920167782
        %v3600 = vsel %vm3592, %v3583, %v3599
        %v3601 = vsel %vm3591, %v3598, %v3600
        %v3602 = vsel %vm3590, %v3580, %v3583
        %v3603 = vsel %vm3593, %v3589, 1326507024
        %v3604 = vsel %vm3592, %v3586, %v3603
        %v3605 = vsel %vm3591, %v3602, %v3604
        %v3606 = vshll.u32 %v3566, 8
        %v3607 = vmul.u32.u64.compose %v3606, %v3605
        %v3608 = vextract.low.u32 %v3607
        %v3609 = vextract.high.u32 %v3607
        %v3610 = vmul.u32.u64.compose %v3606, %v3601
        %v3611 = vextract.low.u32 %v3610
        %v3612 = vextract.high.u32 %v3610
        %v3613 = vmul.u32 %v3606, %v3597
        %v3614 = vadd.s32 %v3609, %v3611
        %vm3615 = vc.u32 %v3609, %v3611
        %v3616 = vadd.s32 %v3612, 1
        %v3617 = vsel %vm3615, %v3616, %v3612
        %v3618 = vadd.s32 %v3613, %v3617
        %v3619 = vadd.s32 %v3618, 536870912
        %v3620 = vshrl.u32 %v3619, 30
        %v3621 = vshll.u32 %v3620, 30
        %v3622 = vsub.s32 %v3618, %v3621
        %vm3623 = vcmp.lt.s32.totalorder %v3622, 0
        %v3624 = vsub.s32 0, %v3622
        %v3625 = vsel %vm3623, %v3624, %v3622
        %v3626 = vclz %v3625
        %v3627 = vsub.s32 %v3626, 2
        %vm3628 = vcmp.gt.s32.totalorder 0, %v3627
        %v3629 = vsel %vm3628, 0, %v3627
        %v3630 = vsub.s32 32, %v3629
        %v3631 = vshll.u32 %v3622, %v3629
        %v3632 = vshrl.u32 %v3614, %v3630
        %v3633 = vor.u32 %v3631, %v3632
        %v3634 = vsub.s32 4294967266, %v3629
        %v3635 = vadd.s32 %v3634, 127
        %v3636 = vshll.u32 %v3635, 23
        %v3637 = vor.u32 4788187, %v3636
        %v3638 = vand.u32 2147483647, %v3637
        %v3640 = vcvt.s32.f32 %v3633
        %v3641 = vmul.f32 %v3640, %v3638
        %v3642 = vxor.u32 %v3641, 2147483648
        %v3643 = vsel %vm3560, %v3642, %v3641
        %v3644 = vsub.s32 4, %v3620
        %v3645 = vsel %vm3560, %v3644, %v3620
        %v3646 = vsel %vm3559, %v3027, %v3643
        %v3647 = vsel %vm3559, 0, %v3645
        %v3648 = vcosq.f32.pop %v3646
        %v3649 = vsinq.f32.pop %v3646
        %vm3650 = vweird.f32 %v3027
        %v3651 = vadd.s32 %v3647, 3
        %v3652 = vand.u32 %v3651, 3
        %vm3653 = vcmp.lt.s32.totalorder %v3652, 2
        %vm3654 = vcmp.eq.s32.totalorder %v3652, 0
        %v3655 = vxor.u32 %v3649, 2147483648
        %v3656 = vsel %vm3654, %v3648, %v3655
        %vm3657 = vcmp.eq.s32.totalorder %v3652, 2
        %v3658 = vxor.u32 %v3648, 2147483648
        %v3659 = vsel %vm3657, %v3658, %v3649
        %v3660 = vsel %vm3653, %v3656, %v3659
        %v3661 = vsel %vm3650, nan, %v3660
        %v3662 = vand.u32 2147483647, %v3028
        %vm3663 = vcmp.le.f32.partialorder %v3662, 0.7853982
        %vm3664 = vcmp.lt.s32.totalorder %v3028, 0
        %v3665 = vand.u32 %v3028, 2139095040
        %v3666 = vshrl.u32 %v3665, 23
        %v3667 = vsub.s32 %v3666, 127
        %v3668 = vand.u32 2147483647, %v3028
        %v3669 = vand.u32 %v3668, 8388607
        %v3670 = vor.u32 %v3669, 8388608
        %v3671 = vsub.s32 0, %v3670
        %v3672 = vadd.s32 %v3667, 1
        %vm3673 = vcmp.gt.s32.totalorder %v3672, 0
        %v3674 = vsel %vm3673, %v3672, 0
        %v3675 = vshrl.u32 %v3674, 5
        %v3676 = vand.u32 %v3674, 31
        %v3677 = vsub.s32 32, %v3676
        %v3678 = vshrl.u32 683565275, %v3677
        %v3679 = vshll.u32 683565275, %v3676
        %v3680 = vshrl.u32 2475754826, %v3677
        %v3681 = vor.u32 %v3679, %v3680
        %v3682 = vshll.u32 2475754826, %v3676
        %v3683 = vshrl.u32 2131351028, %v3677
        %v3684 = vor.u32 %v3682, %v3683
        %v3685 = vshll.u32 2131351028, %v3676
        %v3686 = vshrl.u32 2102212464, %v3677
        %v3687 = vor.u32 %v3685, %v3686
        %v3688 = vshll.u32 2102212464, %v3676
        %v3689 = vshrl.u32 920167782, %v3677
        %v3690 = vor.u32 %v3688, %v3689
        %v3691 = vshll.u32 920167782, %v3676
        %v3692 = vshrl.u32 1326507024, %v3677
        %v3693 = vor.u32 %v3691, %v3692
        %vm3694 = vcmp.lt.s32.totalorder %v3675, 1
        %vm3695 = vcmp.lt.s32.totalorder %v3675, 2
        %vm3696 = vcmp.lt.s32.totalorder %v3675, 3
        %vm3697 = vcmp.lt.s32.totalorder %v3675, 4
        %v3698 = vsel %vm3694, %v3678, %v3681
        %v3699 = vsel %vm3697, %v3687, 2102212464
        %v3700 = vsel %vm3696, %v3684, %v3699
        %v3701 = vsel %vm3695, %v3698, %v3700
        %v3702 = vsel %vm3694, %v3681, %v3684
        %v3703 = vsel %vm3697, %v3690, 920167782
        %v3704 = vsel %vm3696, %v3687, %v3703
        %v3705 = vsel %vm3695, %v3702, %v3704
        %v3706 = vsel %vm3694, %v3684, %v3687
        %v3707 = vsel %vm3697, %v3693, 1326507024
        %v3708 = vsel %vm3696, %v3690, %v3707
        %v3709 = vsel %vm3695, %v3706, %v3708
        %v3710 = vshll.u32 %v3670, 8
        %v3711 = vmul.u32.u64.compose %v3710, %v3709
        %v3712 = vextract.low.u32 %v3711
        %v3713 = vextract.high.u32 %v3711
        %v3714 = vmul.u32.u64.compose %v3710, %v3705
        %v3715 = vextract.low.u32 %v3714
        %v3716 = vextract.high.u32 %v3714
        %v3717 = vmul.u32 %v3710, %v3701
        %v3718 = vadd.s32 %v3713, %v3715
        %vm3719 = vc.u32 %v3713, %v3715
        %v3720 = vadd.s32 %v3716, 1
        %v3721 = vsel %vm3719, %v3720, %v3716
        %v3722 = vadd.s32 %v3717, %v3721
        %v3723 = vadd.s32 %v3722, 536870912
        %v3724 = vshrl.u32 %v3723, 30
        %v3725 = vshll.u32 %v3724, 30
        %v3726 = vsub.s32 %v3722, %v3725
        %vm3727 = vcmp.lt.s32.totalorder %v3726, 0
        %v3728 = vsub.s32 0, %v3726
        %v3729 = vsel %vm3727, %v3728, %v3726
        %v3730 = vclz %v3729
        %v3731 = vsub.s32 %v3730, 2
        %vm3732 = vcmp.gt.s32.totalorder 0, %v3731
        %v3733 = vsel %vm3732, 0, %v3731
        %v3734 = vsub.s32 32, %v3733
        %v3735 = vshll.u32 %v3726, %v3733
        %v3736 = vshrl.u32 %v3718, %v3734
        %v3737 = vor.u32 %v3735, %v3736
        %v3738 = vsub.s32 4294967266, %v3733
        %v3739 = vadd.s32 %v3738, 127
        %v3740 = vshll.u32 %v3739, 23
        %v3741 = vor.u32 4788187, %v3740
        %v3742 = vand.u32 2147483647, %v3741
        %v3744 = vcvt.s32.f32 %v3737
        %v3745 = vmul.f32 %v3744, %v3742
        %v3746 = vxor.u32 %v3745, 2147483648
        %v3747 = vsel %vm3664, %v3746, %v3745
        %v3748 = vsub.s32 4, %v3724
        %v3749 = vsel %vm3664, %v3748, %v3724
        %v3750 = vsel %vm3663, %v3028, %v3747
        %v3751 = vsel %vm3663, 0, %v3749
        %v3752 = vcosq.f32.pop %v3750
        %v3753 = vsinq.f32.pop %v3750
        %vm3754 = vweird.f32 %v3028
        %v3755 = vadd.s32 %v3751, 3
        %v3756 = vand.u32 %v3755, 3
        %vm3757 = vcmp.lt.s32.totalorder %v3756, 2
        %vm3758 = vcmp.eq.s32.totalorder %v3756, 0
        %v3759 = vxor.u32 %v3753, 2147483648
        %v3760 = vsel %vm3758, %v3752, %v3759
        %vm3761 = vcmp.eq.s32.totalorder %v3756, 2
        %v3762 = vxor.u32 %v3752, 2147483648
        %v3763 = vsel %vm3761, %v3762, %v3753
        %v3764 = vsel %vm3757, %v3760, %v3763
        %v3765 = vsel %vm3754, nan, %v3764
        %v3766 = vand.u32 2147483647, %v3029
        %vm3767 = vcmp.le.f32.partialorder %v3766, 0.7853982
        %vm3768 = vcmp.lt.s32.totalorder %v3029, 0
        %v3769 = vand.u32 %v3029, 2139095040
        %v3770 = vshrl.u32 %v3769, 23
        %v3771 = vsub.s32 %v3770, 127
        %v3772 = vand.u32 2147483647, %v3029
        %v3773 = vand.u32 %v3772, 8388607
        %v3774 = vor.u32 %v3773, 8388608
        %v3775 = vsub.s32 0, %v3774
        %v3776 = vadd.s32 %v3771, 1
        %vm3777 = vcmp.gt.s32.totalorder %v3776, 0
        %v3778 = vsel %vm3777, %v3776, 0
        %v3779 = vshrl.u32 %v3778, 5
        %v3780 = vand.u32 %v3778, 31
        %v3781 = vsub.s32 32, %v3780
        %v3782 = vshrl.u32 683565275, %v3781
        %v3783 = vshll.u32 683565275, %v3780
        %v3784 = vshrl.u32 2475754826, %v3781
        %v3785 = vor.u32 %v3783, %v3784
        %v3786 = vshll.u32 2475754826, %v3780
        %v3787 = vshrl.u32 2131351028, %v3781
        %v3788 = vor.u32 %v3786, %v3787
        %v3789 = vshll.u32 2131351028, %v3780
        %v3790 = vshrl.u32 2102212464, %v3781
        %v3791 = vor.u32 %v3789, %v3790
        %v3792 = vshll.u32 2102212464, %v3780
        %v3793 = vshrl.u32 920167782, %v3781
        %v3794 = vor.u32 %v3792, %v3793
        %v3795 = vshll.u32 920167782, %v3780
        %v3796 = vshrl.u32 1326507024, %v3781
        %v3797 = vor.u32 %v3795, %v3796
        %vm3798 = vcmp.lt.s32.totalorder %v3779, 1
        %vm3799 = vcmp.lt.s32.totalorder %v3779, 2
        %vm3800 = vcmp.lt.s32.totalorder %v3779, 3
        %vm3801 = vcmp.lt.s32.totalorder %v3779, 4
        %v3802 = vsel %vm3798, %v3782, %v3785
        %v3803 = vsel %vm3801, %v3791, 2102212464
        %v3804 = vsel %vm3800, %v3788, %v3803
        %v3805 = vsel %vm3799, %v3802, %v3804
        %v3806 = vsel %vm3798, %v3785, %v3788
        %v3807 = vsel %vm3801, %v3794, 920167782
        %v3808 = vsel %vm3800, %v3791, %v3807
        %v3809 = vsel %vm3799, %v3806, %v3808
        %v3810 = vsel %vm3798, %v3788, %v3791
        %v3811 = vsel %vm3801, %v3797, 1326507024
        %v3812 = vsel %vm3800, %v3794, %v3811
        %v3813 = vsel %vm3799, %v3810, %v3812
        %v3814 = vshll.u32 %v3774, 8
        %v3815 = vmul.u32.u64.compose %v3814, %v3813
        %v3816 = vextract.low.u32 %v3815
        %v3817 = vextract.high.u32 %v3815
        %v3818 = vmul.u32.u64.compose %v3814, %v3809
        %v3819 = vextract.low.u32 %v3818
        %v3820 = vextract.high.u32 %v3818
        %v3821 = vmul.u32 %v3814, %v3805
        %v3822 = vadd.s32 %v3817, %v3819
        %vm3823 = vc.u32 %v3817, %v3819
        %v3824 = vadd.s32 %v3820, 1
        %v3825 = vsel %vm3823, %v3824, %v3820
        %v3826 = vadd.s32 %v3821, %v3825
        %v3827 = vadd.s32 %v3826, 536870912
        %v3828 = vshrl.u32 %v3827, 30
        %v3829 = vshll.u32 %v3828, 30
        %v3830 = vsub.s32 %v3826, %v3829
        %vm3831 = vcmp.lt.s32.totalorder %v3830, 0
        %v3832 = vsub.s32 0, %v3830
        %v3833 = vsel %vm3831, %v3832, %v3830
        %v3834 = vclz %v3833
        %v3835 = vsub.s32 %v3834, 2
        %vm3836 = vcmp.gt.s32.totalorder 0, %v3835
        %v3837 = vsel %vm3836, 0, %v3835
        %v3838 = vsub.s32 32, %v3837
        %v3839 = vshll.u32 %v3830, %v3837
        %v3840 = vshrl.u32 %v3822, %v3838
        %v3841 = vor.u32 %v3839, %v3840
        %v3842 = vsub.s32 4294967266, %v3837
        %v3843 = vadd.s32 %v3842, 127
        %v3844 = vshll.u32 %v3843, 23
        %v3845 = vor.u32 4788187, %v3844
        %v3846 = vand.u32 2147483647, %v3845
        %v3848 = vcvt.s32.f32 %v3841
        %v3849 = vmul.f32 %v3848, %v3846
        %v3850 = vxor.u32 %v3849, 2147483648
        %v3851 = vsel %vm3768, %v3850, %v3849
        %v3852 = vsub.s32 4, %v3828
        %v3853 = vsel %vm3768, %v3852, %v3828
        %v3854 = vsel %vm3767, %v3029, %v3851
        %v3855 = vsel %vm3767, 0, %v3853
        %v3856 = vcosq.f32.pop %v3854
        %v3857 = vsinq.f32.pop %v3854
        %vm3858 = vweird.f32 %v3029
        %v3859 = vadd.s32 %v3855, 3
        %v3860 = vand.u32 %v3859, 3
        %vm3861 = vcmp.lt.s32.totalorder %v3860, 2
        %vm3862 = vcmp.eq.s32.totalorder %v3860, 0
        %v3863 = vxor.u32 %v3857, 2147483648
        %v3864 = vsel %vm3862, %v3856, %v3863
        %vm3865 = vcmp.eq.s32.totalorder %v3860, 2
        %v3866 = vxor.u32 %v3856, 2147483648
        %v3867 = vsel %vm3865, %v3866, %v3857
        %v3868 = vsel %vm3861, %v3864, %v3867
        %v3869 = vsel %vm3858, nan, %v3868
        %v3870 = vand.u32 2147483647, %v3030
        %vm3871 = vcmp.le.f32.partialorder %v3870, 0.7853982
        %vm3872 = vcmp.lt.s32.totalorder %v3030, 0
        %v3873 = vand.u32 %v3030, 2139095040
        %v3874 = vshrl.u32 %v3873, 23
        %v3875 = vsub.s32 %v3874, 127
        %v3876 = vand.u32 2147483647, %v3030
        %v3877 = vand.u32 %v3876, 8388607
        %v3878 = vor.u32 %v3877, 8388608
        %v3879 = vsub.s32 0, %v3878
        %v3880 = vadd.s32 %v3875, 1
        %vm3881 = vcmp.gt.s32.totalorder %v3880, 0
        %v3882 = vsel %vm3881, %v3880, 0
        %v3883 = vshrl.u32 %v3882, 5
        %v3884 = vand.u32 %v3882, 31
        %v3885 = vsub.s32 32, %v3884
        %v3886 = vshrl.u32 683565275, %v3885
        %v3887 = vshll.u32 683565275, %v3884
        %v3888 = vshrl.u32 2475754826, %v3885
        %v3889 = vor.u32 %v3887, %v3888
        %v3890 = vshll.u32 2475754826, %v3884
        %v3891 = vshrl.u32 2131351028, %v3885
        %v3892 = vor.u32 %v3890, %v3891
        %v3893 = vshll.u32 2131351028, %v3884
        %v3894 = vshrl.u32 2102212464, %v3885
        %v3895 = vor.u32 %v3893, %v3894
        %v3896 = vshll.u32 2102212464, %v3884
        %v3897 = vshrl.u32 920167782, %v3885
        %v3898 = vor.u32 %v3896, %v3897
        %v3899 = vshll.u32 920167782, %v3884
        %v3900 = vshrl.u32 1326507024, %v3885
        %v3901 = vor.u32 %v3899, %v3900
        %vm3902 = vcmp.lt.s32.totalorder %v3883, 1
        %vm3903 = vcmp.lt.s32.totalorder %v3883, 2
        %vm3904 = vcmp.lt.s32.totalorder %v3883, 3
        %vm3905 = vcmp.lt.s32.totalorder %v3883, 4
        %v3906 = vsel %vm3902, %v3886, %v3889
        %v3907 = vsel %vm3905, %v3895, 2102212464
        %v3908 = vsel %vm3904, %v3892, %v3907
        %v3909 = vsel %vm3903, %v3906, %v3908
        %v3910 = vsel %vm3902, %v3889, %v3892
        %v3911 = vsel %vm3905, %v3898, 920167782
        %v3912 = vsel %vm3904, %v3895, %v3911
        %v3913 = vsel %vm3903, %v3910, %v3912
        %v3914 = vsel %vm3902, %v3892, %v3895
        %v3915 = vsel %vm3905, %v3901, 1326507024
        %v3916 = vsel %vm3904, %v3898, %v3915
        %v3917 = vsel %vm3903, %v3914, %v3916
        %v3918 = vshll.u32 %v3878, 8
        %v3919 = vmul.u32.u64.compose %v3918, %v3917
        %v3920 = vextract.low.u32 %v3919
        %v3921 = vextract.high.u32 %v3919
        %v3922 = vmul.u32.u64.compose %v3918, %v3913
        %v3923 = vextract.low.u32 %v3922
        %v3924 = vextract.high.u32 %v3922
        %v3925 = vmul.u32 %v3918, %v3909
        %v3926 = vadd.s32 %v3921, %v3923
        %vm3927 = vc.u32 %v3921, %v3923
        %v3928 = vadd.s32 %v3924, 1
        %v3929 = vsel %vm3927, %v3928, %v3924
        %v3930 = vadd.s32 %v3925, %v3929
        %v3931 = vadd.s32 %v3930, 536870912
        %v3932 = vshrl.u32 %v3931, 30
        %v3933 = vshll.u32 %v3932, 30
        %v3934 = vsub.s32 %v3930, %v3933
        %vm3935 = vcmp.lt.s32.totalorder %v3934, 0
        %v3936 = vsub.s32 0, %v3934
        %v3937 = vsel %vm3935, %v3936, %v3934
        %v3938 = vclz %v3937
        %v3939 = vsub.s32 %v3938, 2
        %vm3940 = vcmp.gt.s32.totalorder 0, %v3939
        %v3941 = vsel %vm3940, 0, %v3939
        %v3942 = vsub.s32 32, %v3941
        %v3943 = vshll.u32 %v3934, %v3941
        %v3944 = vshrl.u32 %v3926, %v3942
        %v3945 = vor.u32 %v3943, %v3944
        %v3946 = vsub.s32 4294967266, %v3941
        %v3947 = vadd.s32 %v3946, 127
        %v3948 = vshll.u32 %v3947, 23
        %v3949 = vor.u32 4788187, %v3948
        %v3950 = vand.u32 2147483647, %v3949
        %v3952 = vcvt.s32.f32 %v3945
        %v3953 = vmul.f32 %v3952, %v3950
        %v3954 = vxor.u32 %v3953, 2147483648
        %v3955 = vsel %vm3872, %v3954, %v3953
        %v3956 = vsub.s32 4, %v3932
        %v3957 = vsel %vm3872, %v3956, %v3932
        %v3958 = vsel %vm3871, %v3030, %v3955
        %v3959 = vsel %vm3871, 0, %v3957
        %v3960 = vcosq.f32.pop %v3958
        %v3961 = vsinq.f32.pop %v3958
        %vm3962 = vweird.f32 %v3030
        %v3963 = vadd.s32 %v3959, 3
        %v3964 = vand.u32 %v3963, 3
        %vm3965 = vcmp.lt.s32.totalorder %v3964, 2
        %vm3966 = vcmp.eq.s32.totalorder %v3964, 0
        %v3967 = vxor.u32 %v3961, 2147483648
        %v3968 = vsel %vm3966, %v3960, %v3967
        %vm3969 = vcmp.eq.s32.totalorder %v3964, 2
        %v3970 = vxor.u32 %v3960, 2147483648
        %v3971 = vsel %vm3969, %v3970, %v3961
        %v3972 = vsel %vm3965, %v3968, %v3971
        %v3973 = vsel %vm3962, nan, %v3972
        %v3974 = vand.u32 2147483647, %v3031
        %vm3975 = vcmp.le.f32.partialorder %v3974, 0.7853982
        %vm3976 = vcmp.lt.s32.totalorder %v3031, 0
        %v3977 = vand.u32 %v3031, 2139095040
        %v3978 = vshrl.u32 %v3977, 23
        %v3979 = vsub.s32 %v3978, 127
        %v3980 = vand.u32 2147483647, %v3031
        %v3981 = vand.u32 %v3980, 8388607
        %v3982 = vor.u32 %v3981, 8388608
        %v3983 = vsub.s32 0, %v3982
        %v3984 = vadd.s32 %v3979, 1
        %vm3985 = vcmp.gt.s32.totalorder %v3984, 0
        %v3986 = vsel %vm3985, %v3984, 0
        %v3987 = vshrl.u32 %v3986, 5
        %v3988 = vand.u32 %v3986, 31
        %v3989 = vsub.s32 32, %v3988
        %v3990 = vshrl.u32 683565275, %v3989
        %v3991 = vshll.u32 683565275, %v3988
        %v3992 = vshrl.u32 2475754826, %v3989
        %v3993 = vor.u32 %v3991, %v3992
        %v3994 = vshll.u32 2475754826, %v3988
        %v3995 = vshrl.u32 2131351028, %v3989
        %v3996 = vor.u32 %v3994, %v3995
        %v3997 = vshll.u32 2131351028, %v3988
        %v3998 = vshrl.u32 2102212464, %v3989
        %v3999 = vor.u32 %v3997, %v3998
        %v4000 = vshll.u32 2102212464, %v3988
        %v4001 = vshrl.u32 920167782, %v3989
        %v4002 = vor.u32 %v4000, %v4001
        %v4003 = vshll.u32 920167782, %v3988
        %v4004 = vshrl.u32 1326507024, %v3989
        %v4005 = vor.u32 %v4003, %v4004
        %vm4006 = vcmp.lt.s32.totalorder %v3987, 1
        %vm4007 = vcmp.lt.s32.totalorder %v3987, 2
        %vm4008 = vcmp.lt.s32.totalorder %v3987, 3
        %vm4009 = vcmp.lt.s32.totalorder %v3987, 4
        %v4010 = vsel %vm4006, %v3990, %v3993
        %v4011 = vsel %vm4009, %v3999, 2102212464
        %v4012 = vsel %vm4008, %v3996, %v4011
        %v4013 = vsel %vm4007, %v4010, %v4012
        %v4014 = vsel %vm4006, %v3993, %v3996
        %v4015 = vsel %vm4009, %v4002, 920167782
        %v4016 = vsel %vm4008, %v3999, %v4015
        %v4017 = vsel %vm4007, %v4014, %v4016
        %v4018 = vsel %vm4006, %v3996, %v3999
        %v4019 = vsel %vm4009, %v4005, 1326507024
        %v4020 = vsel %vm4008, %v4002, %v4019
        %v4021 = vsel %vm4007, %v4018, %v4020
        %v4022 = vshll.u32 %v3982, 8
        %v4023 = vmul.u32.u64.compose %v4022, %v4021
        %v4024 = vextract.low.u32 %v4023
        %v4025 = vextract.high.u32 %v4023
        %v4026 = vmul.u32.u64.compose %v4022, %v4017
        %v4027 = vextract.low.u32 %v4026
        %v4028 = vextract.high.u32 %v4026
        %v4029 = vmul.u32 %v4022, %v4013
        %v4030 = vadd.s32 %v4025, %v4027
        %vm4031 = vc.u32 %v4025, %v4027
        %v4032 = vadd.s32 %v4028, 1
        %v4033 = vsel %vm4031, %v4032, %v4028
        %v4034 = vadd.s32 %v4029, %v4033
        %v4035 = vadd.s32 %v4034, 536870912
        %v4036 = vshrl.u32 %v4035, 30
        %v4037 = vshll.u32 %v4036, 30
        %v4038 = vsub.s32 %v4034, %v4037
        %vm4039 = vcmp.lt.s32.totalorder %v4038, 0
        %v4040 = vsub.s32 0, %v4038
        %v4041 = vsel %vm4039, %v4040, %v4038
        %v4042 = vclz %v4041
        %v4043 = vsub.s32 %v4042, 2
        %vm4044 = vcmp.gt.s32.totalorder 0, %v4043
        %v4045 = vsel %vm4044, 0, %v4043
        %v4046 = vsub.s32 32, %v4045
        %v4047 = vshll.u32 %v4038, %v4045
        %v4048 = vshrl.u32 %v4030, %v4046
        %v4049 = vor.u32 %v4047, %v4048
        %v4050 = vsub.s32 4294967266, %v4045
        %v4051 = vadd.s32 %v4050, 127
        %v4052 = vshll.u32 %v4051, 23
        %v4053 = vor.u32 4788187, %v4052
        %v4054 = vand.u32 2147483647, %v4053
        %v4056 = vcvt.s32.f32 %v4049
        %v4057 = vmul.f32 %v4056, %v4054
        %v4058 = vxor.u32 %v4057, 2147483648
        %v4059 = vsel %vm3976, %v4058, %v4057
        %v4060 = vsub.s32 4, %v4036
        %v4061 = vsel %vm3976, %v4060, %v4036
        %v4062 = vsel %vm3975, %v3031, %v4059
        %v4063 = vsel %vm3975, 0, %v4061
        %v4064 = vcosq.f32.pop %v4062
        %v4065 = vsinq.f32.pop %v4062
        %vm4066 = vweird.f32 %v3031
        %v4067 = vadd.s32 %v4063, 3
        %v4068 = vand.u32 %v4067, 3
        %vm4069 = vcmp.lt.s32.totalorder %v4068, 2
        %vm4070 = vcmp.eq.s32.totalorder %v4068, 0
        %v4071 = vxor.u32 %v4065, 2147483648
        %v4072 = vsel %vm4070, %v4064, %v4071
        %vm4073 = vcmp.eq.s32.totalorder %v4068, 2
        %v4074 = vxor.u32 %v4064, 2147483648
        %v4075 = vsel %vm4073, %v4074, %v4065
        %v4076 = vsel %vm4069, %v4072, %v4075
        %v4077 = vsel %vm4066, nan, %v4076
        %v4078 = vand.u32 2147483647, %v3032
        %vm4079 = vcmp.le.f32.partialorder %v4078, 0.7853982
        %vm4080 = vcmp.lt.s32.totalorder %v3032, 0
        %v4081 = vand.u32 %v3032, 2139095040
        %v4082 = vshrl.u32 %v4081, 23
        %v4083 = vsub.s32 %v4082, 127
        %v4084 = vand.u32 2147483647, %v3032
        %v4085 = vand.u32 %v4084, 8388607
        %v4086 = vor.u32 %v4085, 8388608
        %v4087 = vsub.s32 0, %v4086
        %v4088 = vadd.s32 %v4083, 1
        %vm4089 = vcmp.gt.s32.totalorder %v4088, 0
        %v4090 = vsel %vm4089, %v4088, 0
        %v4091 = vshrl.u32 %v4090, 5
        %v4092 = vand.u32 %v4090, 31
        %v4093 = vsub.s32 32, %v4092
        %v4094 = vshrl.u32 683565275, %v4093
        %v4095 = vshll.u32 683565275, %v4092
        %v4096 = vshrl.u32 2475754826, %v4093
        %v4097 = vor.u32 %v4095, %v4096
        %v4098 = vshll.u32 2475754826, %v4092
        %v4099 = vshrl.u32 2131351028, %v4093
        %v4100 = vor.u32 %v4098, %v4099
        %v4101 = vshll.u32 2131351028, %v4092
        %v4102 = vshrl.u32 2102212464, %v4093
        %v4103 = vor.u32 %v4101, %v4102
        %v4104 = vshll.u32 2102212464, %v4092
        %v4105 = vshrl.u32 920167782, %v4093
        %v4106 = vor.u32 %v4104, %v4105
        %v4107 = vshll.u32 920167782, %v4092
        %v4108 = vshrl.u32 1326507024, %v4093
        %v4109 = vor.u32 %v4107, %v4108
        %vm4110 = vcmp.lt.s32.totalorder %v4091, 1
        %vm4111 = vcmp.lt.s32.totalorder %v4091, 2
        %vm4112 = vcmp.lt.s32.totalorder %v4091, 3
        %vm4113 = vcmp.lt.s32.totalorder %v4091, 4
        %v4114 = vsel %vm4110, %v4094, %v4097
        %v4115 = vsel %vm4113, %v4103, 2102212464
        %v4116 = vsel %vm4112, %v4100, %v4115
        %v4117 = vsel %vm4111, %v4114, %v4116
        %v4118 = vsel %vm4110, %v4097, %v4100
        %v4119 = vsel %vm4113, %v4106, 920167782
        %v4120 = vsel %vm4112, %v4103, %v4119
        %v4121 = vsel %vm4111, %v4118, %v4120
        %v4122 = vsel %vm4110, %v4100, %v4103
        %v4123 = vsel %vm4113, %v4109, 1326507024
        %v4124 = vsel %vm4112, %v4106, %v4123
        %v4125 = vsel %vm4111, %v4122, %v4124
        %v4126 = vshll.u32 %v4086, 8
        %v4127 = vmul.u32.u64.compose %v4126, %v4125
        %v4128 = vextract.low.u32 %v4127
        %v4129 = vextract.high.u32 %v4127
        %v4130 = vmul.u32.u64.compose %v4126, %v4121
        %v4131 = vextract.low.u32 %v4130
        %v4132 = vextract.high.u32 %v4130
        %v4133 = vmul.u32 %v4126, %v4117
        %v4134 = vadd.s32 %v4129, %v4131
        %vm4135 = vc.u32 %v4129, %v4131
        %v4136 = vadd.s32 %v4132, 1
        %v4137 = vsel %vm4135, %v4136, %v4132
        %v4138 = vadd.s32 %v4133, %v4137
        %v4139 = vadd.s32 %v4138, 536870912
        %v4140 = vshrl.u32 %v4139, 30
        %v4141 = vshll.u32 %v4140, 30
        %v4142 = vsub.s32 %v4138, %v4141
        %vm4143 = vcmp.lt.s32.totalorder %v4142, 0
        %v4144 = vsub.s32 0, %v4142
        %v4145 = vsel %vm4143, %v4144, %v4142
        %v4146 = vclz %v4145
        %v4147 = vsub.s32 %v4146, 2
        %vm4148 = vcmp.gt.s32.totalorder 0, %v4147
        %v4149 = vsel %vm4148, 0, %v4147
        %v4150 = vsub.s32 32, %v4149
        %v4151 = vshll.u32 %v4142, %v4149
        %v4152 = vshrl.u32 %v4134, %v4150
        %v4153 = vor.u32 %v4151, %v4152
        %v4154 = vsub.s32 4294967266, %v4149
        %v4155 = vadd.s32 %v4154, 127
        %v4156 = vshll.u32 %v4155, 23
        %v4157 = vor.u32 4788187, %v4156
        %v4158 = vand.u32 2147483647, %v4157
        %v4160 = vcvt.s32.f32 %v4153
        %v4161 = vmul.f32 %v4160, %v4158
        %v4162 = vxor.u32 %v4161, 2147483648
        %v4163 = vsel %vm4080, %v4162, %v4161
        %v4164 = vsub.s32 4, %v4140
        %v4165 = vsel %vm4080, %v4164, %v4140
        %v4166 = vsel %vm4079, %v3032, %v4163
        %v4167 = vsel %vm4079, 0, %v4165
        %v4168 = vcosq.f32.pop %v4166
        %v4169 = vsinq.f32.pop %v4166
        %vm4170 = vweird.f32 %v3032
        %v4171 = vadd.s32 %v4167, 3
        %v4172 = vand.u32 %v4171, 3
        %vm4173 = vcmp.lt.s32.totalorder %v4172, 2
        %vm4174 = vcmp.eq.s32.totalorder %v4172, 0
        %v4175 = vxor.u32 %v4169, 2147483648
        %v4176 = vsel %vm4174, %v4168, %v4175
        %vm4177 = vcmp.eq.s32.totalorder %v4172, 2
        %v4178 = vxor.u32 %v4168, 2147483648
        %v4179 = vsel %vm4177, %v4178, %v4169
        %v4180 = vsel %vm4173, %v4176, %v4179
        %v4181 = vsel %vm4170, nan, %v4180
        %v4182 = vand.u32 2147483647, %v3033
        %vm4183 = vcmp.le.f32.partialorder %v4182, 0.7853982
        %vm4184 = vcmp.lt.s32.totalorder %v3033, 0
        %v4185 = vand.u32 %v3033, 2139095040
        %v4186 = vshrl.u32 %v4185, 23
        %v4187 = vsub.s32 %v4186, 127
        %v4188 = vand.u32 2147483647, %v3033
        %v4189 = vand.u32 %v4188, 8388607
        %v4190 = vor.u32 %v4189, 8388608
        %v4191 = vsub.s32 0, %v4190
        %v4192 = vadd.s32 %v4187, 1
        %vm4193 = vcmp.gt.s32.totalorder %v4192, 0
        %v4194 = vsel %vm4193, %v4192, 0
        %v4195 = vshrl.u32 %v4194, 5
        %v4196 = vand.u32 %v4194, 31
        %v4197 = vsub.s32 32, %v4196
        %v4198 = vshrl.u32 683565275, %v4197
        %v4199 = vshll.u32 683565275, %v4196
        %v4200 = vshrl.u32 2475754826, %v4197
        %v4201 = vor.u32 %v4199, %v4200
        %v4202 = vshll.u32 2475754826, %v4196
        %v4203 = vshrl.u32 2131351028, %v4197
        %v4204 = vor.u32 %v4202, %v4203
        %v4205 = vshll.u32 2131351028, %v4196
        %v4206 = vshrl.u32 2102212464, %v4197
        %v4207 = vor.u32 %v4205, %v4206
        %v4208 = vshll.u32 2102212464, %v4196
        %v4209 = vshrl.u32 920167782, %v4197
        %v4210 = vor.u32 %v4208, %v4209
        %v4211 = vshll.u32 920167782, %v4196
        %v4212 = vshrl.u32 1326507024, %v4197
        %v4213 = vor.u32 %v4211, %v4212
        %vm4214 = vcmp.lt.s32.totalorder %v4195, 1
        %vm4215 = vcmp.lt.s32.totalorder %v4195, 2
        %vm4216 = vcmp.lt.s32.totalorder %v4195, 3
        %vm4217 = vcmp.lt.s32.totalorder %v4195, 4
        %v4218 = vsel %vm4214, %v4198, %v4201
        %v4219 = vsel %vm4217, %v4207, 2102212464
        %v4220 = vsel %vm4216, %v4204, %v4219
        %v4221 = vsel %vm4215, %v4218, %v4220
        %v4222 = vsel %vm4214, %v4201, %v4204
        %v4223 = vsel %vm4217, %v4210, 920167782
        %v4224 = vsel %vm4216, %v4207, %v4223
        %v4225 = vsel %vm4215, %v4222, %v4224
        %v4226 = vsel %vm4214, %v4204, %v4207
        %v4227 = vsel %vm4217, %v4213, 1326507024
        %v4228 = vsel %vm4216, %v4210, %v4227
        %v4229 = vsel %vm4215, %v4226, %v4228
        %v4230 = vshll.u32 %v4190, 8
        %v4231 = vmul.u32.u64.compose %v4230, %v4229
        %v4232 = vextract.low.u32 %v4231
        %v4233 = vextract.high.u32 %v4231
        %v4234 = vmul.u32.u64.compose %v4230, %v4225
        %v4235 = vextract.low.u32 %v4234
        %v4236 = vextract.high.u32 %v4234
        %v4237 = vmul.u32 %v4230, %v4221
        %v4238 = vadd.s32 %v4233, %v4235
        %vm4239 = vc.u32 %v4233, %v4235
        %v4240 = vadd.s32 %v4236, 1
        %v4241 = vsel %vm4239, %v4240, %v4236
        %v4242 = vadd.s32 %v4237, %v4241
        %v4243 = vadd.s32 %v4242, 536870912
        %v4244 = vshrl.u32 %v4243, 30
        %v4245 = vshll.u32 %v4244, 30
        %v4246 = vsub.s32 %v4242, %v4245
        %vm4247 = vcmp.lt.s32.totalorder %v4246, 0
        %v4248 = vsub.s32 0, %v4246
        %v4249 = vsel %vm4247, %v4248, %v4246
        %v4250 = vclz %v4249
        %v4251 = vsub.s32 %v4250, 2
        %vm4252 = vcmp.gt.s32.totalorder 0, %v4251
        %v4253 = vsel %vm4252, 0, %v4251
        %v4254 = vsub.s32 32, %v4253
        %v4255 = vshll.u32 %v4246, %v4253
        %v4256 = vshrl.u32 %v4238, %v4254
        %v4257 = vor.u32 %v4255, %v4256
        %v4258 = vsub.s32 4294967266, %v4253
        %v4259 = vadd.s32 %v4258, 127
        %v4260 = vshll.u32 %v4259, 23
        %v4261 = vor.u32 4788187, %v4260
        %v4262 = vand.u32 2147483647, %v4261
        %v4264 = vcvt.s32.f32 %v4257
        %v4265 = vmul.f32 %v4264, %v4262
        %v4266 = vxor.u32 %v4265, 2147483648
        %v4267 = vsel %vm4184, %v4266, %v4265
        %v4268 = vsub.s32 4, %v4244
        %v4269 = vsel %vm4184, %v4268, %v4244
        %v4270 = vsel %vm4183, %v3033, %v4267
        %v4271 = vsel %vm4183, 0, %v4269
        %v4272 = vcosq.f32.pop %v4270
        %v4273 = vsinq.f32.pop %v4270
        %vm4274 = vweird.f32 %v3033
        %v4275 = vadd.s32 %v4271, 3
        %v4276 = vand.u32 %v4275, 3
        %vm4277 = vcmp.lt.s32.totalorder %v4276, 2
        %vm4278 = vcmp.eq.s32.totalorder %v4276, 0
        %v4279 = vxor.u32 %v4273, 2147483648
        %v4280 = vsel %vm4278, %v4272, %v4279
        %vm4281 = vcmp.eq.s32.totalorder %v4276, 2
        %v4282 = vxor.u32 %v4272, 2147483648
        %v4283 = vsel %vm4281, %v4282, %v4273
        %v4284 = vsel %vm4277, %v4280, %v4283
        %v4285 = vsel %vm4274, nan, %v4284
        %v4286 = vand.u32 2147483647, %v3034
        %vm4287 = vcmp.le.f32.partialorder %v4286, 0.7853982
        %vm4288 = vcmp.lt.s32.totalorder %v3034, 0
        %v4289 = vand.u32 %v3034, 2139095040
        %v4290 = vshrl.u32 %v4289, 23
        %v4291 = vsub.s32 %v4290, 127
        %v4292 = vand.u32 2147483647, %v3034
        %v4293 = vand.u32 %v4292, 8388607
        %v4294 = vor.u32 %v4293, 8388608
        %v4295 = vsub.s32 0, %v4294
        %v4296 = vadd.s32 %v4291, 1
        %vm4297 = vcmp.gt.s32.totalorder %v4296, 0
        %v4298 = vsel %vm4297, %v4296, 0
        %v4299 = vshrl.u32 %v4298, 5
        %v4300 = vand.u32 %v4298, 31
        %v4301 = vsub.s32 32, %v4300
        %v4302 = vshrl.u32 683565275, %v4301
        %v4303 = vshll.u32 683565275, %v4300
        %v4304 = vshrl.u32 2475754826, %v4301
        %v4305 = vor.u32 %v4303, %v4304
        %v4306 = vshll.u32 2475754826, %v4300
        %v4307 = vshrl.u32 2131351028, %v4301
        %v4308 = vor.u32 %v4306, %v4307
        %v4309 = vshll.u32 2131351028, %v4300
        %v4310 = vshrl.u32 2102212464, %v4301
        %v4311 = vor.u32 %v4309, %v4310
        %v4312 = vshll.u32 2102212464, %v4300
        %v4313 = vshrl.u32 920167782, %v4301
        %v4314 = vor.u32 %v4312, %v4313
        %v4315 = vshll.u32 920167782, %v4300
        %v4316 = vshrl.u32 1326507024, %v4301
        %v4317 = vor.u32 %v4315, %v4316
        %vm4318 = vcmp.lt.s32.totalorder %v4299, 1
        %vm4319 = vcmp.lt.s32.totalorder %v4299, 2
        %vm4320 = vcmp.lt.s32.totalorder %v4299, 3
        %vm4321 = vcmp.lt.s32.totalorder %v4299, 4
        %v4322 = vsel %vm4318, %v4302, %v4305
        %v4323 = vsel %vm4321, %v4311, 2102212464
        %v4324 = vsel %vm4320, %v4308, %v4323
        %v4325 = vsel %vm4319, %v4322, %v4324
        %v4326 = vsel %vm4318, %v4305, %v4308
        %v4327 = vsel %vm4321, %v4314, 920167782
        %v4328 = vsel %vm4320, %v4311, %v4327
        %v4329 = vsel %vm4319, %v4326, %v4328
        %v4330 = vsel %vm4318, %v4308, %v4311
        %v4331 = vsel %vm4321, %v4317, 1326507024
        %v4332 = vsel %vm4320, %v4314, %v4331
        %v4333 = vsel %vm4319, %v4330, %v4332
        %v4334 = vshll.u32 %v4294, 8
        %v4335 = vmul.u32.u64.compose %v4334, %v4333
        %v4336 = vextract.low.u32 %v4335
        %v4337 = vextract.high.u32 %v4335
        %v4338 = vmul.u32.u64.compose %v4334, %v4329
        %v4339 = vextract.low.u32 %v4338
        %v4340 = vextract.high.u32 %v4338
        %v4341 = vmul.u32 %v4334, %v4325
        %v4342 = vadd.s32 %v4337, %v4339
        %vm4343 = vc.u32 %v4337, %v4339
        %v4344 = vadd.s32 %v4340, 1
        %v4345 = vsel %vm4343, %v4344, %v4340
        %v4346 = vadd.s32 %v4341, %v4345
        %v4347 = vadd.s32 %v4346, 536870912
        %v4348 = vshrl.u32 %v4347, 30
        %v4349 = vshll.u32 %v4348, 30
        %v4350 = vsub.s32 %v4346, %v4349
        %vm4351 = vcmp.lt.s32.totalorder %v4350, 0
        %v4352 = vsub.s32 0, %v4350
        %v4353 = vsel %vm4351, %v4352, %v4350
        %v4354 = vclz %v4353
        %v4355 = vsub.s32 %v4354, 2
        %vm4356 = vcmp.gt.s32.totalorder 0, %v4355
        %v4357 = vsel %vm4356, 0, %v4355
        %v4358 = vsub.s32 32, %v4357
        %v4359 = vshll.u32 %v4350, %v4357
        %v4360 = vshrl.u32 %v4342, %v4358
        %v4361 = vor.u32 %v4359, %v4360
        %v4362 = vsub.s32 4294967266, %v4357
        %v4363 = vadd.s32 %v4362, 127
        %v4364 = vshll.u32 %v4363, 23
        %v4365 = vor.u32 4788187, %v4364
        %v4366 = vand.u32 2147483647, %v4365
        %v4368 = vcvt.s32.f32 %v4361
        %v4369 = vmul.f32 %v4368, %v4366
        %v4370 = vxor.u32 %v4369, 2147483648
        %v4371 = vsel %vm4288, %v4370, %v4369
        %v4372 = vsub.s32 4, %v4348
        %v4373 = vsel %vm4288, %v4372, %v4348
        %v4374 = vsel %vm4287, %v3034, %v4371
        %v4375 = vsel %vm4287, 0, %v4373
        %v4376 = vcosq.f32.pop %v4374
        %v4377 = vsinq.f32.pop %v4374
        %vm4378 = vweird.f32 %v3034
        %v4379 = vadd.s32 %v4375, 3
        %v4380 = vand.u32 %v4379, 3
        %vm4381 = vcmp.lt.s32.totalorder %v4380, 2
        %vm4382 = vcmp.eq.s32.totalorder %v4380, 0
        %v4383 = vxor.u32 %v4377, 2147483648
        %v4384 = vsel %vm4382, %v4376, %v4383
        %vm4385 = vcmp.eq.s32.totalorder %v4380, 2
        %v4386 = vxor.u32 %v4376, 2147483648
        %v4387 = vsel %vm4385, %v4386, %v4377
        %v4388 = vsel %vm4381, %v4384, %v4387
        %v4389 = vsel %vm4378, nan, %v4388
        %v4390 = vand.u32 2147483647, %v3035
        %vm4391 = vcmp.le.f32.partialorder %v4390, 0.7853982
        %vm4392 = vcmp.lt.s32.totalorder %v3035, 0
        %v4393 = vand.u32 %v3035, 2139095040
        %v4394 = vshrl.u32 %v4393, 23
        %v4395 = vsub.s32 %v4394, 127
        %v4396 = vand.u32 2147483647, %v3035
        %v4397 = vand.u32 %v4396, 8388607
        %v4398 = vor.u32 %v4397, 8388608
        %v4399 = vsub.s32 0, %v4398
        %v4400 = vadd.s32 %v4395, 1
        %vm4401 = vcmp.gt.s32.totalorder %v4400, 0
        %v4402 = vsel %vm4401, %v4400, 0
        %v4403 = vshrl.u32 %v4402, 5
        %v4404 = vand.u32 %v4402, 31
        %v4405 = vsub.s32 32, %v4404
        %v4406 = vshrl.u32 683565275, %v4405
        %v4407 = vshll.u32 683565275, %v4404
        %v4408 = vshrl.u32 2475754826, %v4405
        %v4409 = vor.u32 %v4407, %v4408
        %v4410 = vshll.u32 2475754826, %v4404
        %v4411 = vshrl.u32 2131351028, %v4405
        %v4412 = vor.u32 %v4410, %v4411
        %v4413 = vshll.u32 2131351028, %v4404
        %v4414 = vshrl.u32 2102212464, %v4405
        %v4415 = vor.u32 %v4413, %v4414
        %v4416 = vshll.u32 2102212464, %v4404
        %v4417 = vshrl.u32 920167782, %v4405
        %v4418 = vor.u32 %v4416, %v4417
        %v4419 = vshll.u32 920167782, %v4404
        %v4420 = vshrl.u32 1326507024, %v4405
        %v4421 = vor.u32 %v4419, %v4420
        %vm4422 = vcmp.lt.s32.totalorder %v4403, 1
        %vm4423 = vcmp.lt.s32.totalorder %v4403, 2
        %vm4424 = vcmp.lt.s32.totalorder %v4403, 3
        %vm4425 = vcmp.lt.s32.totalorder %v4403, 4
        %v4426 = vsel %vm4422, %v4406, %v4409
        %v4427 = vsel %vm4425, %v4415, 2102212464
        %v4428 = vsel %vm4424, %v4412, %v4427
        %v4429 = vsel %vm4423, %v4426, %v4428
        %v4430 = vsel %vm4422, %v4409, %v4412
        %v4431 = vsel %vm4425, %v4418, 920167782
        %v4432 = vsel %vm4424, %v4415, %v4431
        %v4433 = vsel %vm4423, %v4430, %v4432
        %v4434 = vsel %vm4422, %v4412, %v4415
        %v4435 = vsel %vm4425, %v4421, 1326507024
        %v4436 = vsel %vm4424, %v4418, %v4435
        %v4437 = vsel %vm4423, %v4434, %v4436
        %v4438 = vshll.u32 %v4398, 8
        %v4439 = vmul.u32.u64.compose %v4438, %v4437
        %v4440 = vextract.low.u32 %v4439
        %v4441 = vextract.high.u32 %v4439
        %v4442 = vmul.u32.u64.compose %v4438, %v4433
        %v4443 = vextract.low.u32 %v4442
        %v4444 = vextract.high.u32 %v4442
        %v4445 = vmul.u32 %v4438, %v4429
        %v4446 = vadd.s32 %v4441, %v4443
        %vm4447 = vc.u32 %v4441, %v4443
        %v4448 = vadd.s32 %v4444, 1
        %v4449 = vsel %vm4447, %v4448, %v4444
        %v4450 = vadd.s32 %v4445, %v4449
        %v4451 = vadd.s32 %v4450, 536870912
        %v4452 = vshrl.u32 %v4451, 30
        %v4453 = vshll.u32 %v4452, 30
        %v4454 = vsub.s32 %v4450, %v4453
        %vm4455 = vcmp.lt.s32.totalorder %v4454, 0
        %v4456 = vsub.s32 0, %v4454
        %v4457 = vsel %vm4455, %v4456, %v4454
        %v4458 = vclz %v4457
        %v4459 = vsub.s32 %v4458, 2
        %vm4460 = vcmp.gt.s32.totalorder 0, %v4459
        %v4461 = vsel %vm4460, 0, %v4459
        %v4462 = vsub.s32 32, %v4461
        %v4463 = vshll.u32 %v4454, %v4461
        %v4464 = vshrl.u32 %v4446, %v4462
        %v4465 = vor.u32 %v4463, %v4464
        %v4466 = vsub.s32 4294967266, %v4461
        %v4467 = vadd.s32 %v4466, 127
        %v4468 = vshll.u32 %v4467, 23
        %v4469 = vor.u32 4788187, %v4468
        %v4470 = vand.u32 2147483647, %v4469
        %v4472 = vcvt.s32.f32 %v4465
        %v4473 = vmul.f32 %v4472, %v4470
        %v4474 = vxor.u32 %v4473, 2147483648
        %v4475 = vsel %vm4392, %v4474, %v4473
        %v4476 = vsub.s32 4, %v4452
        %v4477 = vsel %vm4392, %v4476, %v4452
        %v4478 = vsel %vm4391, %v3035, %v4475
        %v4479 = vsel %vm4391, 0, %v4477
        %v4480 = vcosq.f32.pop %v4478
        %v4481 = vsinq.f32.pop %v4478
        %vm4482 = vweird.f32 %v3035
        %v4483 = vadd.s32 %v4479, 3
        %v4484 = vand.u32 %v4483, 3
        %vm4485 = vcmp.lt.s32.totalorder %v4484, 2
        %vm4486 = vcmp.eq.s32.totalorder %v4484, 0
        %v4487 = vxor.u32 %v4481, 2147483648
        %v4488 = vsel %vm4486, %v4480, %v4487
        %vm4489 = vcmp.eq.s32.totalorder %v4484, 2
        %v4490 = vxor.u32 %v4480, 2147483648
        %v4491 = vsel %vm4489, %v4490, %v4481
        %v4492 = vsel %vm4485, %v4488, %v4491
        %v4493 = vsel %vm4482, nan, %v4492
        %v4494 = vand.u32 2147483647, %v3036
        %vm4495 = vcmp.le.f32.partialorder %v4494, 0.7853982
        %vm4496 = vcmp.lt.s32.totalorder %v3036, 0
        %v4497 = vand.u32 %v3036, 2139095040
        %v4498 = vshrl.u32 %v4497, 23
        %v4499 = vsub.s32 %v4498, 127
        %v4500 = vand.u32 2147483647, %v3036
        %v4501 = vand.u32 %v4500, 8388607
        %v4502 = vor.u32 %v4501, 8388608
        %v4503 = vsub.s32 0, %v4502
        %v4504 = vadd.s32 %v4499, 1
        %vm4505 = vcmp.gt.s32.totalorder %v4504, 0
        %v4506 = vsel %vm4505, %v4504, 0
        %v4507 = vshrl.u32 %v4506, 5
        %v4508 = vand.u32 %v4506, 31
        %v4509 = vsub.s32 32, %v4508
        %v4510 = vshrl.u32 683565275, %v4509
        %v4511 = vshll.u32 683565275, %v4508
        %v4512 = vshrl.u32 2475754826, %v4509
        %v4513 = vor.u32 %v4511, %v4512
        %v4514 = vshll.u32 2475754826, %v4508
        %v4515 = vshrl.u32 2131351028, %v4509
        %v4516 = vor.u32 %v4514, %v4515
        %v4517 = vshll.u32 2131351028, %v4508
        %v4518 = vshrl.u32 2102212464, %v4509
        %v4519 = vor.u32 %v4517, %v4518
        %v4520 = vshll.u32 2102212464, %v4508
        %v4521 = vshrl.u32 920167782, %v4509
        %v4522 = vor.u32 %v4520, %v4521
        %v4523 = vshll.u32 920167782, %v4508
        %v4524 = vshrl.u32 1326507024, %v4509
        %v4525 = vor.u32 %v4523, %v4524
        %vm4526 = vcmp.lt.s32.totalorder %v4507, 1
        %vm4527 = vcmp.lt.s32.totalorder %v4507, 2
        %vm4528 = vcmp.lt.s32.totalorder %v4507, 3
        %vm4529 = vcmp.lt.s32.totalorder %v4507, 4
        %v4530 = vsel %vm4526, %v4510, %v4513
        %v4531 = vsel %vm4529, %v4519, 2102212464
        %v4532 = vsel %vm4528, %v4516, %v4531
        %v4533 = vsel %vm4527, %v4530, %v4532
        %v4534 = vsel %vm4526, %v4513, %v4516
        %v4535 = vsel %vm4529, %v4522, 920167782
        %v4536 = vsel %vm4528, %v4519, %v4535
        %v4537 = vsel %vm4527, %v4534, %v4536
        %v4538 = vsel %vm4526, %v4516, %v4519
        %v4539 = vsel %vm4529, %v4525, 1326507024
        %v4540 = vsel %vm4528, %v4522, %v4539
        %v4541 = vsel %vm4527, %v4538, %v4540
        %v4542 = vshll.u32 %v4502, 8
        %v4543 = vmul.u32.u64.compose %v4542, %v4541
        %v4544 = vextract.low.u32 %v4543
        %v4545 = vextract.high.u32 %v4543
        %v4546 = vmul.u32.u64.compose %v4542, %v4537
        %v4547 = vextract.low.u32 %v4546
        %v4548 = vextract.high.u32 %v4546
        %v4549 = vmul.u32 %v4542, %v4533
        %v4550 = vadd.s32 %v4545, %v4547
        %vm4551 = vc.u32 %v4545, %v4547
        %v4552 = vadd.s32 %v4548, 1
        %v4553 = vsel %vm4551, %v4552, %v4548
        %v4554 = vadd.s32 %v4549, %v4553
        %v4555 = vadd.s32 %v4554, 536870912
        %v4556 = vshrl.u32 %v4555, 30
        %v4557 = vshll.u32 %v4556, 30
        %v4558 = vsub.s32 %v4554, %v4557
        %vm4559 = vcmp.lt.s32.totalorder %v4558, 0
        %v4560 = vsub.s32 0, %v4558
        %v4561 = vsel %vm4559, %v4560, %v4558
        %v4562 = vclz %v4561
        %v4563 = vsub.s32 %v4562, 2
        %vm4564 = vcmp.gt.s32.totalorder 0, %v4563
        %v4565 = vsel %vm4564, 0, %v4563
        %v4566 = vsub.s32 32, %v4565
        %v4567 = vshll.u32 %v4558, %v4565
        %v4568 = vshrl.u32 %v4550, %v4566
        %v4569 = vor.u32 %v4567, %v4568
        %v4570 = vsub.s32 4294967266, %v4565
        %v4571 = vadd.s32 %v4570, 127
        %v4572 = vshll.u32 %v4571, 23
        %v4573 = vor.u32 4788187, %v4572
        %v4574 = vand.u32 2147483647, %v4573
        %v4576 = vcvt.s32.f32 %v4569
        %v4577 = vmul.f32 %v4576, %v4574
        %v4578 = vxor.u32 %v4577, 2147483648
        %v4579 = vsel %vm4496, %v4578, %v4577
        %v4580 = vsub.s32 4, %v4556
        %v4581 = vsel %vm4496, %v4580, %v4556
        %v4582 = vsel %vm4495, %v3036, %v4579
        %v4583 = vsel %vm4495, 0, %v4581
        %v4584 = vcosq.f32.pop %v4582
        %v4585 = vsinq.f32.pop %v4582
        %vm4586 = vweird.f32 %v3036
        %v4587 = vadd.s32 %v4583, 3
        %v4588 = vand.u32 %v4587, 3
        %vm4589 = vcmp.lt.s32.totalorder %v4588, 2
        %vm4590 = vcmp.eq.s32.totalorder %v4588, 0
        %v4591 = vxor.u32 %v4585, 2147483648
        %v4592 = vsel %vm4590, %v4584, %v4591
        %vm4593 = vcmp.eq.s32.totalorder %v4588, 2
        %v4594 = vxor.u32 %v4584, 2147483648
        %v4595 = vsel %vm4593, %v4594, %v4585
        %v4596 = vsel %vm4589, %v4592, %v4595
        %v4597 = vsel %vm4586, nan, %v4596
        %v4598 = vand.u32 2147483647, %v3037
        %vm4599 = vcmp.le.f32.partialorder %v4598, 0.7853982
        %vm4600 = vcmp.lt.s32.totalorder %v3037, 0
        %v4601 = vand.u32 %v3037, 2139095040
        %v4602 = vshrl.u32 %v4601, 23
        %v4603 = vsub.s32 %v4602, 127
        %v4604 = vand.u32 2147483647, %v3037
        %v4605 = vand.u32 %v4604, 8388607
        %v4606 = vor.u32 %v4605, 8388608
        %v4607 = vsub.s32 0, %v4606
        %v4608 = vadd.s32 %v4603, 1
        %vm4609 = vcmp.gt.s32.totalorder %v4608, 0
        %v4610 = vsel %vm4609, %v4608, 0
        %v4611 = vshrl.u32 %v4610, 5
        %v4612 = vand.u32 %v4610, 31
        %v4613 = vsub.s32 32, %v4612
        %v4614 = vshrl.u32 683565275, %v4613
        %v4615 = vshll.u32 683565275, %v4612
        %v4616 = vshrl.u32 2475754826, %v4613
        %v4617 = vor.u32 %v4615, %v4616
        %v4618 = vshll.u32 2475754826, %v4612
        %v4619 = vshrl.u32 2131351028, %v4613
        %v4620 = vor.u32 %v4618, %v4619
        %v4621 = vshll.u32 2131351028, %v4612
        %v4622 = vshrl.u32 2102212464, %v4613
        %v4623 = vor.u32 %v4621, %v4622
        %v4624 = vshll.u32 2102212464, %v4612
        %v4625 = vshrl.u32 920167782, %v4613
        %v4626 = vor.u32 %v4624, %v4625
        %v4627 = vshll.u32 920167782, %v4612
        %v4628 = vshrl.u32 1326507024, %v4613
        %v4629 = vor.u32 %v4627, %v4628
        %vm4630 = vcmp.lt.s32.totalorder %v4611, 1
        %vm4631 = vcmp.lt.s32.totalorder %v4611, 2
        %vm4632 = vcmp.lt.s32.totalorder %v4611, 3
        %vm4633 = vcmp.lt.s32.totalorder %v4611, 4
        %v4634 = vsel %vm4630, %v4614, %v4617
        %v4635 = vsel %vm4633, %v4623, 2102212464
        %v4636 = vsel %vm4632, %v4620, %v4635
        %v4637 = vsel %vm4631, %v4634, %v4636
        %v4638 = vsel %vm4630, %v4617, %v4620
        %v4639 = vsel %vm4633, %v4626, 920167782
        %v4640 = vsel %vm4632, %v4623, %v4639
        %v4641 = vsel %vm4631, %v4638, %v4640
        %v4642 = vsel %vm4630, %v4620, %v4623
        %v4643 = vsel %vm4633, %v4629, 1326507024
        %v4644 = vsel %vm4632, %v4626, %v4643
        %v4645 = vsel %vm4631, %v4642, %v4644
        %v4646 = vshll.u32 %v4606, 8
        %v4647 = vmul.u32.u64.compose %v4646, %v4645
        %v4648 = vextract.low.u32 %v4647
        %v4649 = vextract.high.u32 %v4647
        %v4650 = vmul.u32.u64.compose %v4646, %v4641
        %v4651 = vextract.low.u32 %v4650
        %v4652 = vextract.high.u32 %v4650
        %v4653 = vmul.u32 %v4646, %v4637
        %v4654 = vadd.s32 %v4649, %v4651
        %vm4655 = vc.u32 %v4649, %v4651
        %v4656 = vadd.s32 %v4652, 1
        %v4657 = vsel %vm4655, %v4656, %v4652
        %v4658 = vadd.s32 %v4653, %v4657
        %v4659 = vadd.s32 %v4658, 536870912
        %v4660 = vshrl.u32 %v4659, 30
        %v4661 = vshll.u32 %v4660, 30
        %v4662 = vsub.s32 %v4658, %v4661
        %vm4663 = vcmp.lt.s32.totalorder %v4662, 0
        %v4664 = vsub.s32 0, %v4662
        %v4665 = vsel %vm4663, %v4664, %v4662
        %v4666 = vclz %v4665
        %v4667 = vsub.s32 %v4666, 2
        %vm4668 = vcmp.gt.s32.totalorder 0, %v4667
        %v4669 = vsel %vm4668, 0, %v4667
        %v4670 = vsub.s32 32, %v4669
        %v4671 = vshll.u32 %v4662, %v4669
        %v4672 = vshrl.u32 %v4654, %v4670
        %v4673 = vor.u32 %v4671, %v4672
        %v4674 = vsub.s32 4294967266, %v4669
        %v4675 = vadd.s32 %v4674, 127
        %v4676 = vshll.u32 %v4675, 23
        %v4677 = vor.u32 4788187, %v4676
        %v4678 = vand.u32 2147483647, %v4677
        %v4680 = vcvt.s32.f32 %v4673
        %v4681 = vmul.f32 %v4680, %v4678
        %v4682 = vxor.u32 %v4681, 2147483648
        %v4683 = vsel %vm4600, %v4682, %v4681
        %v4684 = vsub.s32 4, %v4660
        %v4685 = vsel %vm4600, %v4684, %v4660
        %v4686 = vsel %vm4599, %v3037, %v4683
        %v4687 = vsel %vm4599, 0, %v4685
        %v4688 = vcosq.f32.pop %v4686
        %v4689 = vsinq.f32.pop %v4686
        %vm4690 = vweird.f32 %v3037
        %v4691 = vadd.s32 %v4687, 3
        %v4692 = vand.u32 %v4691, 3
        %vm4693 = vcmp.lt.s32.totalorder %v4692, 2
        %vm4694 = vcmp.eq.s32.totalorder %v4692, 0
        %v4695 = vxor.u32 %v4689, 2147483648
        %v4696 = vsel %vm4694, %v4688, %v4695
        %vm4697 = vcmp.eq.s32.totalorder %v4692, 2
        %v4698 = vxor.u32 %v4688, 2147483648
        %v4699 = vsel %vm4697, %v4698, %v4689
        %v4700 = vsel %vm4693, %v4696, %v4699
        %v4701 = vsel %vm4690, nan, %v4700
        %4702 = vst [vmem:[%s203 + $0x80] sm:$0xff] %v3141
        %4703 = vst [vmem:[%s203 + $0x88] sm:$0xff] %v3245
        %4704 = vst [vmem:[%s203 + $0x90] sm:$0xff] %v3349
        %4705 = vst [vmem:[%s203 + $0x98] sm:$0xff] %v3453
        %4706 = vst [vmem:[%s203 + $0xa0] sm:$0xff] %v3557
        %4707 = vst [vmem:[%s203 + $0xa8] sm:$0xff] %v3661
        %4708 = vst [vmem:[%s203 + $0xb0] sm:$0xff] %v3765
        %4709 = vst [vmem:[%s203 + $0xb8] sm:$0xff] %v3869
        %4710 = vst [vmem:[%s203 + $0xc0] sm:$0xff] %v3973
        %4711 = vst [vmem:[%s203 + $0xc8] sm:$0xff] %v4077
        %4712 = vst [vmem:[%s203 + $0xd0] sm:$0xff] %v4181
        %4713 = vst [vmem:[%s203 + $0xd8] sm:$0xff] %v4285
        %4714 = vst [vmem:[%s203 + $0xe0] sm:$0xff] %v4389
        %4715 = vst [vmem:[%s203 + $0xe8] sm:$0xff] %v4493
        %4716 = vst [vmem:[%s203 + $0xf0] sm:$0xff] %v4597
        %4717 = vst [vmem:[%s203 + $0xf8] sm:$0xff] %v4701
        %s4718 = sand.u32 %s116, 1
        %s4719 = scalar_lea.sflag [#allocation4], %s4718
        %s4720 = sand.u32 %s116, 1
        %s4721 = smul.addr %s4720, 256
        %s4722 = scalar_lea.vmem [#allocation5], %s4721
        // Predicated region
        $region41: #{tpu_custom_call.1} parent=35 // pred_check
          %p4723 = pneg %p126
        $region42: #{tpu_custom_call.1} parent=35 // pred_check_branch
          %4725 = sbr.rel (%p4723) target = $region44
        $region43: #{tpu_custom_call.1} parent=35 // pred_region
          %s4727 = ssub.s32 4096, 4096
          %4728 = vsyncadd %s4719, %s4727
          %s4729 = smul.addr %s19, 32
          %s4730 = smul.addr %s4729, 128
          %s4731 = scalar_lea.hbm %s4, %s4730
          %s4732 = sshll.u32 %s4722, 4
          %s4733 = int_to_ptr.vmem [resolvable:$true] %s4732
          %4738 = dma.vmem_to_hbm [thread:$0]  %s4733, 4096, %s4731, %s4719, 256, 256, 16
        $region44: #{tpu_custom_call.1} parent=35 // pred_fallthru
          _
      $region36: #{tpu_custom_call.1} parent=5 // pred_fallthru
        _
      %p4739 = scmp.le.s32.totalorder 2, %s14
      // Predicated region
      $region45: #{tpu_custom_call.1} parent=5 // pred_check
        %p4740 = pneg %p4739
      $region46: #{tpu_custom_call.1} parent=5 // pred_check_branch
        %4742 = sbr.rel (%p4740) target = $region48
      $region47: #{tpu_custom_call.1} parent=5 // pred_region
        %s4743 = ssub.s32 %s14, 2
        // Predicated region
        $region49: #{tpu_custom_call.1} parent=47 // pred_check
          %p4744 = pneg %p132
        $region50: #{tpu_custom_call.1} parent=47 // pred_check_branch
          %4746 = sbr.rel (%p4744) target = $region52
        $region51: #{tpu_custom_call.1} parent=47 // pred_region
          %s4747 = sand.u32 %s117, 1
          %s4748 = scalar_lea.sflag [#allocation4], %s4747
          %s4749 = sand.u32 %s117, 1
          %s4750 = smul.addr %s4749, 256
          %s4751 = scalar_lea.vmem [#allocation5], %s4750
          %4752 = dma.done %s4748, 4096
        $region52: #{tpu_custom_call.1} parent=47 // pred_fallthru
          _
      $region48: #{tpu_custom_call.1} parent=5 // pred_fallthru
        _
    $region6: #{tpu_custom_call.1} parent=1 // loop_footer
      %s18 = sadd.s32 1, %s14
    $region7: #{tpu_custom_call.1} parent=1 // loop_footer_branch
      %13 = sbr.rel target = $region3
    $region8: #{tpu_custom_call.1} parent=1 // loop_exit
      _
    %4753 = vsyncpa [#allocation3], 1
    %s4754 = scalar_lea.sflag [#allocation3], 1
    %4755 = vsyncpa %s4754, 1
    %4756 = vsyncpa [#allocation4], 1
    %s4757 = scalar_lea.sflag [#allocation4], 1
    %4758 = vsyncpa %s4757, 1

</llo_original>
